<compile_context>
chip_gen: v5e
topology: v5e:2x2
jax: 0.10.0
libtpu: 0.0.40
codegen_flags: <defaults>
</compile_context>

<pallas_src>
import functools
import math

import jax
import jax.numpy as jnp
from jax.experimental import pallas as pl
from jax.experimental.pallas import tpu as pltpu


_VMEM_LIMIT = 48 * 1024 * 1024   # safe on v5e/v6e (128 MiB) and v7x (64 MiB physical)


# ------------------------------ small helpers ------------------------------ #

def _round_up(x, m):
    return ((x + m - 1) // m) * m


def _pick_tile(dim, cap, multiple):
    # Largest multiple of `multiple` (<= cap) that divides `dim`.
    # `dim` is itself a multiple of `multiple`.
    t = min(cap, dim)
    t -= t % multiple
    while t > multiple and dim % t:
        t -= multiple
    return t


def _pick_divisor(n, cap):
    for d in range(max(1, min(n, cap)), 0, -1):
        if n % d == 0:
            return d
    return n


def _pick_batch_block(n, cap):
    # Block over the batch dim: either the full dim or a multiple-of-8 divisor.
    if n <= cap:
        return n
    for d in range(cap - cap % 8, 7, -8):
        if n % d == 0:
            return d
    return n


# ----------------------- tiled matmul + BN/ReLU kernel ---------------------- #

def _matmul_bn_act_kernel(a_ref, b_ref, s_ref, t_ref, o_ref, acc_ref, *, relu):
    @pl.when(pl.program_id(2) == 0)
    def _init():
        acc_ref[...] = jnp.zeros_like(acc_ref)

    acc_ref[...] += jnp.dot(a_ref[...], b_ref[...],
                            preferred_element_type=jnp.float32)

    @pl.when(pl.program_id(2) == pl.num_programs(2) - 1)
    def _epilogue():
        y = acc_ref[...] * s_ref[...] + t_ref[...]
        if relu:
            y = jnp.maximum(y, 0.0)
        o_ref[...] = y.astype(o_ref.dtype)


def matmul_bn_act(a, b, scale, shift, *, relu, out_dtype=jnp.bfloat16):
    # out = act((A @ B) * scale + shift); A:(M,K), B:(K,N), scale/shift broadcast on rows.
    m, k = a.shape
    k2, n = b.shape
    assert k == k2

    m_pad = _round_up(m, 16)
    k_pad = _round_up(k, 128)        # also fixes the K=27 first-conv layer
    n_pad = _round_up(n, 128)        # lane-dense output channels (unmasked stores)
    tm = _pick_tile(m_pad, 256, 16)
    tk = _pick_tile(k_pad, 2048, 128)
    tn = _pick_tile(n_pad, 256, 128)

    a_p = jnp.pad(a.astype(jnp.bfloat16), ((0, m_pad - m), (0, k_pad - k)))
    b_p = jnp.pad(b.astype(jnp.bfloat16), ((0, k_pad - k), (0, n_pad - n)))
    s_p = jnp.pad(scale.astype(jnp.float32), (0, n_pad - n)).reshape(1, n_pad)
    t_p = jnp.pad(shift.astype(jnp.float32), (0, n_pad - n)).reshape(1, n_pad)

    grid = (m_pad // tm, n_pad // tn, k_pad // tk)
    flops = 2 * m_pad * k_pad * n_pad
    bytes_accessed = (m_pad * k_pad * 2 + k_pad * n_pad * 2
                      + m_pad * n_pad * jnp.dtype(out_dtype).itemsize)

    out = pl.pallas_call(
        functools.partial(_matmul_bn_act_kernel, relu=relu),
        out_shape=jax.ShapeDtypeStruct((m_pad, n_pad), out_dtype),
        grid_spec=pltpu.PrefetchScalarGridSpec(
            num_scalar_prefetch=0,
            grid=grid,
            in_specs=[
                pl.BlockSpec((tm, tk), lambda i, j, kb: (i, kb)),
                pl.BlockSpec((tk, tn), lambda i, j, kb: (kb, j)),
                pl.BlockSpec((1, tn), lambda i, j, kb: (0, j)),
                pl.BlockSpec((1, tn), lambda i, j, kb: (0, j)),
            ],
            out_specs=pl.BlockSpec((tm, tn), lambda i, j, kb: (i, j)),
            scratch_shapes=[pltpu.VMEM((tm, tn), jnp.float32)],
        ),
        compiler_params=pltpu.CompilerParams(
            dimension_semantics=("parallel", "parallel", "arbitrary"),
            vmem_limit_bytes=_VMEM_LIMIT),
        cost_estimate=pl.CostEstimate(flops=flops, transcendentals=0,
                                      bytes_accessed=bytes_accessed),
    )(a_p, b_p, s_p, t_p)
    return out[:m, :n]


# ------------------------- single-pass 2x2 max pool ------------------------- #

def _maxpool2x2_kernel(x_ref, o_ref, *, c):
    xb = x_ref[...]                              # (bm, 2, wh, 2*c)
    m = jnp.maximum(xb[:, 0], xb[:, 1])          # max over the H pair -> (bm, wh, 2*c)
    o_ref[...] = jnp.maximum(m[:, :, :c], m[:, :, c:])   # max over the W pair


def maxpool2x2(x):
    # x: (N, H, W, C) -> (N, H//2, W//2, C), 2x2 max pool, stride 2 (floor mode).
    n, h, w, c = x.shape
    hh, wh = h // 2, w // 2
    x = x[:, :hh * 2, :wh * 2, :]
    x4 = x.reshape(n * hh, 2, wh, 2 * c)         # metadata-only (free) reshape
    mrows = n * hh

    row_bytes = 2 * wh * 2 * c * x.dtype.itemsize
    bm = _pick_divisor(mrows, max(1, (2 << 20) // row_bytes))

    out = pl.pallas_call(
        functools.partial(_maxpool2x2_kernel, c=c),
        out_shape=jax.ShapeDtypeStruct((mrows, wh, c), x.dtype),
        grid=(mrows // bm,),
        in_specs=[pl.BlockSpec((bm, 2, wh, 2 * c), lambda i: (i, 0, 0, 0))],
        out_specs=pl.BlockSpec((bm, wh, c), lambda i: (i, 0, 0)),
        compiler_params=pltpu.CompilerParams(dimension_semantics=("parallel",)),
    )(x4)
    return out.reshape(n, hh, wh, c)


# ------------------- fused global-average-pool + classifier ----------------- #

def _avgpool_fc_kernel(x_ref, w_ref, b_ref, o_ref, *, inv_hw):
    pooled = jnp.sum(x_ref[...].astype(jnp.float32), axis=1) * inv_hw   # (bn, C)
    o_ref[...] = (jnp.dot(pooled, w_ref[...], preferred_element_type=jnp.float32)
                  + b_ref[...])


def avgpool_fc(x, fc_w, fc_b):
    # x: (N, H, W, C); fc_w: (C, num_classes); returns logits (N, num_classes) f32.
    n, h, w, c = x.shape
    hw = h * w
    num_classes = fc_w.shape[1]
    nc_pad = _round_up(num_classes, 128)

    xr = x.reshape(n, hw, c)                     # free reshape
    wp = jnp.pad(fc_w.astype(jnp.float32), ((0, 0), (0, nc_pad - num_classes)))
    bp = jnp.pad(fc_b.astype(jnp.float32), (0, nc_pad - num_classes)).reshape(1, nc_pad)

    bn = _pick_batch_block(n, 256)
    out = pl.pallas_call(
        functools.partial(_avgpool_fc_kernel, inv_hw=1.0 / hw),
        out_shape=jax.ShapeDtypeStruct((n, nc_pad), jnp.float32),
        grid=(n // bn,),
        in_specs=[pl.BlockSpec((bn, hw, c), lambda i: (i, 0, 0)),
                  pl.BlockSpec((c, nc_pad), lambda i: (0, 0)),
                  pl.BlockSpec((1, nc_pad), lambda i: (0, 0))],
        out_specs=pl.BlockSpec((bn, nc_pad), lambda i: (i, 0)),
        compiler_params=pltpu.CompilerParams(dimension_semantics=("parallel",)),
    )(xr, wp, bp)
    return out[:, :num_classes]


# --------------------------- JAX glue (layout only) ------------------------- #

def im2col_3x3(x):
    # x: (N, H, W, C) bf16; 3x3 patches, stride 1, padding 1 -> (N*H*W, 9*C)
    # TODO(synk): im2col is still materialized in HBM by XLA glue; a fully fused
    # tap-accumulating conv kernel would remove the 9x activation expansion.
    n, h, w, c = x.shape
    xp = jnp.pad(x, ((0, 0), (1, 1), (1, 1), (0, 0)))
    patches = [xp[:, dh:dh + h, dw:dw + w, :] for dh in range(3) for dw in range(3)]
    p = jnp.stack(patches, axis=3)                      # (N, H, W, 9, C)
    return p.reshape(n * h * w, 9 * c)


def conv3x3_bn_relu(x, layer, eps=1e-5):
    # Conv2d(3x3, pad=1, stride=1) + BatchNorm2d (eval mode, folded) + ReLU.
    n, h, w, cin = x.shape
    wgt = layer['w']                                    # (3, 3, Cin, Cout)
    cout = wgt.shape[-1]
    a = im2col_3x3(x)                                   # (N*H*W, 9*Cin) bf16
    b = wgt.reshape(9 * cin, cout)                      # (dh, dw, cin) row order
    s = layer['gamma'] / jnp.sqrt(layer['var'] + eps)
    t = layer['beta'] - layer['mean'] * s + layer['b'] * s
    y = matmul_bn_act(a, b, s, t, relu=True, out_dtype=jnp.bfloat16)
    return y.reshape(n, h, w, cout)


# ------------------------------- Model setup -------------------------------- #

# Representative VGG-BN feature config (the PyTorch module receives `features` as a
# constructed nn.Sequential; the classifier requires its output to have 512 channels).
CFG = [32, 'M', 64, 'M', 512, 'M']


def init_params(key, cfg=CFG, in_ch=3, num_classes=100):
    # Matches VGG._initialize_weights:
    #   Conv2d:    weight ~ N(0, sqrt(2/(k*k*out_ch))), bias = 0
    #   BatchNorm: weight = 1, bias = 0 (running stats: mean=0, var=1)
    #   Linear:    weight ~ N(0, 0.01), bias = 0
    layers = []
    k = key
    c = in_ch
    for v in cfg:
        if v == 'M':
            layers.append({})                           # pool marker (no params)
        else:
            k, kw = jax.random.split(k)
            fan = 3 * 3 * v
            w = jax.random.normal(kw, (3, 3, c, v), jnp.float32) * math.sqrt(2.0 / fan)
            layers.append({
                'w': w,
                'b': jnp.zeros((v,), jnp.float32),
                'gamma': jnp.ones((v,), jnp.float32),
                'beta': jnp.zeros((v,), jnp.float32),
                'mean': jnp.zeros((v,), jnp.float32),
                'var': jnp.ones((v,), jnp.float32),
            })
            c = v
    assert c == 512, "classifier expects 512-channel features"
    k, kfc = jax.random.split(k)
    fc_w = jax.random.normal(kfc, (512, num_classes), jnp.float32) * 0.01  # (in, out)
    fc_b = jnp.zeros((num_classes,), jnp.float32)
    return {'features': layers, 'fc_w': fc_w, 'fc_b': fc_b}


def vgg_cifar100_forward(params, x_nchw):
    # x_nchw: (N, 3, H, W) float32 (PyTorch layout); returns logits (N, 100) f32.
    x = jnp.transpose(x_nchw, (0, 2, 3, 1)).astype(jnp.bfloat16)   # NCHW -> NHWC bf16
    for layer in params['features']:
        if layer:                       # conv + bn + relu
            x = conv3x3_bn_relu(x, layer)
        else:                           # 2x2 max pool
            x = maxpool2x2(x)
    return avgpool_fc(x, params['fc_w'], params['fc_b'])


# TODO(synk): BatchNorm is implemented in eval/inference mode (folded running stats);
# training-mode batch statistics are not reproduced here.

if __name__ == "__main__":
    key = jax.random.PRNGKey(0)
    params = init_params(key)
    x = jax.random.normal(jax.random.fold_in(key, 123), (2, 3, 16, 16), jnp.float32)
    forward = jax.jit(vgg_cifar100_forward)
    logits = forward(params, x)
    jax.block_until_ready(logits)
    assert logits.shape == (2, 100) and logits.dtype == jnp.float32
    assert bool(jnp.all(jnp.isfinite(logits)))
    print("KERNEL_OK")
</pallas_src>

<mosaic_0001>
module attributes {stable_mosaic.version = 11 : i64} {
  func.func @_matmul_bn_act_kernel(%arg0: i32, %arg1: i32, %arg2: i32, %arg3: memref<256x128xbf16, #tpu.memory_space<vmem>>, %arg4: memref<128x128xbf16, #tpu.memory_space<vmem>>, %arg5: memref<1x128xf32, #tpu.memory_space<vmem>>, %arg6: memref<1x128xf32, #tpu.memory_space<vmem>>, %arg7: memref<256x128xbf16, #tpu.memory_space<vmem>>, %arg8: memref<256x128xf32, #tpu.memory_space<vmem>>) attributes {dimension_semantics = [#tpu.dimension_semantics<parallel>, #tpu.dimension_semantics<parallel>, #tpu.dimension_semantics<arbitrary>], iteration_bounds = array<i64: 2, 1, 1>, scalar_prefetch = 0 : i64, scratch_operands = 1 : i64, tpu.core_type = #tpu.core_type<tc>, window_params = [{transform_indices = @transform_0, window_bounds = array<i64: 256, 128>}, {transform_indices = @transform_1, window_bounds = array<i64: 128, 128>}, {transform_indices = @transform_2, window_bounds = array<i64: 1, 128>}, {transform_indices = @transform_3, window_bounds = array<i64: 1, 128>}, {transform_indices = @transform_4, window_bounds = array<i64: 256, 128>}]} {
    %c0_i32 = arith.constant 0 : i32
    %0 = arith.cmpi eq, %arg2, %c0_i32 : i32
    %1 = arith.extui %0 : i1 to i32
    %c0_i32_0 = arith.constant 0 : i32
    %2 = arith.cmpi ne, %1, %c0_i32_0 : i32
    scf.if %2 {
      %cst_10 = arith.constant 0.000000e+00 : f32
      %12 = vector.broadcast %cst_10 : f32 to vector<256x128xf32>
      %c0_11 = arith.constant 0 : index
      %c0_12 = arith.constant 0 : index
      %13 = vector.load %arg8[%c0_11, %c0_12] : memref<256x128xf32, #tpu.memory_space<vmem>>, vector<256x128xf32>
      tpu.vector_store %arg8[%c0_11, %c0_12], %12 {strides = array<i32>} : memref<256x128xf32, #tpu.memory_space<vmem>>, vector<256x128xf32>,
    } else {
    }
    %c0 = arith.constant 0 : index
    %c0_1 = arith.constant 0 : index
    %3 = vector.load %arg8[%c0, %c0_1] : memref<256x128xf32, #tpu.memory_space<vmem>>, vector<256x128xf32>
    %c0_2 = arith.constant 0 : index
    %c0_3 = arith.constant 0 : index
    %4 = vector.load %arg3[%c0_2, %c0_3] : memref<256x128xbf16, #tpu.memory_space<vmem>>, vector<256x128xbf16>
    %c0_4 = arith.constant 0 : index
    %c0_5 = arith.constant 0 : index
    %5 = vector.load %arg4[%c0_4, %c0_5] : memref<128x128xbf16, #tpu.memory_space<vmem>>, vector<128x128xbf16>
    %cst = arith.constant dense<0.000000e+00> : vector<256x128xf32>
    %6 = tpu.matmul %4, %5, %cst {dimension_numbers = #tpu.dot_dimension_numbers<[1], [0], [0], [1], [0, 0, 1, 1], [], []>} : vector<256x128xbf16>, vector<128x128xbf16>, vector<256x128xf32> -> vector<256x128xf32>
    %7 = arith.addf %3, %6 : vector<256x128xf32>
    %c0_6 = arith.constant 0 : index
    %c0_7 = arith.constant 0 : index
    %8 = vector.load %arg8[%c0_6, %c0_7] : memref<256x128xf32, #tpu.memory_space<vmem>>, vector<256x128xf32>
    tpu.vector_store %arg8[%c0_6, %c0_7], %7 {strides = array<i32>} : memref<256x128xf32, #tpu.memory_space<vmem>>, vector<256x128xf32>,
    %c0_i32_8 = arith.constant 0 : i32
    %9 = arith.cmpi eq, %arg2, %c0_i32_8 : i32
    %10 = arith.extui %9 : i1 to i32
    %c0_i32_9 = arith.constant 0 : i32
    %11 = arith.cmpi ne, %10, %c0_i32_9 : i32
    scf.if %11 {
      %c0_10 = arith.constant 0 : index
      %c0_11 = arith.constant 0 : index
      %12 = vector.load %arg8[%c0_10, %c0_11] : memref<256x128xf32, #tpu.memory_space<vmem>>, vector<256x128xf32>
      %c0_12 = arith.constant 0 : index
      %c0_13 = arith.constant 0 : index
      %13 = vector.load %arg5[%c0_12, %c0_13] : memref<1x128xf32, #tpu.memory_space<vmem>>, vector<1x128xf32>
      %14 = vector.broadcast %13 : vector<1x128xf32> to vector<256x128xf32>
      %15 = arith.mulf %12, %14 : vector<256x128xf32>
      %c0_14 = arith.constant 0 : index
      %c0_15 = arith.constant 0 : index
      %16 = vector.load %arg6[%c0_14, %c0_15] : memref<1x128xf32, #tpu.memory_space<vmem>>, vector<1x128xf32>
      %17 = vector.broadcast %16 : vector<1x128xf32> to vector<256x128xf32>
      %18 = arith.addf %15, %17 : vector<256x128xf32>
      %cst_16 = arith.constant 0.000000e+00 : f32
      %19 = vector.broadcast %cst_16 : f32 to vector<256x128xf32>
      %20 = arith.maximumf %18, %19 : vector<256x128xf32>
      %21 = arith.truncf %20 : vector<256x128xf32> to vector<256x128xbf16>
      %c0_17 = arith.constant 0 : index
      %c0_18 = arith.constant 0 : index
      %22 = vector.load %arg7[%c0_17, %c0_18] : memref<256x128xbf16, #tpu.memory_space<vmem>>, vector<256x128xbf16>
      tpu.vector_store %arg7[%c0_17, %c0_18], %21 {strides = array<i32>} : memref<256x128xbf16, #tpu.memory_space<vmem>>, vector<256x128xbf16>,
    } else {
    }
    return
  }
  func.func @transform_0(%arg0: i32, %arg1: i32, %arg2: i32) -> (i32, i32) {
    %c0_i32 = arith.constant 0 : i32
    return %arg0, %arg2 : i32, i32
  }
  func.func @transform_1(%arg0: i32, %arg1: i32, %arg2: i32) -> (i32, i32) {
    %c0_i32 = arith.constant 0 : i32
    return %arg2, %arg1 : i32, i32
  }
  func.func @transform_2(%arg0: i32, %arg1: i32, %arg2: i32) -> (i32, i32) {
    %c0_i32 = arith.constant 0 : i32
    %c0_i32_0 = arith.constant 0 : i32
    return %c0_i32, %arg1 : i32, i32
  }
  func.func @transform_3(%arg0: i32, %arg1: i32, %arg2: i32) -> (i32, i32) {
    %c0_i32 = arith.constant 0 : i32
    %c0_i32_0 = arith.constant 0 : i32
    return %c0_i32, %arg1 : i32, i32
  }
  func.func @transform_4(%arg0: i32, %arg1: i32, %arg2: i32) -> (i32, i32) {
    %c0_i32 = arith.constant 0 : i32
    return %arg0, %arg1 : i32, i32
  }
}

module attributes {stable_mosaic.version = 11 : i64} {
  func.func @_maxpool2x2_kernel(%arg0: i32, %arg1: memref<16x2x8x64xbf16, #tpu.memory_space<vmem>>, %arg2: memref<16x8x32xbf16, #tpu.memory_space<vmem>>) attributes {dimension_semantics = [#tpu.dimension_semantics<parallel>], iteration_bounds = array<i64: 1>, scalar_prefetch = 0 : i64, scratch_operands = 0 : i64, tpu.core_type = #tpu.core_type<tc>, window_params = [{transform_indices = @transform_0, window_bounds = array<i64: 16, 2, 8, 64>}, {transform_indices = @transform_1, window_bounds = array<i64: 16, 8, 32>}]} {
    %c0 = arith.constant 0 : index
    %c0_0 = arith.constant 0 : index
    %c0_1 = arith.constant 0 : index
    %c0_2 = arith.constant 0 : index
    %0 = vector.load %arg1[%c0, %c0_0, %c0_1, %c0_2] : memref<16x2x8x64xbf16, #tpu.memory_space<vmem>>, vector<16x2x8x64xbf16>
    %1 = vector.extract_strided_slice %0 {offsets = [0, 0, 0, 0], sizes = [16, 1, 8, 64], strides = [1, 1, 1, 1]} : vector<16x2x8x64xbf16> to vector<16x1x8x64xbf16>
    %2 = vector.shape_cast %1 : vector<16x1x8x64xbf16> to vector<16x8x64xbf16>
    %3 = vector.extract_strided_slice %0 {offsets = [0, 1, 0, 0], sizes = [16, 1, 8, 64], strides = [1, 1, 1, 1]} : vector<16x2x8x64xbf16> to vector<16x1x8x64xbf16>
    %4 = vector.shape_cast %3 : vector<16x1x8x64xbf16> to vector<16x8x64xbf16>
    %5 = arith.maximumf %2, %4 : vector<16x8x64xbf16>
    %6 = vector.extract_strided_slice %5 {offsets = [0, 0, 0], sizes = [16, 8, 32], strides = [1, 1, 1]} : vector<16x8x64xbf16> to vector<16x8x32xbf16>
    %7 = vector.extract_strided_slice %5 {offsets = [0, 0, 32], sizes = [16, 8, 32], strides = [1, 1, 1]} : vector<16x8x64xbf16> to vector<16x8x32xbf16>
    %8 = arith.maximumf %6, %7 : vector<16x8x32xbf16>
    %c0_3 = arith.constant 0 : index
    %c0_4 = arith.constant 0 : index
    %c0_5 = arith.constant 0 : index
    %9 = vector.load %arg2[%c0_3, %c0_4, %c0_5] : memref<16x8x32xbf16, #tpu.memory_space<vmem>>, vector<16x8x32xbf16>
    tpu.vector_store %arg2[%c0_3, %c0_4, %c0_5], %8 {strides = array<i32>} : memref<16x8x32xbf16, #tpu.memory_space<vmem>>, vector<16x8x32xbf16>,
    return
  }
  func.func @transform_0(%arg0: i32) -> (i32, i32, i32, i32) {
    %c0_i32 = arith.constant 0 : i32
    %c0_i32_0 = arith.constant 0 : i32
    %c0_i32_1 = arith.constant 0 : i32
    %c0_i32_2 = arith.constant 0 : i32
    return %arg0, %c0_i32, %c0_i32_0, %c0_i32_1 : i32, i32, i32, i32
  }
  func.func @transform_1(%arg0: i32) -> (i32, i32, i32) {
    %c0_i32 = arith.constant 0 : i32
    %c0_i32_0 = arith.constant 0 : i32
    %c0_i32_1 = arith.constant 0 : i32
    return %arg0, %c0_i32, %c0_i32_0 : i32, i32, i32
  }
}

module attributes {stable_mosaic.version = 11 : i64} {
  func.func @_matmul_bn_act_kernel(%arg0: i32, %arg1: i32, %arg2: i32, %arg3: memref<128x384xbf16, #tpu.memory_space<vmem>>, %arg4: memref<384x128xbf16, #tpu.memory_space<vmem>>, %arg5: memref<1x128xf32, #tpu.memory_space<vmem>>, %arg6: memref<1x128xf32, #tpu.memory_space<vmem>>, %arg7: memref<128x128xbf16, #tpu.memory_space<vmem>>, %arg8: memref<128x128xf32, #tpu.memory_space<vmem>>) attributes {dimension_semantics = [#tpu.dimension_semantics<parallel>, #tpu.dimension_semantics<parallel>, #tpu.dimension_semantics<arbitrary>], iteration_bounds = array<i64: 1, 1, 1>, scalar_prefetch = 0 : i64, scratch_operands = 1 : i64, tpu.core_type = #tpu.core_type<tc>, window_params = [{transform_indices = @transform_0, window_bounds = array<i64: 128, 384>}, {transform_indices = @transform_1, window_bounds = array<i64: 384, 128>}, {transform_indices = @transform_2, window_bounds = array<i64: 1, 128>}, {transform_indices = @transform_3, window_bounds = array<i64: 1, 128>}, {transform_indices = @transform_4, window_bounds = array<i64: 128, 128>}]} {
    %c0_i32 = arith.constant 0 : i32
    %0 = arith.cmpi eq, %arg2, %c0_i32 : i32
    %1 = arith.extui %0 : i1 to i32
    %c0_i32_0 = arith.constant 0 : i32
    %2 = arith.cmpi ne, %1, %c0_i32_0 : i32
    scf.if %2 {
      %cst_10 = arith.constant 0.000000e+00 : f32
      %12 = vector.broadcast %cst_10 : f32 to vector<128x128xf32>
      %c0_11 = arith.constant 0 : index
      %c0_12 = arith.constant 0 : index
      %13 = vector.load %arg8[%c0_11, %c0_12] : memref<128x128xf32, #tpu.memory_space<vmem>>, vector<128x128xf32>
      tpu.vector_store %arg8[%c0_11, %c0_12], %12 {strides = array<i32>} : memref<128x128xf32, #tpu.memory_space<vmem>>, vector<128x128xf32>,
    } else {
    }
    %c0 = arith.constant 0 : index
    %c0_1 = arith.constant 0 : index
    %3 = vector.load %arg8[%c0, %c0_1] : memref<128x128xf32, #tpu.memory_space<vmem>>, vector<128x128xf32>
    %c0_2 = arith.constant 0 : index
    %c0_3 = arith.constant 0 : index
    %4 = vector.load %arg3[%c0_2, %c0_3] : memref<128x384xbf16, #tpu.memory_space<vmem>>, vector<128x384xbf16>
    %c0_4 = arith.constant 0 : index
    %c0_5 = arith.constant 0 : index
    %5 = vector.load %arg4[%c0_4, %c0_5] : memref<384x128xbf16, #tpu.memory_space<vmem>>, vector<384x128xbf16>
    %cst = arith.constant dense<0.000000e+00> : vector<128x128xf32>
    %6 = tpu.matmul %4, %5, %cst {dimension_numbers = #tpu.dot_dimension_numbers<[1], [0], [0], [1], [0, 0, 1, 1], [], []>} : vector<128x384xbf16>, vector<384x128xbf16>, vector<128x128xf32> -> vector<128x128xf32>
    %7 = arith.addf %3, %6 : vector<128x128xf32>
    %c0_6 = arith.constant 0 : index
    %c0_7 = arith.constant 0 : index
    %8 = vector.load %arg8[%c0_6, %c0_7] : memref<128x128xf32, #tpu.memory_space<vmem>>, vector<128x128xf32>
    tpu.vector_store %arg8[%c0_6, %c0_7], %7 {strides = array<i32>} : memref<128x128xf32, #tpu.memory_space<vmem>>, vector<128x128xf32>,
    %c0_i32_8 = arith.constant 0 : i32
    %9 = arith.cmpi eq, %arg2, %c0_i32_8 : i32
    %10 = arith.extui %9 : i1 to i32
    %c0_i32_9 = arith.constant 0 : i32
    %11 = arith.cmpi ne, %10, %c0_i32_9 : i32
    scf.if %11 {
      %c0_10 = arith.constant 0 : index
      %c0_11 = arith.constant 0 : index
      %12 = vector.load %arg8[%c0_10, %c0_11] : memref<128x128xf32, #tpu.memory_space<vmem>>, vector<128x128xf32>
      %c0_12 = arith.constant 0 : index
      %c0_13 = arith.constant 0 : index
      %13 = vector.load %arg5[%c0_12, %c0_13] : memref<1x128xf32, #tpu.memory_space<vmem>>, vector<1x128xf32>
      %14 = vector.broadcast %13 : vector<1x128xf32> to vector<128x128xf32>
      %15 = arith.mulf %12, %14 : vector<128x128xf32>
      %c0_14 = arith.constant 0 : index
      %c0_15 = arith.constant 0 : index
      %16 = vector.load %arg6[%c0_14, %c0_15] : memref<1x128xf32, #tpu.memory_space<vmem>>, vector<1x128xf32>
      %17 = vector.broadcast %16 : vector<1x128xf32> to vector<128x128xf32>
      %18 = arith.addf %15, %17 : vector<128x128xf32>
      %cst_16 = arith.constant 0.000000e+00 : f32
      %19 = vector.broadcast %cst_16 : f32 to vector<128x128xf32>
      %20 = arith.maximumf %18, %19 : vector<128x128xf32>
      %21 = arith.truncf %20 : vector<128x128xf32> to vector<128x128xbf16>
      %c0_17 = arith.constant 0 : index
      %c0_18 = arith.constant 0 : index
      %22 = vector.load %arg7[%c0_17, %c0_18] : memref<128x128xbf16, #tpu.memory_space<vmem>>, vector<128x128xbf16>
      tpu.vector_store %arg7[%c0_17, %c0_18], %21 {strides = array<i32>} : memref<128x128xbf16, #tpu.memory_space<vmem>>, vector<128x128xbf16>,
    } else {
    }
    return
  }
  func.func @transform_0(%arg0: i32, %arg1: i32, %arg2: i32) -> (i32, i32) {
    %c0_i32 = arith.constant 0 : i32
    return %arg0, %arg2 : i32, i32
  }
  func.func @transform_1(%arg0: i32, %arg1: i32, %arg2: i32) -> (i32, i32) {
    %c0_i32 = arith.constant 0 : i32
    return %arg2, %arg1 : i32, i32
  }
  func.func @transform_2(%arg0: i32, %arg1: i32, %arg2: i32) -> (i32, i32) {
    %c0_i32 = arith.constant 0 : i32
    %c0_i32_0 = arith.constant 0 : i32
    return %c0_i32, %arg1 : i32, i32
  }
  func.func @transform_3(%arg0: i32, %arg1: i32, %arg2: i32) -> (i32, i32) {
    %c0_i32 = arith.constant 0 : i32
    %c0_i32_0 = arith.constant 0 : i32
    return %c0_i32, %arg1 : i32, i32
  }
  func.func @transform_4(%arg0: i32, %arg1: i32, %arg2: i32) -> (i32, i32) {
    %c0_i32 = arith.constant 0 : i32
    return %arg0, %arg1 : i32, i32
  }
}

module attributes {stable_mosaic.version = 11 : i64} {
  func.func @_maxpool2x2_kernel(%arg0: i32, %arg1: memref<8x2x4x128xbf16, #tpu.memory_space<vmem>>, %arg2: memref<8x4x64xbf16, #tpu.memory_space<vmem>>) attributes {dimension_semantics = [#tpu.dimension_semantics<parallel>], iteration_bounds = array<i64: 1>, scalar_prefetch = 0 : i64, scratch_operands = 0 : i64, tpu.core_type = #tpu.core_type<tc>, window_params = [{transform_indices = @transform_0, window_bounds = array<i64: 8, 2, 4, 128>}, {transform_indices = @transform_1, window_bounds = array<i64: 8, 4, 64>}]} {
    %c0 = arith.constant 0 : index
    %c0_0 = arith.constant 0 : index
    %c0_1 = arith.constant 0 : index
    %c0_2 = arith.constant 0 : index
    %0 = vector.load %arg1[%c0, %c0_0, %c0_1, %c0_2] : memref<8x2x4x128xbf16, #tpu.memory_space<vmem>>, vector<8x2x4x128xbf16>
    %1 = vector.extract_strided_slice %0 {offsets = [0, 0, 0, 0], sizes = [8, 1, 4, 128], strides = [1, 1, 1, 1]} : vector<8x2x4x128xbf16> to vector<8x1x4x128xbf16>
    %2 = vector.shape_cast %1 : vector<8x1x4x128xbf16> to vector<8x4x128xbf16>
    %3 = vector.extract_strided_slice %0 {offsets = [0, 1, 0, 0], sizes = [8, 1, 4, 128], strides = [1, 1, 1, 1]} : vector<8x2x4x128xbf16> to vector<8x1x4x128xbf16>
    %4 = vector.shape_cast %3 : vector<8x1x4x128xbf16> to vector<8x4x128xbf16>
    %5 = arith.maximumf %2, %4 : vector<8x4x128xbf16>
    %6 = vector.extract_strided_slice %5 {offsets = [0, 0, 0], sizes = [8, 4, 64], strides = [1, 1, 1]} : vector<8x4x128xbf16> to vector<8x4x64xbf16>
    %7 = vector.extract_strided_slice %5 {offsets = [0, 0, 64], sizes = [8, 4, 64], strides = [1, 1, 1]} : vector<8x4x128xbf16> to vector<8x4x64xbf16>
    %8 = arith.maximumf %6, %7 : vector<8x4x64xbf16>
    %c0_3 = arith.constant 0 : index
    %c0_4 = arith.constant 0 : index
    %c0_5 = arith.constant 0 : index
    %9 = vector.load %arg2[%c0_3, %c0_4, %c0_5] : memref<8x4x64xbf16, #tpu.memory_space<vmem>>, vector<8x4x64xbf16>
    tpu.vector_store %arg2[%c0_3, %c0_4, %c0_5], %8 {strides = array<i32>} : memref<8x4x64xbf16, #tpu.memory_space<vmem>>, vector<8x4x64xbf16>,
    return
  }
  func.func @transform_0(%arg0: i32) -> (i32, i32, i32, i32) {
    %c0_i32 = arith.constant 0 : i32
    %c0_i32_0 = arith.constant 0 : i32
    %c0_i32_1 = arith.constant 0 : i32
    %c0_i32_2 = arith.constant 0 : i32
    return %arg0, %c0_i32, %c0_i32_0, %c0_i32_1 : i32, i32, i32, i32
  }
  func.func @transform_1(%arg0: i32) -> (i32, i32, i32) {
    %c0_i32 = arith.constant 0 : i32
    %c0_i32_0 = arith.constant 0 : i32
    %c0_i32_1 = arith.constant 0 : i32
    return %arg0, %c0_i32, %c0_i32_0 : i32, i32, i32
  }
}

module attributes {stable_mosaic.version = 11 : i64} {
  func.func @_matmul_bn_act_kernel(%arg0: i32, %arg1: i32, %arg2: i32, %arg3: memref<32x640xbf16, #tpu.memory_space<vmem>>, %arg4: memref<640x256xbf16, #tpu.memory_space<vmem>>, %arg5: memref<1x256xf32, #tpu.memory_space<vmem>>, %arg6: memref<1x256xf32, #tpu.memory_space<vmem>>, %arg7: memref<32x256xbf16, #tpu.memory_space<vmem>>, %arg8: memref<32x256xf32, #tpu.memory_space<vmem>>) attributes {dimension_semantics = [#tpu.dimension_semantics<parallel>, #tpu.dimension_semantics<parallel>, #tpu.dimension_semantics<arbitrary>], iteration_bounds = array<i64: 1, 2, 1>, scalar_prefetch = 0 : i64, scratch_operands = 1 : i64, tpu.core_type = #tpu.core_type<tc>, window_params = [{transform_indices = @transform_0, window_bounds = array<i64: 32, 640>}, {transform_indices = @transform_1, window_bounds = array<i64: 640, 256>}, {transform_indices = @transform_2, window_bounds = array<i64: 1, 256>}, {transform_indices = @transform_3, window_bounds = array<i64: 1, 256>}, {transform_indices = @transform_4, window_bounds = array<i64: 32, 256>}]} {
    %c0_i32 = arith.constant 0 : i32
    %0 = arith.cmpi eq, %arg2, %c0_i32 : i32
    %1 = arith.extui %0 : i1 to i32
    %c0_i32_0 = arith.constant 0 : i32
    %2 = arith.cmpi ne, %1, %c0_i32_0 : i32
    scf.if %2 {
      %cst_10 = arith.constant 0.000000e+00 : f32
      %12 = vector.broadcast %cst_10 : f32 to vector<32x256xf32>
      %c0_11 = arith.constant 0 : index
      %c0_12 = arith.constant 0 : index
      %13 = vector.load %arg8[%c0_11, %c0_12] : memref<32x256xf32, #tpu.memory_space<vmem>>, vector<32x256xf32>
      tpu.vector_store %arg8[%c0_11, %c0_12], %12 {strides = array<i32>} : memref<32x256xf32, #tpu.memory_space<vmem>>, vector<32x256xf32>,
    } else {
    }
    %c0 = arith.constant 0 : index
    %c0_1 = arith.constant 0 : index
    %3 = vector.load %arg8[%c0, %c0_1] : memref<32x256xf32, #tpu.memory_space<vmem>>, vector<32x256xf32>
    %c0_2 = arith.constant 0 : index
    %c0_3 = arith.constant 0 : index
    %4 = vector.load %arg3[%c0_2, %c0_3] : memref<32x640xbf16, #tpu.memory_space<vmem>>, vector<32x640xbf16>
    %c0_4 = arith.constant 0 : index
    %c0_5 = arith.constant 0 : index
    %5 = vector.load %arg4[%c0_4, %c0_5] : memref<640x256xbf16, #tpu.memory_space<vmem>>, vector<640x256xbf16>
    %cst = arith.constant dense<0.000000e+00> : vector<32x256xf32>
    %6 = tpu.matmul %4, %5, %cst {dimension_numbers = #tpu.dot_dimension_numbers<[1], [0], [0], [1], [0, 0, 1, 1], [], []>} : vector<32x640xbf16>, vector<640x256xbf16>, vector<32x256xf32> -> vector<32x256xf32>
    %7 = arith.addf %3, %6 : vector<32x256xf32>
    %c0_6 = arith.constant 0 : index
    %c0_7 = arith.constant 0 : index
    %8 = vector.load %arg8[%c0_6, %c0_7] : memref<32x256xf32, #tpu.memory_space<vmem>>, vector<32x256xf32>
    tpu.vector_store %arg8[%c0_6, %c0_7], %7 {strides = array<i32>} : memref<32x256xf32, #tpu.memory_space<vmem>>, vector<32x256xf32>,
    %c0_i32_8 = arith.constant 0 : i32
    %9 = arith.cmpi eq, %arg2, %c0_i32_8 : i32
    %10 = arith.extui %9 : i1 to i32
    %c0_i32_9 = arith.constant 0 : i32
    %11 = arith.cmpi ne, %10, %c0_i32_9 : i32
    scf.if %11 {
      %c0_10 = arith.constant 0 : index
      %c0_11 = arith.constant 0 : index
      %12 = vector.load %arg8[%c0_10, %c0_11] : memref<32x256xf32, #tpu.memory_space<vmem>>, vector<32x256xf32>
      %c0_12 = arith.constant 0 : index
      %c0_13 = arith.constant 0 : index
      %13 = vector.load %arg5[%c0_12, %c0_13] : memref<1x256xf32, #tpu.memory_space<vmem>>, vector<1x256xf32>
      %14 = vector.broadcast %13 : vector<1x256xf32> to vector<32x256xf32>
      %15 = arith.mulf %12, %14 : vector<32x256xf32>
      %c0_14 = arith.constant 0 : index
      %c0_15 = arith.constant 0 : index
      %16 = vector.load %arg6[%c0_14, %c0_15] : memref<1x256xf32, #tpu.memory_space<vmem>>, vector<1x256xf32>
      %17 = vector.broadcast %16 : vector<1x256xf32> to vector<32x256xf32>
      %18 = arith.addf %15, %17 : vector<32x256xf32>
      %cst_16 = arith.constant 0.000000e+00 : f32
      %19 = vector.broadcast %cst_16 : f32 to vector<32x256xf32>
      %20 = arith.maximumf %18, %19 : vector<32x256xf32>
      %21 = arith.truncf %20 : vector<32x256xf32> to vector<32x256xbf16>
      %c0_17 = arith.constant 0 : index
      %c0_18 = arith.constant 0 : index
      %22 = vector.load %arg7[%c0_17, %c0_18] : memref<32x256xbf16, #tpu.memory_space<vmem>>, vector<32x256xbf16>
      tpu.vector_store %arg7[%c0_17, %c0_18], %21 {strides = array<i32>} : memref<32x256xbf16, #tpu.memory_space<vmem>>, vector<32x256xbf16>,
    } else {
    }
    return
  }
  func.func @transform_0(%arg0: i32, %arg1: i32, %arg2: i32) -> (i32, i32) {
    %c0_i32 = arith.constant 0 : i32
    return %arg0, %arg2 : i32, i32
  }
  func.func @transform_1(%arg0: i32, %arg1: i32, %arg2: i32) -> (i32, i32) {
    %c0_i32 = arith.constant 0 : i32
    return %arg2, %arg1 : i32, i32
  }
  func.func @transform_2(%arg0: i32, %arg1: i32, %arg2: i32) -> (i32, i32) {
    %c0_i32 = arith.constant 0 : i32
    %c0_i32_0 = arith.constant 0 : i32
    return %c0_i32, %arg1 : i32, i32
  }
  func.func @transform_3(%arg0: i32, %arg1: i32, %arg2: i32) -> (i32, i32) {
    %c0_i32 = arith.constant 0 : i32
    %c0_i32_0 = arith.constant 0 : i32
    return %c0_i32, %arg1 : i32, i32
  }
  func.func @transform_4(%arg0: i32, %arg1: i32, %arg2: i32) -> (i32, i32) {
    %c0_i32 = arith.constant 0 : i32
    return %arg0, %arg1 : i32, i32
  }
}

module attributes {stable_mosaic.version = 11 : i64} {
  func.func @_maxpool2x2_kernel(%arg0: i32, %arg1: memref<4x2x2x1024xbf16, #tpu.memory_space<vmem>>, %arg2: memref<4x2x512xbf16, #tpu.memory_space<vmem>>) attributes {dimension_semantics = [#tpu.dimension_semantics<parallel>], iteration_bounds = array<i64: 1>, scalar_prefetch = 0 : i64, scratch_operands = 0 : i64, tpu.core_type = #tpu.core_type<tc>, window_params = [{transform_indices = @transform_0, window_bounds = array<i64: 4, 2, 2, 1024>}, {transform_indices = @transform_1, window_bounds = array<i64: 4, 2, 512>}]} {
    %c0 = arith.constant 0 : index
    %c0_0 = arith.constant 0 : index
    %c0_1 = arith.constant 0 : index
    %c0_2 = arith.constant 0 : index
    %0 = vector.load %arg1[%c0, %c0_0, %c0_1, %c0_2] : memref<4x2x2x1024xbf16, #tpu.memory_space<vmem>>, vector<4x2x2x1024xbf16>
    %1 = vector.extract_strided_slice %0 {offsets = [0, 0, 0, 0], sizes = [4, 1, 2, 1024], strides = [1, 1, 1, 1]} : vector<4x2x2x1024xbf16> to vector<4x1x2x1024xbf16>
    %2 = vector.shape_cast %1 : vector<4x1x2x1024xbf16> to vector<4x2x1024xbf16>
    %3 = vector.extract_strided_slice %0 {offsets = [0, 1, 0, 0], sizes = [4, 1, 2, 1024], strides = [1, 1, 1, 1]} : vector<4x2x2x1024xbf16> to vector<4x1x2x1024xbf16>
    %4 = vector.shape_cast %3 : vector<4x1x2x1024xbf16> to vector<4x2x1024xbf16>
    %5 = arith.maximumf %2, %4 : vector<4x2x1024xbf16>
    %6 = vector.extract_strided_slice %5 {offsets = [0, 0, 0], sizes = [4, 2, 512], strides = [1, 1, 1]} : vector<4x2x1024xbf16> to vector<4x2x512xbf16>
    %7 = vector.extract_strided_slice %5 {offsets = [0, 0, 512], sizes = [4, 2, 512], strides = [1, 1, 1]} : vector<4x2x1024xbf16> to vector<4x2x512xbf16>
    %8 = arith.maximumf %6, %7 : vector<4x2x512xbf16>
    %c0_3 = arith.constant 0 : index
    %c0_4 = arith.constant 0 : index
    %c0_5 = arith.constant 0 : index
    %9 = vector.load %arg2[%c0_3, %c0_4, %c0_5] : memref<4x2x512xbf16, #tpu.memory_space<vmem>>, vector<4x2x512xbf16>
    tpu.vector_store %arg2[%c0_3, %c0_4, %c0_5], %8 {strides = array<i32>} : memref<4x2x512xbf16, #tpu.memory_space<vmem>>, vector<4x2x512xbf16>,
    return
  }
  func.func @transform_0(%arg0: i32) -> (i32, i32, i32, i32) {
    %c0_i32 = arith.constant 0 : i32
    %c0_i32_0 = arith.constant 0 : i32
    %c0_i32_1 = arith.constant 0 : i32
    %c0_i32_2 = arith.constant 0 : i32
    return %arg0, %c0_i32, %c0_i32_0, %c0_i32_1 : i32, i32, i32, i32
  }
  func.func @transform_1(%arg0: i32) -> (i32, i32, i32) {
    %c0_i32 = arith.constant 0 : i32
    %c0_i32_0 = arith.constant 0 : i32
    %c0_i32_1 = arith.constant 0 : i32
    return %arg0, %c0_i32, %c0_i32_0 : i32, i32, i32
  }
}

module attributes {stable_mosaic.version = 11 : i64} {
  func.func @_avgpool_fc_kernel(%arg0: i32, %arg1: memref<2x4x512xbf16, #tpu.memory_space<vmem>>, %arg2: memref<512x128xf32, #tpu.memory_space<vmem>>, %arg3: memref<1x128xf32, #tpu.memory_space<vmem>>, %arg4: memref<2x128xf32, #tpu.memory_space<vmem>>) attributes {dimension_semantics = [#tpu.dimension_semantics<parallel>], iteration_bounds = array<i64: 1>, scalar_prefetch = 0 : i64, scratch_operands = 0 : i64, tpu.core_type = #tpu.core_type<tc>, window_params = [{transform_indices = @transform_0, window_bounds = array<i64: 2, 4, 512>}, {pipeline_mode = #tpu.pipeline_mode<synchronous>, transform_indices = @transform_1, window_bounds = array<i64: 512, 128>}, {pipeline_mode = #tpu.pipeline_mode<synchronous>, transform_indices = @transform_2, window_bounds = array<i64: 1, 128>}, {transform_indices = @transform_3, window_bounds = array<i64: 2, 128>}]} {
    %c0 = arith.constant 0 : index
    %c0_0 = arith.constant 0 : index
    %c0_1 = arith.constant 0 : index
    %0 = vector.load %arg1[%c0, %c0_0, %c0_1] : memref<2x4x512xbf16, #tpu.memory_space<vmem>>, vector<2x4x512xbf16>
    %1 = arith.extf %0 : vector<2x4x512xbf16> to vector<2x4x512xf32>
    %cst = arith.constant dense<0.000000e+00> : vector<2x512xf32>
    %2 = vector.multi_reduction <add>, %1, %cst [1] : vector<2x4x512xf32> to vector<2x512xf32>
    %cst_2 = arith.constant 2.500000e-01 : f32
    %3 = vector.broadcast %cst_2 : f32 to vector<2x512xf32>
    %4 = arith.mulf %2, %3 : vector<2x512xf32>
    %c0_3 = arith.constant 0 : index
    %c0_4 = arith.constant 0 : index
    %5 = vector.load %arg2[%c0_3, %c0_4] : memref<512x128xf32, #tpu.memory_space<vmem>>, vector<512x128xf32>
    %cst_5 = arith.constant dense<0.000000e+00> : vector<2x128xf32>
    %6 = tpu.matmul %4, %5, %cst_5 {dimension_numbers = #tpu.dot_dimension_numbers<[1], [0], [0], [1], [0, 0, 1, 1], [], []>} : vector<2x512xf32>, vector<512x128xf32>, vector<2x128xf32> -> vector<2x128xf32>
    %c0_6 = arith.constant 0 : index
    %c0_7 = arith.constant 0 : index
    %7 = vector.load %arg3[%c0_6, %c0_7] : memref<1x128xf32, #tpu.memory_space<vmem>>, vector<1x128xf32>
    %8 = vector.broadcast %7 : vector<1x128xf32> to vector<2x128xf32>
    %9 = arith.addf %6, %8 : vector<2x128xf32>
    %c0_8 = arith.constant 0 : index
    %c0_9 = arith.constant 0 : index
    %10 = vector.load %arg4[%c0_8, %c0_9] : memref<2x128xf32, #tpu.memory_space<vmem>>, vector<2x128xf32>
    tpu.vector_store %arg4[%c0_8, %c0_9], %9 {strides = array<i32>} : memref<2x128xf32, #tpu.memory_space<vmem>>, vector<2x128xf32>,
    return
  }
  func.func @transform_0(%arg0: i32) -> (i32, i32, i32) {
    %c0_i32 = arith.constant 0 : i32
    %c0_i32_0 = arith.constant 0 : i32
    %c0_i32_1 = arith.constant 0 : i32
    return %arg0, %c0_i32, %c0_i32_0 : i32, i32, i32
  }
  func.func @transform_1(%arg0: i32) -> (i32, i32) {
    %c0_i32 = arith.constant 0 : i32
    %c0_i32_0 = arith.constant 0 : i32
    %c0_i32_1 = arith.constant 0 : i32
    return %c0_i32, %c0_i32_0 : i32, i32
  }
  func.func @transform_2(%arg0: i32) -> (i32, i32) {
    %c0_i32 = arith.constant 0 : i32
    %c0_i32_0 = arith.constant 0 : i32
    %c0_i32_1 = arith.constant 0 : i32
    return %c0_i32, %c0_i32_0 : i32, i32
  }
  func.func @transform_3(%arg0: i32) -> (i32, i32) {
    %c0_i32 = arith.constant 0 : i32
    %c0_i32_0 = arith.constant 0 : i32
    return %arg0, %c0_i32 : i32, i32
  }
}

</mosaic_0001>

<llo_original>
// kernel: vgg_cifar100_forward.8
$region0: #{vgg_cifar100_forward.8}
  #allocation0 [shape = 'u32[]', space=smem, size = 0x4, offset = 0x4, fixed_abs, tag = 'smem constant byte address 0x4 - core index']
  #allocation1 [shape = 'u32[72,128]{1,0:T(1,128)}', space=vmem, size = 0x9000, scoped, tag = 'internal scratch']
  %s0 = inlined_call_operand.vmem [shape: bf16[16,2,8,64], index: 0, kind: input, shape index: {}]
  %s1 = inlined_call_operand.vmem [shape: bf16[16,8,32], index: 1, kind: output, shape index: {}]
  %s2 = sld [smem:[#allocation0]]
  $region14: #{vgg_cifar100_forward.8} parent=0
    _
  %s4 = ssub.s32 1, %s2
  %s5 = scalar_select 0, %s4, %s2
  // Predicated region
  $region2: #{vgg_cifar100_forward.8} parent=0 // pred_check
    _
  $region3: #{vgg_cifar100_forward.8} parent=0 // pred_check_branch
    %7 = sbr.rel (0) target = $region5
  $region4: #{vgg_cifar100_forward.8} parent=0 // pred_region
    _
  $region5: #{vgg_cifar100_forward.8} parent=0 // pred_fallthru
    _
  %v8 = vld [vmem:[%s0] sm:$0xf]
  %v9 = vld [vmem:[%s0 + $0x4] sm:$0xf]
  %v10 = vld [vmem:[%s0 + $0x8] sm:$0xf]
  %v11 = vld [vmem:[%s0 + $0xc] sm:$0xf]
  %v12 = vld [vmem:[%s0 + $0x10] sm:$0xf]
  %v13 = vld [vmem:[%s0 + $0x14] sm:$0xf]
  %v14 = vld [vmem:[%s0 + $0x18] sm:$0xf]
  %v15 = vld [vmem:[%s0 + $0x1c] sm:$0xf]
  %v16 = vld [vmem:[%s0 + $0x20] sm:$0xf]
  %v17 = vld [vmem:[%s0 + $0x24] sm:$0xf]
  %v18 = vld [vmem:[%s0 + $0x28] sm:$0xf]
  %v19 = vld [vmem:[%s0 + $0x2c] sm:$0xf]
  %v20 = vld [vmem:[%s0 + $0x30] sm:$0xf]
  %v21 = vld [vmem:[%s0 + $0x34] sm:$0xf]
  %v22 = vld [vmem:[%s0 + $0x38] sm:$0xf]
  %v23 = vld [vmem:[%s0 + $0x3c] sm:$0xf]
  %v24 = vld [vmem:[%s0 + $0x40] sm:$0xf]
  %v25 = vld [vmem:[%s0 + $0x44] sm:$0xf]
  %v26 = vld [vmem:[%s0 + $0x48] sm:$0xf]
  %v27 = vld [vmem:[%s0 + $0x4c] sm:$0xf]
  %v28 = vld [vmem:[%s0 + $0x50] sm:$0xf]
  %v29 = vld [vmem:[%s0 + $0x54] sm:$0xf]
  %v30 = vld [vmem:[%s0 + $0x58] sm:$0xf]
  %v31 = vld [vmem:[%s0 + $0x5c] sm:$0xf]
  %v32 = vld [vmem:[%s0 + $0x60] sm:$0xf]
  %v33 = vld [vmem:[%s0 + $0x64] sm:$0xf]
  %v34 = vld [vmem:[%s0 + $0x68] sm:$0xf]
  %v35 = vld [vmem:[%s0 + $0x6c] sm:$0xf]
  %v36 = vld [vmem:[%s0 + $0x70] sm:$0xf]
  %v37 = vld [vmem:[%s0 + $0x74] sm:$0xf]
  %v38 = vld [vmem:[%s0 + $0x78] sm:$0xf]
  %v39 = vld [vmem:[%s0 + $0x7c] sm:$0xf]
  %v40 = vunpack.c.l.bf16 %v8
  %v41 = vunpack.c.l.bf16 %v10
  %v42 = vunpack.c.l.bf16 %v12
  %v43 = vunpack.c.l.bf16 %v14
  %v44 = vunpack.c.l.bf16 %v16
  %v45 = vunpack.c.l.bf16 %v18
  %v46 = vunpack.c.l.bf16 %v20
  %v47 = vunpack.c.l.bf16 %v22
  %v48 = vunpack.c.l.bf16 %v24
  %v49 = vunpack.c.l.bf16 %v26
  %v50 = vunpack.c.l.bf16 %v28
  %v51 = vunpack.c.l.bf16 %v30
  %v52 = vunpack.c.l.bf16 %v32
  %v53 = vunpack.c.l.bf16 %v34
  %v54 = vunpack.c.l.bf16 %v36
  %v55 = vunpack.c.l.bf16 %v38
  %v56 = vunpack.c.l.bf16 %v9
  %v57 = vunpack.c.l.bf16 %v11
  %v58 = vunpack.c.l.bf16 %v13
  %v59 = vunpack.c.l.bf16 %v15
  %v60 = vunpack.c.l.bf16 %v17
  %v61 = vunpack.c.l.bf16 %v19
  %v62 = vunpack.c.l.bf16 %v21
  %v63 = vunpack.c.l.bf16 %v23
  %v64 = vunpack.c.l.bf16 %v25
  %v65 = vunpack.c.l.bf16 %v27
  %v66 = vunpack.c.l.bf16 %v29
  %v67 = vunpack.c.l.bf16 %v31
  %v68 = vunpack.c.l.bf16 %v33
  %v69 = vunpack.c.l.bf16 %v35
  %v70 = vunpack.c.l.bf16 %v37
  %v71 = vunpack.c.l.bf16 %v39
  %v72 = vmax.f32 %v40, %v56
  %v73 = vmax.f32 %v41, %v57
  %v74 = vmax.f32 %v42, %v58
  %v75 = vmax.f32 %v43, %v59
  %v76 = vmax.f32 %v44, %v60
  %v77 = vmax.f32 %v45, %v61
  %v78 = vmax.f32 %v46, %v62
  %v79 = vmax.f32 %v47, %v63
  %v80 = vmax.f32 %v48, %v64
  %v81 = vmax.f32 %v49, %v65
  %v82 = vmax.f32 %v50, %v66
  %v83 = vmax.f32 %v51, %v67
  %v84 = vmax.f32 %v52, %v68
  %v85 = vmax.f32 %v53, %v69
  %v86 = vmax.f32 %v54, %v70
  %v87 = vmax.f32 %v55, %v71
  %v88 = vpack.c.bf16 %v72, %v72
  %v89 = vpack.c.bf16 %v73, %v73
  %v90 = vpack.c.bf16 %v74, %v74
  %v91 = vpack.c.bf16 %v75, %v75
  %v92 = vpack.c.bf16 %v76, %v76
  %v93 = vpack.c.bf16 %v77, %v77
  %v94 = vpack.c.bf16 %v78, %v78
  %v95 = vpack.c.bf16 %v79, %v79
  %v96 = vpack.c.bf16 %v80, %v80
  %v97 = vpack.c.bf16 %v81, %v81
  %v98 = vpack.c.bf16 %v82, %v82
  %v99 = vpack.c.bf16 %v83, %v83
  %v100 = vpack.c.bf16 %v84, %v84
  %v101 = vpack.c.bf16 %v85, %v85
  %v102 = vpack.c.bf16 %v86, %v86
  %v103 = vpack.c.bf16 %v87, %v87
  %v104 = vunpack.c.l.bf16 %v88
  %v105 = vunpack.c.l.bf16 %v89
  %v106 = vunpack.c.l.bf16 %v90
  %v107 = vunpack.c.l.bf16 %v91
  %v108 = vunpack.c.l.bf16 %v92
  %v109 = vunpack.c.l.bf16 %v93
  %v110 = vunpack.c.l.bf16 %v94
  %v111 = vunpack.c.l.bf16 %v95
  %v112 = vunpack.c.l.bf16 %v96
  %v113 = vunpack.c.l.bf16 %v97
  %v114 = vunpack.c.l.bf16 %v98
  %v115 = vunpack.c.l.bf16 %v99
  %v116 = vunpack.c.l.bf16 %v100
  %v117 = vunpack.c.l.bf16 %v101
  %v118 = vunpack.c.l.bf16 %v102
  %v119 = vunpack.c.l.bf16 %v103
  %136 = vrot.lane.b32.xlu0 %v104, 96
  %v137 = vpop.permute.xlu0 %136
  %138 = vrot.lane.b32.xlu0 %v105, 96
  %v139 = vpop.permute.xlu0 %138
  %140 = vrot.lane.b32.xlu0 %v106, 96
  %v141 = vpop.permute.xlu0 %140
  %142 = vrot.lane.b32.xlu0 %v107, 96
  %v143 = vpop.permute.xlu0 %142
  %144 = vrot.lane.b32.xlu0 %v108, 96
  %v145 = vpop.permute.xlu0 %144
  %146 = vrot.lane.b32.xlu0 %v109, 96
  %v147 = vpop.permute.xlu0 %146
  %148 = vrot.lane.b32.xlu0 %v110, 96
  %v149 = vpop.permute.xlu0 %148
  %150 = vrot.lane.b32.xlu0 %v111, 96
  %v151 = vpop.permute.xlu0 %150
  %152 = vrot.lane.b32.xlu0 %v112, 96
  %v153 = vpop.permute.xlu0 %152
  %154 = vrot.lane.b32.xlu0 %v113, 96
  %v155 = vpop.permute.xlu0 %154
  %156 = vrot.lane.b32.xlu0 %v114, 96
  %v157 = vpop.permute.xlu0 %156
  %158 = vrot.lane.b32.xlu0 %v115, 96
  %v159 = vpop.permute.xlu0 %158
  %160 = vrot.lane.b32.xlu0 %v116, 96
  %v161 = vpop.permute.xlu0 %160
  %162 = vrot.lane.b32.xlu0 %v117, 96
  %v163 = vpop.permute.xlu0 %162
  %164 = vrot.lane.b32.xlu0 %v118, 96
  %v165 = vpop.permute.xlu0 %164
  %166 = vrot.lane.b32.xlu0 %v119, 96
  %v167 = vpop.permute.xlu0 %166
  %v184 = vmax.f32 %v104, %v137
  %v185 = vmax.f32 %v105, %v139
  %v186 = vmax.f32 %v106, %v141
  %v187 = vmax.f32 %v107, %v143
  %v188 = vmax.f32 %v108, %v145
  %v189 = vmax.f32 %v109, %v147
  %v190 = vmax.f32 %v110, %v149
  %v191 = vmax.f32 %v111, %v151
  %v192 = vmax.f32 %v112, %v153
  %v193 = vmax.f32 %v113, %v155
  %v194 = vmax.f32 %v114, %v157
  %v195 = vmax.f32 %v115, %v159
  %v196 = vmax.f32 %v116, %v161
  %v197 = vmax.f32 %v117, %v163
  %v198 = vmax.f32 %v118, %v165
  %v199 = vmax.f32 %v119, %v167
  %v200 = vpack.c.bf16 %v184, %v184
  %v201 = vpack.c.bf16 %v185, %v185
  %v202 = vpack.c.bf16 %v186, %v186
  %v203 = vpack.c.bf16 %v187, %v187
  %v204 = vpack.c.bf16 %v188, %v188
  %v205 = vpack.c.bf16 %v189, %v189
  %v206 = vpack.c.bf16 %v190, %v190
  %v207 = vpack.c.bf16 %v191, %v191
  %v208 = vpack.c.bf16 %v192, %v192
  %v209 = vpack.c.bf16 %v193, %v193
  %v210 = vpack.c.bf16 %v194, %v194
  %v211 = vpack.c.bf16 %v195, %v195
  %v212 = vpack.c.bf16 %v196, %v196
  %v213 = vpack.c.bf16 %v197, %v197
  %v214 = vpack.c.bf16 %v198, %v198
  %v215 = vpack.c.bf16 %v199, %v199
  %vm216 = vcmask 257024
  %217 = vst.msk [vmem:[%s1] sm:$0xf] %vm216, %v200
  %218 = vst.msk [vmem:[%s1 + $0x4] sm:$0xf] %vm216, %v201
  %219 = vst.msk [vmem:[%s1 + $0x8] sm:$0xf] %vm216, %v202
  %220 = vst.msk [vmem:[%s1 + $0xc] sm:$0xf] %vm216, %v203
  %221 = vst.msk [vmem:[%s1 + $0x10] sm:$0xf] %vm216, %v204
  %222 = vst.msk [vmem:[%s1 + $0x14] sm:$0xf] %vm216, %v205
  %223 = vst.msk [vmem:[%s1 + $0x18] sm:$0xf] %vm216, %v206
  %224 = vst.msk [vmem:[%s1 + $0x1c] sm:$0xf] %vm216, %v207
  %225 = vst.msk [vmem:[%s1 + $0x20] sm:$0xf] %vm216, %v208
  %226 = vst.msk [vmem:[%s1 + $0x24] sm:$0xf] %vm216, %v209
  %227 = vst.msk [vmem:[%s1 + $0x28] sm:$0xf] %vm216, %v210
  %228 = vst.msk [vmem:[%s1 + $0x2c] sm:$0xf] %vm216, %v211
  %229 = vst.msk [vmem:[%s1 + $0x30] sm:$0xf] %vm216, %v212
  %230 = vst.msk [vmem:[%s1 + $0x34] sm:$0xf] %vm216, %v213
  %231 = vst.msk [vmem:[%s1 + $0x38] sm:$0xf] %vm216, %v214
  %232 = vst.msk [vmem:[%s1 + $0x3c] sm:$0xf] %vm216, %v215
  // Predicated region
  $region6: #{vgg_cifar100_forward.8} parent=0 // pred_check
    _
  $region7: #{vgg_cifar100_forward.8} parent=0 // pred_check_branch
    %234 = sbr.rel (0) target = $region9
  $region8: #{vgg_cifar100_forward.8} parent=0 // pred_region
    _
  $region9: #{vgg_cifar100_forward.8} parent=0 // pred_fallthru
    _
  // Predicated region
  $region10: #{vgg_cifar100_forward.8} parent=0 // pred_check
    _
  $region11: #{vgg_cifar100_forward.8} parent=0 // pred_check_branch
    %236 = sbr.rel (0) target = $region13
  $region12: #{vgg_cifar100_forward.8} parent=0 // pred_region
    _
  $region13: #{vgg_cifar100_forward.8} parent=0 // pred_fallthru
    _

// kernel: vgg_cifar100_forward.7
$region0: #{vgg_cifar100_forward.7}
  #allocation0 [shape = 'u32[]', space=smem, size = 0x4, offset = 0x4, fixed_abs, tag = 'smem constant byte address 0x4 - core index']
  #allocation1 [shape = 'u32[72,128]{1,0:T(1,128)}', space=vmem, size = 0x9000, scoped, tag = 'internal scratch']
  #allocation2 [shape = 'f32[256,128]{1,0:T(8,128)}', space=vmem, size = 0x20000, scoped, tag = 'scratch operand']
  %s0 = inlined_call_operand.vmem [shape: bf16[512,128], index: 0, kind: input, shape index: {}]
  %s1 = inlined_call_operand.vmem [shape: bf16[128,128], index: 1, kind: input, shape index: {}]
  %s2 = inlined_call_operand.vmem [shape: f32[1,128], index: 2, kind: input, shape index: {}]
  %s3 = inlined_call_operand.vmem [shape: f32[1,128], index: 3, kind: input, shape index: {}]
  %s4 = inlined_call_operand.vmem [shape: bf16[512,128], index: 4, kind: output, shape index: {}]
  %s5 = sld [smem:[#allocation0]]
  $region57: #{vgg_cifar100_forward.7} parent=0
    _
  %s7 = ssub.s32 1, %s5
  %s8 = scalar_select 0, %s7, %s5
  loop: start=0, step=1, limit=4
  $region2: #{vgg_cifar100_forward.7} parent=0 // loop_pre_header
    _
  $region3: #{vgg_cifar100_forward.7} parent=0 // loop_header
    %s10 = sphi 0, %s14
    %p11 = scmp.ge.s32.totalorder %s10, 4
    %s17 = sphi 0, %s36
    %s18 = sphi 0, %s32
    %s19 = sphi 0, %s28
    %s20 = sphi 0, %s17
    %s21 = sphi 0, %s18
    %s22 = sphi 0, %s19
    %s23 = sphi 0, %s20
    %s24 = sphi 0, %s21
    %s25 = sphi 0, %s22
    %s41 = sphi 0, %s43
    %s44 = sphi 0, %s41
    %s45 = sphi 0, %s44
    %s61 = sphi 0, %s45
    %s69 = sphi 0, %s71
    %s72 = sphi 0, %s69
    %s73 = sphi 0, %s72
    %s89 = sphi 0, %s73
    %s95 = sphi 0, %s97
    %s98 = sphi 0, %s95
    %s99 = sphi 0, %s98
    %s115 = sphi 0, %s99
    %s121 = sphi 0, %s123
    %s124 = sphi 0, %s121
    %s125 = sphi 0, %s124
    %s141 = sphi 0, %s125
    %s149 = sphi 0, %s151
    %s152 = sphi 0, %s149
    %s153 = sphi 0, %s152
    %s169 = sphi 0, %s153
  $region4: #{vgg_cifar100_forward.7} parent=0 // loop_header_branch
    %13 = sbr.rel (%p11) target = $region8
  $region5: #{vgg_cifar100_forward.7} parent=0 // loop_body
    %s15 = ssub.s32 %s10, 1
    %s16 = ssub.s32 %s10, 2
    %s26 = sadd.s32 1, %s19
    %p27 = scmp.ge.s32.totalorder %s26, 1
    %s28 = scalar_select %p27, 0, %s26
    %s29 = sadd.s32 1, %s18
    %s30 = scalar_select %p27, %s29, %s18
    %p31 = scmp.ge.s32.totalorder %s30, 1
    %s32 = scalar_select %p31, 0, %s30
    %s33 = sadd.s32 1, %s17
    %s34 = scalar_select %p31, %s33, %s17
    %p35 = scmp.ge.s32.totalorder %s34, 2
    %s36 = scalar_select %p35, 0, %s34
    %s37 = ssub.s32 %s17, %s36
    %s38 = ssub.s32 %s19, %s28
    %s39 = sor.u32 %s37, %s38
    %p40 = scmp.eq.s32.totalorder %s39, 0
    %s42 = sadd.s32 %s41, 1
    %s43 = scalar_select %p40, %s41, %s42
    %p46 = pneg %p40
    %p47 = scmp.eq.s32.totalorder %s10, 1
    %p48 = por %p46, %p47
    %p49 = scmp.ne.s32.totalorder %s41, %s44
    %p50 = scmp.eq.s32.totalorder %s10, 0
    %p51 = por %p49, %p50
    %p52 = scmp.ne.s32.totalorder %s41, %s44
    %p53 = scmp.eq.s32.totalorder %s15, 1
    %p54 = por %p52, %p53
    %p55 = scmp.ne.s32.totalorder %s44, %s45
    %p56 = scmp.eq.s32.totalorder %s15, 0
    %p57 = por %p55, %p56
    %p58 = scmp.ne.s32.totalorder %s44, %s45
    %p59 = scmp.eq.s32.totalorder %s16, 1
    %p60 = por %p58, %p59
    %p62 = scmp.ne.s32.totalorder %s45, %s61
    %p63 = scmp.eq.s32.totalorder %s16, 0
    %p64 = por %p62, %p63
    %s65 = ssub.s32 %s19, %s28
    %s66 = ssub.s32 %s18, %s32
    %s67 = sor.u32 %s65, %s66
    %p68 = scmp.eq.s32.totalorder %s67, 0
    %s70 = sadd.s32 %s69, 1
    %s71 = scalar_select %p68, %s69, %s70
    %p74 = pneg %p68
    %p75 = scmp.eq.s32.totalorder %s10, 1
    %p76 = por %p74, %p75
    %p77 = scmp.ne.s32.totalorder %s69, %s72
    %p78 = scmp.eq.s32.totalorder %s10, 0
    %p79 = por %p77, %p78
    %p80 = scmp.ne.s32.totalorder %s69, %s72
    %p81 = scmp.eq.s32.totalorder %s15, 1
    %p82 = por %p80, %p81
    %p83 = scmp.ne.s32.totalorder %s72, %s73
    %p84 = scmp.eq.s32.totalorder %s15, 0
    %p85 = por %p83, %p84
    %p86 = scmp.ne.s32.totalorder %s72, %s73
    %p87 = scmp.eq.s32.totalorder %s16, 1
    %p88 = por %p86, %p87
    %p90 = scmp.ne.s32.totalorder %s73, %s89
    %p91 = scmp.eq.s32.totalorder %s16, 0
    %p92 = por %p90, %p91
    %s93 = ssub.s32 %s18, %s32
    %p94 = scmp.eq.s32.totalorder %s93, 0
    %s96 = sadd.s32 %s95, 1
    %s97 = scalar_select %p94, %s95, %s96
    %p100 = pneg %p94
    %p101 = scmp.eq.s32.totalorder %s10, 1
    %p102 = por %p100, %p101
    %p103 = scmp.ne.s32.totalorder %s95, %s98
    %p104 = scmp.eq.s32.totalorder %s10, 0
    %p105 = por %p103, %p104
    %p106 = scmp.ne.s32.totalorder %s95, %s98
    %p107 = scmp.eq.s32.totalorder %s15, 1
    %p108 = por %p106, %p107
    %p109 = scmp.ne.s32.totalorder %s98, %s99
    %p110 = scmp.eq.s32.totalorder %s15, 0
    %p111 = por %p109, %p110
    %p112 = scmp.ne.s32.totalorder %s98, %s99
    %p113 = scmp.eq.s32.totalorder %s16, 1
    %p114 = por %p112, %p113
    %p116 = scmp.ne.s32.totalorder %s99, %s115
    %p117 = scmp.eq.s32.totalorder %s16, 0
    %p118 = por %p116, %p117
    %s119 = ssub.s32 %s18, %s32
    %p120 = scmp.eq.s32.totalorder %s119, 0
    %s122 = sadd.s32 %s121, 1
    %s123 = scalar_select %p120, %s121, %s122
    %p126 = pneg %p120
    %p127 = scmp.eq.s32.totalorder %s10, 1
    %p128 = por %p126, %p127
    %p129 = scmp.ne.s32.totalorder %s121, %s124
    %p130 = scmp.eq.s32.totalorder %s10, 0
    %p131 = por %p129, %p130
    %p132 = scmp.ne.s32.totalorder %s121, %s124
    %p133 = scmp.eq.s32.totalorder %s15, 1
    %p134 = por %p132, %p133
    %p135 = scmp.ne.s32.totalorder %s124, %s125
    %p136 = scmp.eq.s32.totalorder %s15, 0
    %p137 = por %p135, %p136
    %p138 = scmp.ne.s32.totalorder %s124, %s125
    %p139 = scmp.eq.s32.totalorder %s16, 1
    %p140 = por %p138, %p139
    %p142 = scmp.ne.s32.totalorder %s125, %s141
    %p143 = scmp.eq.s32.totalorder %s16, 0
    %p144 = por %p142, %p143
    %s145 = ssub.s32 %s17, %s36
    %s146 = ssub.s32 %s18, %s32
    %s147 = sor.u32 %s145, %s146
    %p148 = scmp.eq.s32.totalorder %s147, 0
    %s150 = sadd.s32 %s149, 1
    %s151 = scalar_select %p148, %s149, %s150
    %p154 = pneg %p148
    %p155 = scmp.eq.s32.totalorder %s10, 1
    %p156 = por %p154, %p155
    %p157 = scmp.ne.s32.totalorder %s149, %s152
    %p158 = scmp.eq.s32.totalorder %s10, 0
    %p159 = por %p157, %p158
    %p160 = scmp.ne.s32.totalorder %s149, %s152
    %p161 = scmp.eq.s32.totalorder %s15, 1
    %p162 = por %p160, %p161
    %p163 = scmp.ne.s32.totalorder %s152, %s153
    %p164 = scmp.eq.s32.totalorder %s15, 0
    %p165 = por %p163, %p164
    %p166 = scmp.ne.s32.totalorder %s152, %s153
    %p167 = scmp.eq.s32.totalorder %s16, 1
    %p168 = por %p166, %p167
    %p170 = scmp.ne.s32.totalorder %s153, %s169
    %p171 = scmp.eq.s32.totalorder %s16, 0
    %p172 = por %p170, %p171
    %p173 = scmp.le.s32.totalorder 1, %s10
    %p174 = scmp.lt.s32.totalorder %s10, 3
    %p175 = pnand %p173, %p174
    %p176 = pneg %p175
    // Predicated region
    $region9: #{vgg_cifar100_forward.7} parent=5 // pred_check
      _
    $region10: #{vgg_cifar100_forward.7} parent=5 // pred_check_branch
      %178 = sbr.rel (%p175) target = $region12
    $region11: #{vgg_cifar100_forward.7} parent=5 // pred_region
      %s179 = ssub.s32 %s10, 1
      // Predicated region
      $region13: #{vgg_cifar100_forward.7} parent=11 // pred_check
        %p180 = pneg %p85
      $region14: #{vgg_cifar100_forward.7} parent=11 // pred_check_branch
        %182 = sbr.rel (%p180) target = $region16
      $region15: #{vgg_cifar100_forward.7} parent=11 // pred_region
        %s183 = smul.u32 16, %s22
        %p184 = scmp.lt.s32.totalorder %s183, 15
        %s185 = scalar_select %p184, %s183, 15
        %p186 = scmp.lt.s32.totalorder %s21, 0
        %s187 = scalar_select %p186, %s21, 0
        %s188 = sadd.s32 %s187, %s185
        %s189 = smul.addr %s188, 4
        %s190 = scalar_lea.vmem %s1, %s189
        %s191 = smul.u32 16, %s22
      $region16: #{vgg_cifar100_forward.7} parent=11 // pred_fallthru
        _
      // Predicated region
      $region17: #{vgg_cifar100_forward.7} parent=11 // pred_check
        %p192 = pneg %p111
      $region18: #{vgg_cifar100_forward.7} parent=11 // pred_check_branch
        %194 = sbr.rel (%p192) target = $region20
      $region19: #{vgg_cifar100_forward.7} parent=11 // pred_region
        %p195 = scmp.lt.s32.totalorder %s21, 0
        %s196 = scalar_select %p195, %s21, 0
        %s197 = scalar_lea.vmem %s2, %s196
      $region20: #{vgg_cifar100_forward.7} parent=11 // pred_fallthru
        _
      // Predicated region
      $region21: #{vgg_cifar100_forward.7} parent=11 // pred_check
        %p198 = pneg %p137
      $region22: #{vgg_cifar100_forward.7} parent=11 // pred_check_branch
        %200 = sbr.rel (%p198) target = $region24
      $region23: #{vgg_cifar100_forward.7} parent=11 // pred_region
        %p201 = scmp.lt.s32.totalorder %s21, 0
        %s202 = scalar_select %p201, %s21, 0
        %s203 = scalar_lea.vmem %s3, %s202
      $region24: #{vgg_cifar100_forward.7} parent=11 // pred_fallthru
        _
    $region12: #{vgg_cifar100_forward.7} parent=5 // pred_fallthru
      _
    %p204 = scmp.lt.s32.totalorder %s10, 2
    // Predicated region
    $region25: #{vgg_cifar100_forward.7} parent=5 // pred_check
      %p205 = pneg %p204
    $region26: #{vgg_cifar100_forward.7} parent=5 // pred_check_branch
      %207 = sbr.rel (%p205) target = $region28
    $region27: #{vgg_cifar100_forward.7} parent=5 // pred_region
      // Predicated region
      $region29: #{vgg_cifar100_forward.7} parent=27 // pred_check
        %p208 = pneg %p51
      $region30: #{vgg_cifar100_forward.7} parent=27 // pred_check_branch
        %210 = sbr.rel (%p208) target = $region32
      $region31: #{vgg_cifar100_forward.7} parent=27 // pred_region
        %s211 = smul.u32 32, %s17
        %p212 = scmp.lt.s32.totalorder %s211, 63
        %s213 = scalar_select %p212, %s211, 63
        %p214 = scmp.lt.s32.totalorder %s19, 0
        %s215 = scalar_select %p214, %s19, 0
        %s216 = sadd.s32 %s215, %s213
        %s217 = smul.addr %s216, 4
        %s218 = scalar_lea.vmem %s0, %s217
        %s219 = smul.u32 32, %s17
      $region32: #{vgg_cifar100_forward.7} parent=27 // pred_fallthru
        _
    $region28: #{vgg_cifar100_forward.7} parent=5 // pred_fallthru
      _
    %p220 = scmp.le.s32.totalorder 1, %s10
    %p221 = scmp.lt.s32.totalorder %s10, 3
    %p222 = pnand %p220, %p221
    %p223 = pneg %p222
    // Predicated region
    $region33: #{vgg_cifar100_forward.7} parent=5 // pred_check
      _
    $region34: #{vgg_cifar100_forward.7} parent=5 // pred_check_branch
      %225 = sbr.rel (%p222) target = $region36
    $region35: #{vgg_cifar100_forward.7} parent=5 // pred_region
      %s226 = ssub.s32 %s10, 1
      %s227 = smul.u32 32, %s20
      %p228 = scmp.lt.s32.totalorder %s227, 63
      %s229 = scalar_select %p228, %s227, 63
      %p230 = scmp.lt.s32.totalorder %s22, 0
      %s231 = scalar_select %p230, %s22, 0
      %s232 = sadd.s32 %s231, %s229
      %s233 = smul.addr %s232, 4
      %s234 = scalar_lea.vmem %s0, %s233
      %p235 = pneg %p57
      %p236 = pneg %p54
      %s237 = smul.u32 16, %s22
      %p238 = scmp.lt.s32.totalorder %s237, 15
      %s239 = scalar_select %p238, %s237, 15
      %p240 = scmp.lt.s32.totalorder %s21, 0
      %s241 = scalar_select %p240, %s21, 0
      %s242 = sadd.s32 %s241, %s239
      %s243 = smul.addr %s242, 4
      %s244 = scalar_lea.vmem %s1, %s243
      %p245 = pneg %p85
      %p246 = pneg %p82
      %p247 = scmp.lt.s32.totalorder %s21, 0
      %s248 = scalar_select %p247, %s21, 0
      %s249 = scalar_lea.vmem %s2, %s248
      %p250 = pneg %p111
      %p251 = pneg %p108
      %p252 = scmp.lt.s32.totalorder %s21, 0
      %s253 = scalar_select %p252, %s21, 0
      %s254 = scalar_lea.vmem %s3, %s253
      %p255 = pneg %p137
      %p256 = pneg %p134
      %p257 = pneg %p165
      %p258 = pneg %p162
      %s259 = smul.u32 32, %s20
      %p260 = scmp.lt.s32.totalorder %s259, 63
      %s261 = scalar_select %p260, %s259, 63
      %p262 = scmp.lt.s32.totalorder %s21, 0
      %s263 = scalar_select %p262, %s21, 0
      %s264 = sadd.s32 %s263, %s261
      %s265 = smul.addr %s264, 4
      %s266 = scalar_lea.vmem %s4, %s265
      %s267 = smul.u32 32, %s20
      %p268 = scmp.lt.s32.totalorder %s267, 63
      %s269 = scalar_select %p268, %s267, 63
      %p270 = scmp.lt.s32.totalorder %s22, 0
      %s271 = scalar_select %p270, %s22, 0
      %s272 = sadd.s32 %s271, %s269
      %s273 = smul.addr %s272, 4
      %s274 = scalar_lea.vmem %s0, %s273
      %s275 = smul.u32 32, %s20
      %s276 = smul.u32 16, %s22
      %p277 = scmp.lt.s32.totalorder %s276, 15
      %s278 = scalar_select %p277, %s276, 15
      %p279 = scmp.lt.s32.totalorder %s21, 0
      %s280 = scalar_select %p279, %s21, 0
      %s281 = sadd.s32 %s280, %s278
      %s282 = smul.addr %s281, 4
      %s283 = scalar_lea.vmem %s1, %s282
      %s284 = smul.u32 16, %s22
      %p285 = scmp.lt.s32.totalorder %s21, 0
      %s286 = scalar_select %p285, %s21, 0
      %s287 = scalar_lea.vmem %s2, %s286
      %p288 = scmp.lt.s32.totalorder %s21, 0
      %s289 = scalar_select %p288, %s21, 0
      %s290 = scalar_lea.vmem %s3, %s289
      %s291 = smul.u32 32, %s20
      %p292 = scmp.lt.s32.totalorder %s291, 63
      %s293 = scalar_select %p292, %s291, 63
      %p294 = scmp.lt.s32.totalorder %s21, 0
      %s295 = scalar_select %p294, %s21, 0
      %s296 = sadd.s32 %s295, %s293
      %s297 = smul.addr %s296, 4
      %s298 = scalar_lea.vmem %s4, %s297
      %s299 = smul.u32 32, %s20
      %p300 = scmp.eq.s32.totalorder %s22, 0
      // Predicated region
      $region37: #{vgg_cifar100_forward.7} parent=35 // pred_check
        %p301 = pneg %p300
      $region38: #{vgg_cifar100_forward.7} parent=35 // pred_check_branch
        %303 = sbr.rel (%p301) target = $region40
      $region39: #{vgg_cifar100_forward.7} parent=35 // pred_region
        %304 = vst [vmem:[#allocation2] sm:$0xff] 0.0
        %305 = vst [vmem:[#allocation2 + $0x8] sm:$0xff] 0.0
        %306 = vst [vmem:[#allocation2 + $0x10] sm:$0xff] 0.0
        %307 = vst [vmem:[#allocation2 + $0x18] sm:$0xff] 0.0
        %308 = vst [vmem:[#allocation2 + $0x20] sm:$0xff] 0.0
        %309 = vst [vmem:[#allocation2 + $0x28] sm:$0xff] 0.0
        %310 = vst [vmem:[#allocation2 + $0x30] sm:$0xff] 0.0
        %311 = vst [vmem:[#allocation2 + $0x38] sm:$0xff] 0.0
        %312 = vst [vmem:[#allocation2 + $0x40] sm:$0xff] 0.0
        %313 = vst [vmem:[#allocation2 + $0x48] sm:$0xff] 0.0
        %314 = vst [vmem:[#allocation2 + $0x50] sm:$0xff] 0.0
        %315 = vst [vmem:[#allocation2 + $0x58] sm:$0xff] 0.0
        %316 = vst [vmem:[#allocation2 + $0x60] sm:$0xff] 0.0
        %317 = vst [vmem:[#allocation2 + $0x68] sm:$0xff] 0.0
        %318 = vst [vmem:[#allocation2 + $0x70] sm:$0xff] 0.0
        %319 = vst [vmem:[#allocation2 + $0x78] sm:$0xff] 0.0
        %320 = vst [vmem:[#allocation2 + $0x80] sm:$0xff] 0.0
        %321 = vst [vmem:[#allocation2 + $0x88] sm:$0xff] 0.0
        %322 = vst [vmem:[#allocation2 + $0x90] sm:$0xff] 0.0
        %323 = vst [vmem:[#allocation2 + $0x98] sm:$0xff] 0.0
        %324 = vst [vmem:[#allocation2 + $0xa0] sm:$0xff] 0.0
        %325 = vst [vmem:[#allocation2 + $0xa8] sm:$0xff] 0.0
        %326 = vst [vmem:[#allocation2 + $0xb0] sm:$0xff] 0.0
        %327 = vst [vmem:[#allocation2 + $0xb8] sm:$0xff] 0.0
        %328 = vst [vmem:[#allocation2 + $0xc0] sm:$0xff] 0.0
        %329 = vst [vmem:[#allocation2 + $0xc8] sm:$0xff] 0.0
        %330 = vst [vmem:[#allocation2 + $0xd0] sm:$0xff] 0.0
        %331 = vst [vmem:[#allocation2 + $0xd8] sm:$0xff] 0.0
        %332 = vst [vmem:[#allocation2 + $0xe0] sm:$0xff] 0.0
        %333 = vst [vmem:[#allocation2 + $0xe8] sm:$0xff] 0.0
        %334 = vst [vmem:[#allocation2 + $0xf0] sm:$0xff] 0.0
        %335 = vst [vmem:[#allocation2 + $0xf8] sm:$0xff] 0.0
      $region40: #{vgg_cifar100_forward.7} parent=35 // pred_fallthru
        _
      %v336 = vld [vmem:[#allocation2] sm:$0xff]
      %v337 = vld [vmem:[#allocation2 + $0x8] sm:$0xff]
      %v338 = vld [vmem:[#allocation2 + $0x10] sm:$0xff]
      %v339 = vld [vmem:[#allocation2 + $0x18] sm:$0xff]
      %v340 = vld [vmem:[#allocation2 + $0x20] sm:$0xff]
      %v341 = vld [vmem:[#allocation2 + $0x28] sm:$0xff]
      %v342 = vld [vmem:[#allocation2 + $0x30] sm:$0xff]
      %v343 = vld [vmem:[#allocation2 + $0x38] sm:$0xff]
      %v344 = vld [vmem:[#allocation2 + $0x40] sm:$0xff]
      %v345 = vld [vmem:[#allocation2 + $0x48] sm:$0xff]
      %v346 = vld [vmem:[#allocation2 + $0x50] sm:$0xff]
      %v347 = vld [vmem:[#allocation2 + $0x58] sm:$0xff]
      %v348 = vld [vmem:[#allocation2 + $0x60] sm:$0xff]
      %v349 = vld [vmem:[#allocation2 + $0x68] sm:$0xff]
      %v350 = vld [vmem:[#allocation2 + $0x70] sm:$0xff]
      %v351 = vld [vmem:[#allocation2 + $0x78] sm:$0xff]
      %v352 = vld [vmem:[#allocation2 + $0x80] sm:$0xff]
      %v353 = vld [vmem:[#allocation2 + $0x88] sm:$0xff]
      %v354 = vld [vmem:[#allocation2 + $0x90] sm:$0xff]
      %v355 = vld [vmem:[#allocation2 + $0x98] sm:$0xff]
      %v356 = vld [vmem:[#allocation2 + $0xa0] sm:$0xff]
      %v357 = vld [vmem:[#allocation2 + $0xa8] sm:$0xff]
      %v358 = vld [vmem:[#allocation2 + $0xb0] sm:$0xff]
      %v359 = vld [vmem:[#allocation2 + $0xb8] sm:$0xff]
      %v360 = vld [vmem:[#allocation2 + $0xc0] sm:$0xff]
      %v361 = vld [vmem:[#allocation2 + $0xc8] sm:$0xff]
      %v362 = vld [vmem:[#allocation2 + $0xd0] sm:$0xff]
      %v363 = vld [vmem:[#allocation2 + $0xd8] sm:$0xff]
      %v364 = vld [vmem:[#allocation2 + $0xe0] sm:$0xff]
      %v365 = vld [vmem:[#allocation2 + $0xe8] sm:$0xff]
      %v366 = vld [vmem:[#allocation2 + $0xf0] sm:$0xff]
      %v367 = vld [vmem:[#allocation2 + $0xf8] sm:$0xff]
      %v368 = vld [vmem:[%s274] sm:$0xf]
      %v369 = vld [vmem:[%s274 + $0x4] sm:$0xf]
      %v370 = vld [vmem:[%s274 + $0x8] sm:$0xf]
      %v371 = vld [vmem:[%s274 + $0xc] sm:$0xf]
      %v372 = vld [vmem:[%s274 + $0x10] sm:$0xf]
      %v373 = vld [vmem:[%s274 + $0x14] sm:$0xf]
      %v374 = vld [vmem:[%s274 + $0x18] sm:$0xf]
      %v375 = vld [vmem:[%s274 + $0x1c] sm:$0xf]
      %v376 = vld [vmem:[%s274 + $0x20] sm:$0xf]
      %v377 = vld [vmem:[%s274 + $0x24] sm:$0xf]
      %v378 = vld [vmem:[%s274 + $0x28] sm:$0xf]
      %v379 = vld [vmem:[%s274 + $0x2c] sm:$0xf]
      %v380 = vld [vmem:[%s274 + $0x30] sm:$0xf]
      %v381 = vld [vmem:[%s274 + $0x34] sm:$0xf]
      %v382 = vld [vmem:[%s274 + $0x38] sm:$0xf]
      %v383 = vld [vmem:[%s274 + $0x3c] sm:$0xf]
      %v384 = vld [vmem:[%s274 + $0x40] sm:$0xf]
      %v385 = vld [vmem:[%s274 + $0x44] sm:$0xf]
      %v386 = vld [vmem:[%s274 + $0x48] sm:$0xf]
      %v387 = vld [vmem:[%s274 + $0x4c] sm:$0xf]
      %v388 = vld [vmem:[%s274 + $0x50] sm:$0xf]
      %v389 = vld [vmem:[%s274 + $0x54] sm:$0xf]
      %v390 = vld [vmem:[%s274 + $0x58] sm:$0xf]
      %v391 = vld [vmem:[%s274 + $0x5c] sm:$0xf]
      %v392 = vld [vmem:[%s274 + $0x60] sm:$0xf]
      %v393 = vld [vmem:[%s274 + $0x64] sm:$0xf]
      %v394 = vld [vmem:[%s274 + $0x68] sm:$0xf]
      %v395 = vld [vmem:[%s274 + $0x6c] sm:$0xf]
      %v396 = vld [vmem:[%s274 + $0x70] sm:$0xf]
      %v397 = vld [vmem:[%s274 + $0x74] sm:$0xf]
      %v398 = vld [vmem:[%s274 + $0x78] sm:$0xf]
      %v399 = vld [vmem:[%s274 + $0x7c] sm:$0xf]
      %v400 = vld [vmem:[%s283] sm:$0xf]
      %v401 = vld [vmem:[%s283 + $0x4] sm:$0xf]
      %v402 = vld [vmem:[%s283 + $0x8] sm:$0xf]
      %v403 = vld [vmem:[%s283 + $0xc] sm:$0xf]
      %v404 = vld [vmem:[%s283 + $0x10] sm:$0xf]
      %v405 = vld [vmem:[%s283 + $0x14] sm:$0xf]
      %v406 = vld [vmem:[%s283 + $0x18] sm:$0xf]
      %v407 = vld [vmem:[%s283 + $0x1c] sm:$0xf]
      %v408 = vld [vmem:[%s283 + $0x20] sm:$0xf]
      %v409 = vld [vmem:[%s283 + $0x24] sm:$0xf]
      %v410 = vld [vmem:[%s283 + $0x28] sm:$0xf]
      %v411 = vld [vmem:[%s283 + $0x2c] sm:$0xf]
      %v412 = vld [vmem:[%s283 + $0x30] sm:$0xf]
      %v413 = vld [vmem:[%s283 + $0x34] sm:$0xf]
      %v414 = vld [vmem:[%s283 + $0x38] sm:$0xf]
      %v415 = vld [vmem:[%s283 + $0x3c] sm:$0xf]
      %v448 = vunpack.c.l.b16 %v368
      %v449 = vunpack.c.l.b16 %v369
      %v450 = vunpack.c.l.b16 %v370
      %v451 = vunpack.c.l.b16 %v371
      %v452 = vunpack.c.l.b16 %v372
      %v453 = vunpack.c.l.b16 %v373
      %v454 = vunpack.c.l.b16 %v374
      %v455 = vunpack.c.l.b16 %v375
      %v456 = vunpack.c.l.b16 %v376
      %v457 = vunpack.c.l.b16 %v377
      %v458 = vunpack.c.l.b16 %v378
      %v459 = vunpack.c.l.b16 %v379
      %v460 = vunpack.c.l.b16 %v380
      %v461 = vunpack.c.l.b16 %v381
      %v462 = vunpack.c.l.b16 %v382
      %v463 = vunpack.c.l.b16 %v383
      %v464 = vunpack.c.l.b16 %v384
      %v465 = vunpack.c.l.b16 %v385
      %v466 = vunpack.c.l.b16 %v386
      %v467 = vunpack.c.l.b16 %v387
      %v468 = vunpack.c.l.b16 %v388
      %v469 = vunpack.c.l.b16 %v389
      %v470 = vunpack.c.l.b16 %v390
      %v471 = vunpack.c.l.b16 %v391
      %v472 = vunpack.c.l.b16 %v392
      %v473 = vunpack.c.l.b16 %v393
      %v474 = vunpack.c.l.b16 %v394
      %v475 = vunpack.c.l.b16 %v395
      %v476 = vunpack.c.l.b16 %v396
      %v477 = vunpack.c.l.b16 %v397
      %v478 = vunpack.c.l.b16 %v398
      %v479 = vunpack.c.l.b16 %v399
      %v480 = vpack.c.b16 %v449, %v448
      %v481 = vpack.c.b16 %v451, %v450
      %v482 = vpack.c.b16 %v453, %v452
      %v483 = vpack.c.b16 %v455, %v454
      %v484 = vpack.c.b16 %v457, %v456
      %v485 = vpack.c.b16 %v459, %v458
      %v486 = vpack.c.b16 %v461, %v460
      %v487 = vpack.c.b16 %v463, %v462
      %v488 = vpack.c.b16 %v465, %v464
      %v489 = vpack.c.b16 %v467, %v466
      %v490 = vpack.c.b16 %v469, %v468
      %v491 = vpack.c.b16 %v471, %v470
      %v492 = vpack.c.b16 %v473, %v472
      %v493 = vpack.c.b16 %v475, %v474
      %v494 = vpack.c.b16 %v477, %v476
      %v495 = vpack.c.b16 %v479, %v478
      %v528 = vunpack.c.l.b16 %v400
      %v529 = vunpack.c.l.b16 %v401
      %v530 = vunpack.c.l.b16 %v402
      %v531 = vunpack.c.l.b16 %v403
      %v532 = vunpack.c.l.b16 %v404
      %v533 = vunpack.c.l.b16 %v405
      %v534 = vunpack.c.l.b16 %v406
      %v535 = vunpack.c.l.b16 %v407
      %v536 = vunpack.c.l.b16 %v408
      %v537 = vunpack.c.l.b16 %v409
      %v538 = vunpack.c.l.b16 %v410
      %v539 = vunpack.c.l.b16 %v411
      %v540 = vunpack.c.l.b16 %v412
      %v541 = vunpack.c.l.b16 %v413
      %v542 = vunpack.c.l.b16 %v414
      %v543 = vunpack.c.l.b16 %v415
      %v544 = vpack.c.b16 %v529, %v528
      %v545 = vpack.c.b16 %v531, %v530
      %v546 = vpack.c.b16 %v533, %v532
      %v547 = vpack.c.b16 %v535, %v534
      %v548 = vpack.c.b16 %v537, %v536
      %v549 = vpack.c.b16 %v539, %v538
      %v550 = vpack.c.b16 %v541, %v540
      %v551 = vpack.c.b16 %v543, %v542
      %560 = vmatpush.bf16.msra.mxu0 %v551
      %561 = vmatpush.bf16.msra.mxu0 %v550
      %562 = vmatpush.bf16.msra.mxu0 %v549
      %563 = vmatpush.bf16.msra.mxu0 %v548
      %564 = vmatpush.bf16.msra.mxu0 %v547
      %565 = vmatpush.bf16.msra.mxu0 %v546
      %566 = vmatpush.bf16.msra.mxu0 %v545
      %567 = vmatpush.bf16.msra.mxu0 %v544
      %568 = vmatmul.bf16.gmra.mxu0 %v480
      %v569 = vpop.f32.mrf.mxu0
      %v570 = vadd.f32 0.0, %v569
      %v571 = vpop.f32.mrf.mxu0
      %v572 = vadd.f32 0.0, %v571
      %573 = vmatmul.bf16.gmra.mxu0 %v481
      %v574 = vpop.f32.mrf.mxu0
      %v575 = vadd.f32 0.0, %v574
      %v576 = vpop.f32.mrf.mxu0
      %v577 = vadd.f32 0.0, %v576
      %578 = vmatmul.bf16.gmra.mxu0 %v482
      %v579 = vpop.f32.mrf.mxu0
      %v580 = vadd.f32 0.0, %v579
      %v581 = vpop.f32.mrf.mxu0
      %v582 = vadd.f32 0.0, %v581
      %583 = vmatmul.bf16.gmra.mxu0 %v483
      %v584 = vpop.f32.mrf.mxu0
      %v585 = vadd.f32 0.0, %v584
      %v586 = vpop.f32.mrf.mxu0
      %v587 = vadd.f32 0.0, %v586
      %588 = vmatmul.bf16.gmra.mxu0 %v484
      %v589 = vpop.f32.mrf.mxu0
      %v590 = vadd.f32 0.0, %v589
      %v591 = vpop.f32.mrf.mxu0
      %v592 = vadd.f32 0.0, %v591
      %593 = vmatmul.bf16.gmra.mxu0 %v485
      %v594 = vpop.f32.mrf.mxu0
      %v595 = vadd.f32 0.0, %v594
      %v596 = vpop.f32.mrf.mxu0
      %v597 = vadd.f32 0.0, %v596
      %598 = vmatmul.bf16.gmra.mxu0 %v486
      %v599 = vpop.f32.mrf.mxu0
      %v600 = vadd.f32 0.0, %v599
      %v601 = vpop.f32.mrf.mxu0
      %v602 = vadd.f32 0.0, %v601
      %603 = vmatmul.bf16.gmra.mxu0 %v487
      %v604 = vpop.f32.mrf.mxu0
      %v605 = vadd.f32 0.0, %v604
      %v606 = vpop.f32.mrf.mxu0
      %v607 = vadd.f32 0.0, %v606
      %608 = vmatmul.bf16.gmra.mxu0 %v488
      %v609 = vpop.f32.mrf.mxu0
      %v610 = vadd.f32 0.0, %v609
      %v611 = vpop.f32.mrf.mxu0
      %v612 = vadd.f32 0.0, %v611
      %613 = vmatmul.bf16.gmra.mxu0 %v489
      %v614 = vpop.f32.mrf.mxu0
      %v615 = vadd.f32 0.0, %v614
      %v616 = vpop.f32.mrf.mxu0
      %v617 = vadd.f32 0.0, %v616
      %618 = vmatmul.bf16.gmra.mxu0 %v490
      %v619 = vpop.f32.mrf.mxu0
      %v620 = vadd.f32 0.0, %v619
      %v621 = vpop.f32.mrf.mxu0
      %v622 = vadd.f32 0.0, %v621
      %623 = vmatmul.bf16.gmra.mxu0 %v491
      %v624 = vpop.f32.mrf.mxu0
      %v625 = vadd.f32 0.0, %v624
      %v626 = vpop.f32.mrf.mxu0
      %v627 = vadd.f32 0.0, %v626
      %628 = vmatmul.bf16.gmra.mxu0 %v492
      %v629 = vpop.f32.mrf.mxu0
      %v630 = vadd.f32 0.0, %v629
      %v631 = vpop.f32.mrf.mxu0
      %v632 = vadd.f32 0.0, %v631
      %633 = vmatmul.bf16.gmra.mxu0 %v493
      %v634 = vpop.f32.mrf.mxu0
      %v635 = vadd.f32 0.0, %v634
      %v636 = vpop.f32.mrf.mxu0
      %v637 = vadd.f32 0.0, %v636
      %638 = vmatmul.bf16.gmra.mxu0 %v494
      %v639 = vpop.f32.mrf.mxu0
      %v640 = vadd.f32 0.0, %v639
      %v641 = vpop.f32.mrf.mxu0
      %v642 = vadd.f32 0.0, %v641
      %643 = vmatmul.bf16.gmra.mxu0 %v495
      %v644 = vpop.f32.mrf.mxu0
      %v645 = vadd.f32 0.0, %v644
      %v646 = vpop.f32.mrf.mxu0
      %v647 = vadd.f32 0.0, %v646
      %648 = vdwg.mxu0
      %v649 = vadd.f32 %v336, %v570
      %v650 = vadd.f32 %v337, %v572
      %v651 = vadd.f32 %v338, %v575
      %v652 = vadd.f32 %v339, %v577
      %v653 = vadd.f32 %v340, %v580
      %v654 = vadd.f32 %v341, %v582
      %v655 = vadd.f32 %v342, %v585
      %v656 = vadd.f32 %v343, %v587
      %v657 = vadd.f32 %v344, %v590
      %v658 = vadd.f32 %v345, %v592
      %v659 = vadd.f32 %v346, %v595
      %v660 = vadd.f32 %v347, %v597
      %v661 = vadd.f32 %v348, %v600
      %v662 = vadd.f32 %v349, %v602
      %v663 = vadd.f32 %v350, %v605
      %v664 = vadd.f32 %v351, %v607
      %v665 = vadd.f32 %v352, %v610
      %v666 = vadd.f32 %v353, %v612
      %v667 = vadd.f32 %v354, %v615
      %v668 = vadd.f32 %v355, %v617
      %v669 = vadd.f32 %v356, %v620
      %v670 = vadd.f32 %v357, %v622
      %v671 = vadd.f32 %v358, %v625
      %v672 = vadd.f32 %v359, %v627
      %v673 = vadd.f32 %v360, %v630
      %v674 = vadd.f32 %v361, %v632
      %v675 = vadd.f32 %v362, %v635
      %v676 = vadd.f32 %v363, %v637
      %v677 = vadd.f32 %v364, %v640
      %v678 = vadd.f32 %v365, %v642
      %v679 = vadd.f32 %v366, %v645
      %v680 = vadd.f32 %v367, %v647
      %681 = vst [vmem:[#allocation2] sm:$0xff] %v649
      %682 = vst [vmem:[#allocation2 + $0x8] sm:$0xff] %v650
      %683 = vst [vmem:[#allocation2 + $0x10] sm:$0xff] %v651
      %684 = vst [vmem:[#allocation2 + $0x18] sm:$0xff] %v652
      %685 = vst [vmem:[#allocation2 + $0x20] sm:$0xff] %v653
      %686 = vst [vmem:[#allocation2 + $0x28] sm:$0xff] %v654
      %687 = vst [vmem:[#allocation2 + $0x30] sm:$0xff] %v655
      %688 = vst [vmem:[#allocation2 + $0x38] sm:$0xff] %v656
      %689 = vst [vmem:[#allocation2 + $0x40] sm:$0xff] %v657
      %690 = vst [vmem:[#allocation2 + $0x48] sm:$0xff] %v658
      %691 = vst [vmem:[#allocation2 + $0x50] sm:$0xff] %v659
      %692 = vst [vmem:[#allocation2 + $0x58] sm:$0xff] %v660
      %693 = vst [vmem:[#allocation2 + $0x60] sm:$0xff] %v661
      %694 = vst [vmem:[#allocation2 + $0x68] sm:$0xff] %v662
      %695 = vst [vmem:[#allocation2 + $0x70] sm:$0xff] %v663
      %696 = vst [vmem:[#allocation2 + $0x78] sm:$0xff] %v664
      %697 = vst [vmem:[#allocation2 + $0x80] sm:$0xff] %v665
      %698 = vst [vmem:[#allocation2 + $0x88] sm:$0xff] %v666
      %699 = vst [vmem:[#allocation2 + $0x90] sm:$0xff] %v667
      %700 = vst [vmem:[#allocation2 + $0x98] sm:$0xff] %v668
      %701 = vst [vmem:[#allocation2 + $0xa0] sm:$0xff] %v669
      %702 = vst [vmem:[#allocation2 + $0xa8] sm:$0xff] %v670
      %703 = vst [vmem:[#allocation2 + $0xb0] sm:$0xff] %v671
      %704 = vst [vmem:[#allocation2 + $0xb8] sm:$0xff] %v672
      %705 = vst [vmem:[#allocation2 + $0xc0] sm:$0xff] %v673
      %706 = vst [vmem:[#allocation2 + $0xc8] sm:$0xff] %v674
      %707 = vst [vmem:[#allocation2 + $0xd0] sm:$0xff] %v675
      %708 = vst [vmem:[#allocation2 + $0xd8] sm:$0xff] %v676
      %709 = vst [vmem:[#allocation2 + $0xe0] sm:$0xff] %v677
      %710 = vst [vmem:[#allocation2 + $0xe8] sm:$0xff] %v678
      %711 = vst [vmem:[#allocation2 + $0xf0] sm:$0xff] %v679
      %712 = vst [vmem:[#allocation2 + $0xf8] sm:$0xff] %v680
      // Predicated region
      $region41: #{vgg_cifar100_forward.7} parent=35 // pred_check
        %p713 = pneg %p300
      $region42: #{vgg_cifar100_forward.7} parent=35 // pred_check_branch
        %715 = sbr.rel (%p713) target = $region44
      $region43: #{vgg_cifar100_forward.7} parent=35 // pred_region
        %v716 = vld [vmem:[#allocation2] sm:$0xff]
        %v717 = vld [vmem:[#allocation2 + $0x8] sm:$0xff]
        %v718 = vld [vmem:[#allocation2 + $0x10] sm:$0xff]
        %v719 = vld [vmem:[#allocation2 + $0x18] sm:$0xff]
        %v720 = vld [vmem:[#allocation2 + $0x20] sm:$0xff]
        %v721 = vld [vmem:[#allocation2 + $0x28] sm:$0xff]
        %v722 = vld [vmem:[#allocation2 + $0x30] sm:$0xff]
        %v723 = vld [vmem:[#allocation2 + $0x38] sm:$0xff]
        %v724 = vld [vmem:[#allocation2 + $0x40] sm:$0xff]
        %v725 = vld [vmem:[#allocation2 + $0x48] sm:$0xff]
        %v726 = vld [vmem:[#allocation2 + $0x50] sm:$0xff]
        %v727 = vld [vmem:[#allocation2 + $0x58] sm:$0xff]
        %v728 = vld [vmem:[#allocation2 + $0x60] sm:$0xff]
        %v729 = vld [vmem:[#allocation2 + $0x68] sm:$0xff]
        %v730 = vld [vmem:[#allocation2 + $0x70] sm:$0xff]
        %v731 = vld [vmem:[#allocation2 + $0x78] sm:$0xff]
        %v732 = vld [vmem:[#allocation2 + $0x80] sm:$0xff]
        %v733 = vld [vmem:[#allocation2 + $0x88] sm:$0xff]
        %v734 = vld [vmem:[#allocation2 + $0x90] sm:$0xff]
        %v735 = vld [vmem:[#allocation2 + $0x98] sm:$0xff]
        %v736 = vld [vmem:[#allocation2 + $0xa0] sm:$0xff]
        %v737 = vld [vmem:[#allocation2 + $0xa8] sm:$0xff]
        %v738 = vld [vmem:[#allocation2 + $0xb0] sm:$0xff]
        %v739 = vld [vmem:[#allocation2 + $0xb8] sm:$0xff]
        %v740 = vld [vmem:[#allocation2 + $0xc0] sm:$0xff]
        %v741 = vld [vmem:[#allocation2 + $0xc8] sm:$0xff]
        %v742 = vld [vmem:[#allocation2 + $0xd0] sm:$0xff]
        %v743 = vld [vmem:[#allocation2 + $0xd8] sm:$0xff]
        %v744 = vld [vmem:[#allocation2 + $0xe0] sm:$0xff]
        %v745 = vld [vmem:[#allocation2 + $0xe8] sm:$0xff]
        %v746 = vld [vmem:[#allocation2 + $0xf0] sm:$0xff]
        %v747 = vld [vmem:[#allocation2 + $0xf8] sm:$0xff]
        %v748 = vld [vmem:[%s287] sm:$0x1]
        %v750 = vperm.slane %v748, 0
        %v752 = vmul.f32 %v716, %v750
        %v753 = vmul.f32 %v717, %v750
        %v754 = vmul.f32 %v718, %v750
        %v755 = vmul.f32 %v719, %v750
        %v756 = vmul.f32 %v720, %v750
        %v757 = vmul.f32 %v721, %v750
        %v758 = vmul.f32 %v722, %v750
        %v759 = vmul.f32 %v723, %v750
        %v760 = vmul.f32 %v724, %v750
        %v761 = vmul.f32 %v725, %v750
        %v762 = vmul.f32 %v726, %v750
        %v763 = vmul.f32 %v727, %v750
        %v764 = vmul.f32 %v728, %v750
        %v765 = vmul.f32 %v729, %v750
        %v766 = vmul.f32 %v730, %v750
        %v767 = vmul.f32 %v731, %v750
        %v768 = vmul.f32 %v732, %v750
        %v769 = vmul.f32 %v733, %v750
        %v770 = vmul.f32 %v734, %v750
        %v771 = vmul.f32 %v735, %v750
        %v772 = vmul.f32 %v736, %v750
        %v773 = vmul.f32 %v737, %v750
        %v774 = vmul.f32 %v738, %v750
        %v775 = vmul.f32 %v739, %v750
        %v776 = vmul.f32 %v740, %v750
        %v777 = vmul.f32 %v741, %v750
        %v778 = vmul.f32 %v742, %v750
        %v779 = vmul.f32 %v743, %v750
        %v780 = vmul.f32 %v744, %v750
        %v781 = vmul.f32 %v745, %v750
        %v782 = vmul.f32 %v746, %v750
        %v783 = vmul.f32 %v747, %v750
        %v784 = vld [vmem:[%s290] sm:$0x1]
        %v786 = vperm.slane %v784, 0
        %v788 = vadd.f32 %v752, %v786
        %v789 = vadd.f32 %v753, %v786
        %v790 = vadd.f32 %v754, %v786
        %v791 = vadd.f32 %v755, %v786
        %v792 = vadd.f32 %v756, %v786
        %v793 = vadd.f32 %v757, %v786
        %v794 = vadd.f32 %v758, %v786
        %v795 = vadd.f32 %v759, %v786
        %v796 = vadd.f32 %v760, %v786
        %v797 = vadd.f32 %v761, %v786
        %v798 = vadd.f32 %v762, %v786
        %v799 = vadd.f32 %v763, %v786
        %v800 = vadd.f32 %v764, %v786
        %v801 = vadd.f32 %v765, %v786
        %v802 = vadd.f32 %v766, %v786
        %v803 = vadd.f32 %v767, %v786
        %v804 = vadd.f32 %v768, %v786
        %v805 = vadd.f32 %v769, %v786
        %v806 = vadd.f32 %v770, %v786
        %v807 = vadd.f32 %v771, %v786
        %v808 = vadd.f32 %v772, %v786
        %v809 = vadd.f32 %v773, %v786
        %v810 = vadd.f32 %v774, %v786
        %v811 = vadd.f32 %v775, %v786
        %v812 = vadd.f32 %v776, %v786
        %v813 = vadd.f32 %v777, %v786
        %v814 = vadd.f32 %v778, %v786
        %v815 = vadd.f32 %v779, %v786
        %v816 = vadd.f32 %v780, %v786
        %v817 = vadd.f32 %v781, %v786
        %v818 = vadd.f32 %v782, %v786
        %v819 = vadd.f32 %v783, %v786
        %v820 = vmax.f32 %v788, 0.0
        %v821 = vmax.f32 %v789, 0.0
        %v822 = vmax.f32 %v790, 0.0
        %v823 = vmax.f32 %v791, 0.0
        %v824 = vmax.f32 %v792, 0.0
        %v825 = vmax.f32 %v793, 0.0
        %v826 = vmax.f32 %v794, 0.0
        %v827 = vmax.f32 %v795, 0.0
        %v828 = vmax.f32 %v796, 0.0
        %v829 = vmax.f32 %v797, 0.0
        %v830 = vmax.f32 %v798, 0.0
        %v831 = vmax.f32 %v799, 0.0
        %v832 = vmax.f32 %v800, 0.0
        %v833 = vmax.f32 %v801, 0.0
        %v834 = vmax.f32 %v802, 0.0
        %v835 = vmax.f32 %v803, 0.0
        %v836 = vmax.f32 %v804, 0.0
        %v837 = vmax.f32 %v805, 0.0
        %v838 = vmax.f32 %v806, 0.0
        %v839 = vmax.f32 %v807, 0.0
        %v840 = vmax.f32 %v808, 0.0
        %v841 = vmax.f32 %v809, 0.0
        %v842 = vmax.f32 %v810, 0.0
        %v843 = vmax.f32 %v811, 0.0
        %v844 = vmax.f32 %v812, 0.0
        %v845 = vmax.f32 %v813, 0.0
        %v846 = vmax.f32 %v814, 0.0
        %v847 = vmax.f32 %v815, 0.0
        %v848 = vmax.f32 %v816, 0.0
        %v849 = vmax.f32 %v817, 0.0
        %v850 = vmax.f32 %v818, 0.0
        %v851 = vmax.f32 %v819, 0.0
        %v852 = vpack.c.bf16 %v820, %v820
        %v853 = vpack.c.bf16 %v821, %v821
        %v854 = vpack.c.bf16 %v822, %v822
        %v855 = vpack.c.bf16 %v823, %v823
        %v856 = vpack.c.bf16 %v824, %v824
        %v857 = vpack.c.bf16 %v825, %v825
        %v858 = vpack.c.bf16 %v826, %v826
        %v859 = vpack.c.bf16 %v827, %v827
        %v860 = vpack.c.bf16 %v828, %v828
        %v861 = vpack.c.bf16 %v829, %v829
        %v862 = vpack.c.bf16 %v830, %v830
        %v863 = vpack.c.bf16 %v831, %v831
        %v864 = vpack.c.bf16 %v832, %v832
        %v865 = vpack.c.bf16 %v833, %v833
        %v866 = vpack.c.bf16 %v834, %v834
        %v867 = vpack.c.bf16 %v835, %v835
        %v868 = vpack.c.bf16 %v836, %v836
        %v869 = vpack.c.bf16 %v837, %v837
        %v870 = vpack.c.bf16 %v838, %v838
        %v871 = vpack.c.bf16 %v839, %v839
        %v872 = vpack.c.bf16 %v840, %v840
        %v873 = vpack.c.bf16 %v841, %v841
        %v874 = vpack.c.bf16 %v842, %v842
        %v875 = vpack.c.bf16 %v843, %v843
        %v876 = vpack.c.bf16 %v844, %v844
        %v877 = vpack.c.bf16 %v845, %v845
        %v878 = vpack.c.bf16 %v846, %v846
        %v879 = vpack.c.bf16 %v847, %v847
        %v880 = vpack.c.bf16 %v848, %v848
        %v881 = vpack.c.bf16 %v849, %v849
        %v882 = vpack.c.bf16 %v850, %v850
        %v883 = vpack.c.bf16 %v851, %v851
        %884 = vst [vmem:[%s298] sm:$0xf] %v852
        %885 = vst [vmem:[%s298 + $0x4] sm:$0xf] %v853
        %886 = vst [vmem:[%s298 + $0x8] sm:$0xf] %v854
        %887 = vst [vmem:[%s298 + $0xc] sm:$0xf] %v855
        %888 = vst [vmem:[%s298 + $0x10] sm:$0xf] %v856
        %889 = vst [vmem:[%s298 + $0x14] sm:$0xf] %v857
        %890 = vst [vmem:[%s298 + $0x18] sm:$0xf] %v858
        %891 = vst [vmem:[%s298 + $0x1c] sm:$0xf] %v859
        %892 = vst [vmem:[%s298 + $0x20] sm:$0xf] %v860
        %893 = vst [vmem:[%s298 + $0x24] sm:$0xf] %v861
        %894 = vst [vmem:[%s298 + $0x28] sm:$0xf] %v862
        %895 = vst [vmem:[%s298 + $0x2c] sm:$0xf] %v863
        %896 = vst [vmem:[%s298 + $0x30] sm:$0xf] %v864
        %897 = vst [vmem:[%s298 + $0x34] sm:$0xf] %v865
        %898 = vst [vmem:[%s298 + $0x38] sm:$0xf] %v866
        %899 = vst [vmem:[%s298 + $0x3c] sm:$0xf] %v867
        %900 = vst [vmem:[%s298 + $0x40] sm:$0xf] %v868
        %901 = vst [vmem:[%s298 + $0x44] sm:$0xf] %v869
        %902 = vst [vmem:[%s298 + $0x48] sm:$0xf] %v870
        %903 = vst [vmem:[%s298 + $0x4c] sm:$0xf] %v871
        %904 = vst [vmem:[%s298 + $0x50] sm:$0xf] %v872
        %905 = vst [vmem:[%s298 + $0x54] sm:$0xf] %v873
        %906 = vst [vmem:[%s298 + $0x58] sm:$0xf] %v874
        %907 = vst [vmem:[%s298 + $0x5c] sm:$0xf] %v875
        %908 = vst [vmem:[%s298 + $0x60] sm:$0xf] %v876
        %909 = vst [vmem:[%s298 + $0x64] sm:$0xf] %v877
        %910 = vst [vmem:[%s298 + $0x68] sm:$0xf] %v878
        %911 = vst [vmem:[%s298 + $0x6c] sm:$0xf] %v879
        %912 = vst [vmem:[%s298 + $0x70] sm:$0xf] %v880
        %913 = vst [vmem:[%s298 + $0x74] sm:$0xf] %v881
        %914 = vst [vmem:[%s298 + $0x78] sm:$0xf] %v882
        %915 = vst [vmem:[%s298 + $0x7c] sm:$0xf] %v883
      $region44: #{vgg_cifar100_forward.7} parent=35 // pred_fallthru
        _
      %s916 = smul.u32 32, %s20
      %p917 = scmp.lt.s32.totalorder %s916, 63
      %s918 = scalar_select %p917, %s916, 63
      %p919 = scmp.lt.s32.totalorder %s21, 0
      %s920 = scalar_select %p919, %s21, 0
      %s921 = sadd.s32 %s920, %s918
      %s922 = smul.addr %s921, 4
      %s923 = scalar_lea.vmem %s4, %s922
      // Predicated region
      $region45: #{vgg_cifar100_forward.7} parent=35 // pred_check
        %p924 = pneg %p162
      $region46: #{vgg_cifar100_forward.7} parent=35 // pred_check_branch
        %926 = sbr.rel (%p924) target = $region48
      $region47: #{vgg_cifar100_forward.7} parent=35 // pred_region
        %s927 = smul.u32 32, %s20
      $region48: #{vgg_cifar100_forward.7} parent=35 // pred_fallthru
        _
    $region36: #{vgg_cifar100_forward.7} parent=5 // pred_fallthru
      _
    %p928 = scmp.le.s32.totalorder 2, %s10
    // Predicated region
    $region49: #{vgg_cifar100_forward.7} parent=5 // pred_check
      %p929 = pneg %p928
    $region50: #{vgg_cifar100_forward.7} parent=5 // pred_check_branch
      %931 = sbr.rel (%p929) target = $region52
    $region51: #{vgg_cifar100_forward.7} parent=5 // pred_region
      %s932 = ssub.s32 %s10, 2
      // Predicated region
      $region53: #{vgg_cifar100_forward.7} parent=51 // pred_check
        %p933 = pneg %p168
      $region54: #{vgg_cifar100_forward.7} parent=51 // pred_check_branch
        %935 = sbr.rel (%p933) target = $region56
      $region55: #{vgg_cifar100_forward.7} parent=51 // pred_region
        %s936 = smul.u32 32, %s23
        %p937 = scmp.lt.s32.totalorder %s936, 63
        %s938 = scalar_select %p937, %s936, 63
        %p939 = scmp.lt.s32.totalorder %s24, 0
        %s940 = scalar_select %p939, %s24, 0
        %s941 = sadd.s32 %s940, %s938
        %s942 = smul.addr %s941, 4
        %s943 = scalar_lea.vmem %s4, %s942
      $region56: #{vgg_cifar100_forward.7} parent=51 // pred_fallthru
        _
    $region52: #{vgg_cifar100_forward.7} parent=5 // pred_fallthru
      _
  $region6: #{vgg_cifar100_forward.7} parent=0 // loop_footer
    %s14 = sadd.s32 1, %s10
  $region7: #{vgg_cifar100_forward.7} parent=0 // loop_footer_branch
    %9 = sbr.rel target = $region3
  $region8: #{vgg_cifar100_forward.7} parent=0 // loop_exit
    _

// kernel: vgg_cifar100_forward.10
$region0: #{vgg_cifar100_forward.10}
  #allocation0 [shape = 'u32[]', space=smem, size = 0x4, offset = 0x4, fixed_abs, tag = 'smem constant byte address 0x4 - core index']
  #allocation1 [shape = 'u32[72,128]{1,0:T(1,128)}', space=vmem, size = 0x9000, scoped, tag = 'internal scratch']
  %s0 = inlined_call_operand.vmem [shape: bf16[8,2,4,128], index: 0, kind: input, shape index: {}]
  %s1 = inlined_call_operand.vmem [shape: bf16[8,4,64], index: 1, kind: output, shape index: {}]
  %s2 = sld [smem:[#allocation0]]
  $region14: #{vgg_cifar100_forward.10} parent=0
    _
  %s4 = ssub.s32 1, %s2
  %s5 = scalar_select 0, %s4, %s2
  // Predicated region
  $region2: #{vgg_cifar100_forward.10} parent=0 // pred_check
    _
  $region3: #{vgg_cifar100_forward.10} parent=0 // pred_check_branch
    %7 = sbr.rel (0) target = $region5
  $region4: #{vgg_cifar100_forward.10} parent=0 // pred_region
    _
  $region5: #{vgg_cifar100_forward.10} parent=0 // pred_fallthru
    _
  %v8 = vld [vmem:[%s0] sm:$0x3]
  %v9 = vld [vmem:[%s0 + $0x2] sm:$0x3]
  %v10 = vld [vmem:[%s0 + $0x4] sm:$0x3]
  %v11 = vld [vmem:[%s0 + $0x6] sm:$0x3]
  %v12 = vld [vmem:[%s0 + $0x8] sm:$0x3]
  %v13 = vld [vmem:[%s0 + $0xa] sm:$0x3]
  %v14 = vld [vmem:[%s0 + $0xc] sm:$0x3]
  %v15 = vld [vmem:[%s0 + $0xe] sm:$0x3]
  %v16 = vld [vmem:[%s0 + $0x10] sm:$0x3]
  %v17 = vld [vmem:[%s0 + $0x12] sm:$0x3]
  %v18 = vld [vmem:[%s0 + $0x14] sm:$0x3]
  %v19 = vld [vmem:[%s0 + $0x16] sm:$0x3]
  %v20 = vld [vmem:[%s0 + $0x18] sm:$0x3]
  %v21 = vld [vmem:[%s0 + $0x1a] sm:$0x3]
  %v22 = vld [vmem:[%s0 + $0x1c] sm:$0x3]
  %v23 = vld [vmem:[%s0 + $0x1e] sm:$0x3]
  %v24 = vunpack.c.l.bf16 %v8
  %v25 = vunpack.c.l.bf16 %v10
  %v26 = vunpack.c.l.bf16 %v12
  %v27 = vunpack.c.l.bf16 %v14
  %v28 = vunpack.c.l.bf16 %v16
  %v29 = vunpack.c.l.bf16 %v18
  %v30 = vunpack.c.l.bf16 %v20
  %v31 = vunpack.c.l.bf16 %v22
  %v32 = vunpack.c.l.bf16 %v9
  %v33 = vunpack.c.l.bf16 %v11
  %v34 = vunpack.c.l.bf16 %v13
  %v35 = vunpack.c.l.bf16 %v15
  %v36 = vunpack.c.l.bf16 %v17
  %v37 = vunpack.c.l.bf16 %v19
  %v38 = vunpack.c.l.bf16 %v21
  %v39 = vunpack.c.l.bf16 %v23
  %v40 = vmax.f32 %v24, %v32
  %v41 = vmax.f32 %v25, %v33
  %v42 = vmax.f32 %v26, %v34
  %v43 = vmax.f32 %v27, %v35
  %v44 = vmax.f32 %v28, %v36
  %v45 = vmax.f32 %v29, %v37
  %v46 = vmax.f32 %v30, %v38
  %v47 = vmax.f32 %v31, %v39
  %v48 = vpack.c.bf16 %v40, %v40
  %v49 = vpack.c.bf16 %v41, %v41
  %v50 = vpack.c.bf16 %v42, %v42
  %v51 = vpack.c.bf16 %v43, %v43
  %v52 = vpack.c.bf16 %v44, %v44
  %v53 = vpack.c.bf16 %v45, %v45
  %v54 = vpack.c.bf16 %v46, %v46
  %v55 = vpack.c.bf16 %v47, %v47
  %v56 = vunpack.c.l.bf16 %v48
  %v57 = vunpack.c.l.bf16 %v49
  %v58 = vunpack.c.l.bf16 %v50
  %v59 = vunpack.c.l.bf16 %v51
  %v60 = vunpack.c.l.bf16 %v52
  %v61 = vunpack.c.l.bf16 %v53
  %v62 = vunpack.c.l.bf16 %v54
  %v63 = vunpack.c.l.bf16 %v55
  %72 = vrot.lane.b32.xlu0 %v56, 64
  %v73 = vpop.permute.xlu0 %72
  %74 = vrot.lane.b32.xlu0 %v57, 64
  %v75 = vpop.permute.xlu0 %74
  %76 = vrot.lane.b32.xlu0 %v58, 64
  %v77 = vpop.permute.xlu0 %76
  %78 = vrot.lane.b32.xlu0 %v59, 64
  %v79 = vpop.permute.xlu0 %78
  %80 = vrot.lane.b32.xlu0 %v60, 64
  %v81 = vpop.permute.xlu0 %80
  %82 = vrot.lane.b32.xlu0 %v61, 64
  %v83 = vpop.permute.xlu0 %82
  %84 = vrot.lane.b32.xlu0 %v62, 64
  %v85 = vpop.permute.xlu0 %84
  %86 = vrot.lane.b32.xlu0 %v63, 64
  %v87 = vpop.permute.xlu0 %86
  %v96 = vmax.f32 %v56, %v73
  %v97 = vmax.f32 %v57, %v75
  %v98 = vmax.f32 %v58, %v77
  %v99 = vmax.f32 %v59, %v79
  %v100 = vmax.f32 %v60, %v81
  %v101 = vmax.f32 %v61, %v83
  %v102 = vmax.f32 %v62, %v85
  %v103 = vmax.f32 %v63, %v87
  %v104 = vpack.c.bf16 %v96, %v96
  %v105 = vpack.c.bf16 %v97, %v97
  %v106 = vpack.c.bf16 %v98, %v98
  %v107 = vpack.c.bf16 %v99, %v99
  %v108 = vpack.c.bf16 %v100, %v100
  %v109 = vpack.c.bf16 %v101, %v101
  %v110 = vpack.c.bf16 %v102, %v102
  %v111 = vpack.c.bf16 %v103, %v103
  %vm112 = vcmask 517120
  %113 = vst.msk [vmem:[%s1] sm:$0x3] %vm112, %v104
  %114 = vst.msk [vmem:[%s1 + $0x2] sm:$0x3] %vm112, %v105
  %115 = vst.msk [vmem:[%s1 + $0x4] sm:$0x3] %vm112, %v106
  %116 = vst.msk [vmem:[%s1 + $0x6] sm:$0x3] %vm112, %v107
  %117 = vst.msk [vmem:[%s1 + $0x8] sm:$0x3] %vm112, %v108
  %118 = vst.msk [vmem:[%s1 + $0xa] sm:$0x3] %vm112, %v109
  %119 = vst.msk [vmem:[%s1 + $0xc] sm:$0x3] %vm112, %v110
  %120 = vst.msk [vmem:[%s1 + $0xe] sm:$0x3] %vm112, %v111
  // Predicated region
  $region6: #{vgg_cifar100_forward.10} parent=0 // pred_check
    _
  $region7: #{vgg_cifar100_forward.10} parent=0 // pred_check_branch
    %122 = sbr.rel (0) target = $region9
  $region8: #{vgg_cifar100_forward.10} parent=0 // pred_region
    _
  $region9: #{vgg_cifar100_forward.10} parent=0 // pred_fallthru
    _
  // Predicated region
  $region10: #{vgg_cifar100_forward.10} parent=0 // pred_check
    _
  $region11: #{vgg_cifar100_forward.10} parent=0 // pred_check_branch
    %124 = sbr.rel (0) target = $region13
  $region12: #{vgg_cifar100_forward.10} parent=0 // pred_region
    _
  $region13: #{vgg_cifar100_forward.10} parent=0 // pred_fallthru
    _

// kernel: vgg_cifar100_forward.9
$region0: #{vgg_cifar100_forward.9}
  #allocation0 [shape = 'u32[]', space=smem, size = 0x4, offset = 0x4, fixed_abs, tag = 'smem constant byte address 0x4 - core index']
  #allocation1 [shape = 'u32[72,128]{1,0:T(1,128)}', space=vmem, size = 0x9000, scoped, tag = 'internal scratch']
  #allocation2 [shape = 'f32[128,128]{1,0:T(8,128)}', space=vmem, size = 0x10000, scoped, tag = 'scratch operand']
  %s0 = inlined_call_operand.vmem [shape: bf16[128,384], index: 0, kind: input, shape index: {}]
  %s1 = inlined_call_operand.vmem [shape: bf16[384,128], index: 1, kind: input, shape index: {}]
  %s2 = inlined_call_operand.vmem [shape: f32[1,128], index: 2, kind: input, shape index: {}]
  %s3 = inlined_call_operand.vmem [shape: f32[1,128], index: 3, kind: input, shape index: {}]
  %s4 = inlined_call_operand.vmem [shape: bf16[128,128], index: 4, kind: output, shape index: {}]
  %s5 = sld [smem:[#allocation0]]
  $region34: #{vgg_cifar100_forward.9} parent=0
    _
  %s7 = ssub.s32 1, %s5
  %s8 = scalar_select 0, %s7, %s5
  // Predicated region
  $region2: #{vgg_cifar100_forward.9} parent=0 // pred_check
    _
  $region3: #{vgg_cifar100_forward.9} parent=0 // pred_check_branch
    %10 = sbr.rel (0) target = $region5
  $region4: #{vgg_cifar100_forward.9} parent=0 // pred_region
    _
  $region5: #{vgg_cifar100_forward.9} parent=0 // pred_fallthru
    _
  // Predicated region
  $region6: #{vgg_cifar100_forward.9} parent=0 // pred_check
    _
  $region7: #{vgg_cifar100_forward.9} parent=0 // pred_check_branch
    %12 = sbr.rel (0) target = $region9
  $region8: #{vgg_cifar100_forward.9} parent=0 // pred_region
    _
  $region9: #{vgg_cifar100_forward.9} parent=0 // pred_fallthru
    _
  // Predicated region
  $region10: #{vgg_cifar100_forward.9} parent=0 // pred_check
    _
  $region11: #{vgg_cifar100_forward.9} parent=0 // pred_check_branch
    %14 = sbr.rel (0) target = $region13
  $region12: #{vgg_cifar100_forward.9} parent=0 // pred_region
    _
  $region13: #{vgg_cifar100_forward.9} parent=0 // pred_fallthru
    _
  // Predicated region
  $region14: #{vgg_cifar100_forward.9} parent=0 // pred_check
    _
  $region15: #{vgg_cifar100_forward.9} parent=0 // pred_check_branch
    %16 = sbr.rel (0) target = $region17
  $region16: #{vgg_cifar100_forward.9} parent=0 // pred_region
    _
  $region17: #{vgg_cifar100_forward.9} parent=0 // pred_fallthru
    _
  %p17 = scmp.eq.s32.totalorder 0, 0
  // Predicated region
  $region18: #{vgg_cifar100_forward.9} parent=0 // pred_check
    %p18 = pneg %p17
  $region19: #{vgg_cifar100_forward.9} parent=0 // pred_check_branch
    %20 = sbr.rel (%p18) target = $region21
  $region20: #{vgg_cifar100_forward.9} parent=0 // pred_region
    %21 = vst [vmem:[#allocation2] sm:$0xff] 0.0
    %22 = vst [vmem:[#allocation2 + $0x8] sm:$0xff] 0.0
    %23 = vst [vmem:[#allocation2 + $0x10] sm:$0xff] 0.0
    %24 = vst [vmem:[#allocation2 + $0x18] sm:$0xff] 0.0
    %25 = vst [vmem:[#allocation2 + $0x20] sm:$0xff] 0.0
    %26 = vst [vmem:[#allocation2 + $0x28] sm:$0xff] 0.0
    %27 = vst [vmem:[#allocation2 + $0x30] sm:$0xff] 0.0
    %28 = vst [vmem:[#allocation2 + $0x38] sm:$0xff] 0.0
    %29 = vst [vmem:[#allocation2 + $0x40] sm:$0xff] 0.0
    %30 = vst [vmem:[#allocation2 + $0x48] sm:$0xff] 0.0
    %31 = vst [vmem:[#allocation2 + $0x50] sm:$0xff] 0.0
    %32 = vst [vmem:[#allocation2 + $0x58] sm:$0xff] 0.0
    %33 = vst [vmem:[#allocation2 + $0x60] sm:$0xff] 0.0
    %34 = vst [vmem:[#allocation2 + $0x68] sm:$0xff] 0.0
    %35 = vst [vmem:[#allocation2 + $0x70] sm:$0xff] 0.0
    %36 = vst [vmem:[#allocation2 + $0x78] sm:$0xff] 0.0
  $region21: #{vgg_cifar100_forward.9} parent=0 // pred_fallthru
    _
  %v37 = vld [vmem:[#allocation2] sm:$0xff]
  %v38 = vld [vmem:[#allocation2 + $0x8] sm:$0xff]
  %v39 = vld [vmem:[#allocation2 + $0x10] sm:$0xff]
  %v40 = vld [vmem:[#allocation2 + $0x18] sm:$0xff]
  %v41 = vld [vmem:[#allocation2 + $0x20] sm:$0xff]
  %v42 = vld [vmem:[#allocation2 + $0x28] sm:$0xff]
  %v43 = vld [vmem:[#allocation2 + $0x30] sm:$0xff]
  %v44 = vld [vmem:[#allocation2 + $0x38] sm:$0xff]
  %v45 = vld [vmem:[#allocation2 + $0x40] sm:$0xff]
  %v46 = vld [vmem:[#allocation2 + $0x48] sm:$0xff]
  %v47 = vld [vmem:[#allocation2 + $0x50] sm:$0xff]
  %v48 = vld [vmem:[#allocation2 + $0x58] sm:$0xff]
  %v49 = vld [vmem:[#allocation2 + $0x60] sm:$0xff]
  %v50 = vld [vmem:[#allocation2 + $0x68] sm:$0xff]
  %v51 = vld [vmem:[#allocation2 + $0x70] sm:$0xff]
  %v52 = vld [vmem:[#allocation2 + $0x78] sm:$0xff]
  %v53 = vld [vmem:[%s0] sm:$0xff]
  %v54 = vld [vmem:[%s0 + $0x8] sm:$0xf]
  %v55 = vld [vmem:[%s0 + $0xc] sm:$0xff]
  %v56 = vld [vmem:[%s0 + $0x14] sm:$0xf]
  %v57 = vld [vmem:[%s0 + $0x18] sm:$0xff]
  %v58 = vld [vmem:[%s0 + $0x20] sm:$0xf]
  %v59 = vld [vmem:[%s0 + $0x24] sm:$0xff]
  %v60 = vld [vmem:[%s0 + $0x2c] sm:$0xf]
  %v61 = vld [vmem:[%s0 + $0x30] sm:$0xff]
  %v62 = vld [vmem:[%s0 + $0x38] sm:$0xf]
  %v63 = vld [vmem:[%s0 + $0x3c] sm:$0xff]
  %v64 = vld [vmem:[%s0 + $0x44] sm:$0xf]
  %v65 = vld [vmem:[%s0 + $0x48] sm:$0xff]
  %v66 = vld [vmem:[%s0 + $0x50] sm:$0xf]
  %v67 = vld [vmem:[%s0 + $0x54] sm:$0xff]
  %v68 = vld [vmem:[%s0 + $0x5c] sm:$0xf]
  %v69 = vld [vmem:[%s0 + $0x60] sm:$0xff]
  %v70 = vld [vmem:[%s0 + $0x68] sm:$0xf]
  %v71 = vld [vmem:[%s0 + $0x6c] sm:$0xff]
  %v72 = vld [vmem:[%s0 + $0x74] sm:$0xf]
  %v73 = vld [vmem:[%s0 + $0x78] sm:$0xff]
  %v74 = vld [vmem:[%s0 + $0x80] sm:$0xf]
  %v75 = vld [vmem:[%s0 + $0x84] sm:$0xff]
  %v76 = vld [vmem:[%s0 + $0x8c] sm:$0xf]
  %v77 = vld [vmem:[%s0 + $0x90] sm:$0xff]
  %v78 = vld [vmem:[%s0 + $0x98] sm:$0xf]
  %v79 = vld [vmem:[%s0 + $0x9c] sm:$0xff]
  %v80 = vld [vmem:[%s0 + $0xa4] sm:$0xf]
  %v81 = vld [vmem:[%s0 + $0xa8] sm:$0xff]
  %v82 = vld [vmem:[%s0 + $0xb0] sm:$0xf]
  %v83 = vld [vmem:[%s0 + $0xb4] sm:$0xff]
  %v84 = vld [vmem:[%s0 + $0xbc] sm:$0xf]
  %v85 = vld [vmem:[%s1] sm:$0xf]
  %v86 = vld [vmem:[%s1 + $0x4] sm:$0xf]
  %v87 = vld [vmem:[%s1 + $0x8] sm:$0xf]
  %v88 = vld [vmem:[%s1 + $0xc] sm:$0xf]
  %v89 = vld [vmem:[%s1 + $0x10] sm:$0xf]
  %v90 = vld [vmem:[%s1 + $0x14] sm:$0xf]
  %v91 = vld [vmem:[%s1 + $0x18] sm:$0xf]
  %v92 = vld [vmem:[%s1 + $0x1c] sm:$0xf]
  %v93 = vld [vmem:[%s1 + $0x20] sm:$0xf]
  %v94 = vld [vmem:[%s1 + $0x24] sm:$0xf]
  %v95 = vld [vmem:[%s1 + $0x28] sm:$0xf]
  %v96 = vld [vmem:[%s1 + $0x2c] sm:$0xf]
  %v97 = vld [vmem:[%s1 + $0x30] sm:$0xf]
  %v98 = vld [vmem:[%s1 + $0x34] sm:$0xf]
  %v99 = vld [vmem:[%s1 + $0x38] sm:$0xf]
  %v100 = vld [vmem:[%s1 + $0x3c] sm:$0xf]
  %v101 = vld [vmem:[%s1 + $0x40] sm:$0xf]
  %v102 = vld [vmem:[%s1 + $0x44] sm:$0xf]
  %v103 = vld [vmem:[%s1 + $0x48] sm:$0xf]
  %v104 = vld [vmem:[%s1 + $0x4c] sm:$0xf]
  %v105 = vld [vmem:[%s1 + $0x50] sm:$0xf]
  %v106 = vld [vmem:[%s1 + $0x54] sm:$0xf]
  %v107 = vld [vmem:[%s1 + $0x58] sm:$0xf]
  %v108 = vld [vmem:[%s1 + $0x5c] sm:$0xf]
  %v109 = vld [vmem:[%s1 + $0x60] sm:$0xf]
  %v110 = vld [vmem:[%s1 + $0x64] sm:$0xf]
  %v111 = vld [vmem:[%s1 + $0x68] sm:$0xf]
  %v112 = vld [vmem:[%s1 + $0x6c] sm:$0xf]
  %v113 = vld [vmem:[%s1 + $0x70] sm:$0xf]
  %v114 = vld [vmem:[%s1 + $0x74] sm:$0xf]
  %v115 = vld [vmem:[%s1 + $0x78] sm:$0xf]
  %v116 = vld [vmem:[%s1 + $0x7c] sm:$0xf]
  %v117 = vld [vmem:[%s1 + $0x80] sm:$0xf]
  %v118 = vld [vmem:[%s1 + $0x84] sm:$0xf]
  %v119 = vld [vmem:[%s1 + $0x88] sm:$0xf]
  %v120 = vld [vmem:[%s1 + $0x8c] sm:$0xf]
  %v121 = vld [vmem:[%s1 + $0x90] sm:$0xf]
  %v122 = vld [vmem:[%s1 + $0x94] sm:$0xf]
  %v123 = vld [vmem:[%s1 + $0x98] sm:$0xf]
  %v124 = vld [vmem:[%s1 + $0x9c] sm:$0xf]
  %v125 = vld [vmem:[%s1 + $0xa0] sm:$0xf]
  %v126 = vld [vmem:[%s1 + $0xa4] sm:$0xf]
  %v127 = vld [vmem:[%s1 + $0xa8] sm:$0xf]
  %v128 = vld [vmem:[%s1 + $0xac] sm:$0xf]
  %v129 = vld [vmem:[%s1 + $0xb0] sm:$0xf]
  %v130 = vld [vmem:[%s1 + $0xb4] sm:$0xf]
  %v131 = vld [vmem:[%s1 + $0xb8] sm:$0xf]
  %v132 = vld [vmem:[%s1 + $0xbc] sm:$0xf]
  %v165 = vunpack.c.l.b16 %v53
  %v166 = vunpack.c.h.b16 %v53
  %v167 = vunpack.c.l.b16 %v54
  %v168 = vunpack.c.l.b16 %v55
  %v169 = vunpack.c.h.b16 %v55
  %v170 = vunpack.c.l.b16 %v56
  %v171 = vunpack.c.l.b16 %v57
  %v172 = vunpack.c.h.b16 %v57
  %v173 = vunpack.c.l.b16 %v58
  %v174 = vunpack.c.l.b16 %v59
  %v175 = vunpack.c.h.b16 %v59
  %v176 = vunpack.c.l.b16 %v60
  %v177 = vunpack.c.l.b16 %v61
  %v178 = vunpack.c.h.b16 %v61
  %v179 = vunpack.c.l.b16 %v62
  %v180 = vunpack.c.l.b16 %v63
  %v181 = vunpack.c.h.b16 %v63
  %v182 = vunpack.c.l.b16 %v64
  %v183 = vunpack.c.l.b16 %v65
  %v184 = vunpack.c.h.b16 %v65
  %v185 = vunpack.c.l.b16 %v66
  %v186 = vunpack.c.l.b16 %v67
  %v187 = vunpack.c.h.b16 %v67
  %v188 = vunpack.c.l.b16 %v68
  %v189 = vunpack.c.l.b16 %v69
  %v190 = vunpack.c.h.b16 %v69
  %v191 = vunpack.c.l.b16 %v70
  %v192 = vunpack.c.l.b16 %v71
  %v193 = vunpack.c.h.b16 %v71
  %v194 = vunpack.c.l.b16 %v72
  %v195 = vunpack.c.l.b16 %v73
  %v196 = vunpack.c.h.b16 %v73
  %v197 = vunpack.c.l.b16 %v74
  %v198 = vunpack.c.l.b16 %v75
  %v199 = vunpack.c.h.b16 %v75
  %v200 = vunpack.c.l.b16 %v76
  %v201 = vunpack.c.l.b16 %v77
  %v202 = vunpack.c.h.b16 %v77
  %v203 = vunpack.c.l.b16 %v78
  %v204 = vunpack.c.l.b16 %v79
  %v205 = vunpack.c.h.b16 %v79
  %v206 = vunpack.c.l.b16 %v80
  %v207 = vunpack.c.l.b16 %v81
  %v208 = vunpack.c.h.b16 %v81
  %v209 = vunpack.c.l.b16 %v82
  %v210 = vunpack.c.l.b16 %v83
  %v211 = vunpack.c.h.b16 %v83
  %v212 = vunpack.c.l.b16 %v84
  %v213 = vpack.c.b16 %v168, %v165
  %v214 = vpack.c.b16 %v169, %v166
  %v215 = vpack.c.b16 %v170, %v167
  %v216 = vpack.c.b16 %v174, %v171
  %v217 = vpack.c.b16 %v175, %v172
  %v218 = vpack.c.b16 %v176, %v173
  %v219 = vpack.c.b16 %v180, %v177
  %v220 = vpack.c.b16 %v181, %v178
  %v221 = vpack.c.b16 %v182, %v179
  %v222 = vpack.c.b16 %v186, %v183
  %v223 = vpack.c.b16 %v187, %v184
  %v224 = vpack.c.b16 %v188, %v185
  %v225 = vpack.c.b16 %v192, %v189
  %v226 = vpack.c.b16 %v193, %v190
  %v227 = vpack.c.b16 %v194, %v191
  %v228 = vpack.c.b16 %v198, %v195
  %v229 = vpack.c.b16 %v199, %v196
  %v230 = vpack.c.b16 %v200, %v197
  %v231 = vpack.c.b16 %v204, %v201
  %v232 = vpack.c.b16 %v205, %v202
  %v233 = vpack.c.b16 %v206, %v203
  %v234 = vpack.c.b16 %v210, %v207
  %v235 = vpack.c.b16 %v211, %v208
  %v236 = vpack.c.b16 %v212, %v209
  %v309 = vunpack.c.l.b16 %v85
  %v310 = vunpack.c.l.b16 %v86
  %v311 = vunpack.c.l.b16 %v87
  %v312 = vunpack.c.l.b16 %v88
  %v313 = vunpack.c.l.b16 %v89
  %v314 = vunpack.c.l.b16 %v90
  %v315 = vunpack.c.l.b16 %v91
  %v316 = vunpack.c.l.b16 %v92
  %v317 = vunpack.c.l.b16 %v93
  %v318 = vunpack.c.l.b16 %v94
  %v319 = vunpack.c.l.b16 %v95
  %v320 = vunpack.c.l.b16 %v96
  %v321 = vunpack.c.l.b16 %v97
  %v322 = vunpack.c.l.b16 %v98
  %v323 = vunpack.c.l.b16 %v99
  %v324 = vunpack.c.l.b16 %v100
  %v325 = vunpack.c.l.b16 %v101
  %v326 = vunpack.c.l.b16 %v102
  %v327 = vunpack.c.l.b16 %v103
  %v328 = vunpack.c.l.b16 %v104
  %v329 = vunpack.c.l.b16 %v105
  %v330 = vunpack.c.l.b16 %v106
  %v331 = vunpack.c.l.b16 %v107
  %v332 = vunpack.c.l.b16 %v108
  %v333 = vunpack.c.l.b16 %v109
  %v334 = vunpack.c.l.b16 %v110
  %v335 = vunpack.c.l.b16 %v111
  %v336 = vunpack.c.l.b16 %v112
  %v337 = vunpack.c.l.b16 %v113
  %v338 = vunpack.c.l.b16 %v114
  %v339 = vunpack.c.l.b16 %v115
  %v340 = vunpack.c.l.b16 %v116
  %v341 = vunpack.c.l.b16 %v117
  %v342 = vunpack.c.l.b16 %v118
  %v343 = vunpack.c.l.b16 %v119
  %v344 = vunpack.c.l.b16 %v120
  %v345 = vunpack.c.l.b16 %v121
  %v346 = vunpack.c.l.b16 %v122
  %v347 = vunpack.c.l.b16 %v123
  %v348 = vunpack.c.l.b16 %v124
  %v349 = vunpack.c.l.b16 %v125
  %v350 = vunpack.c.l.b16 %v126
  %v351 = vunpack.c.l.b16 %v127
  %v352 = vunpack.c.l.b16 %v128
  %v353 = vunpack.c.l.b16 %v129
  %v354 = vunpack.c.l.b16 %v130
  %v355 = vunpack.c.l.b16 %v131
  %v356 = vunpack.c.l.b16 %v132
  %v357 = vpack.c.b16 %v310, %v309
  %v358 = vpack.c.b16 %v312, %v311
  %v359 = vpack.c.b16 %v314, %v313
  %v360 = vpack.c.b16 %v316, %v315
  %v361 = vpack.c.b16 %v318, %v317
  %v362 = vpack.c.b16 %v320, %v319
  %v363 = vpack.c.b16 %v322, %v321
  %v364 = vpack.c.b16 %v324, %v323
  %v365 = vpack.c.b16 %v326, %v325
  %v366 = vpack.c.b16 %v328, %v327
  %v367 = vpack.c.b16 %v330, %v329
  %v368 = vpack.c.b16 %v332, %v331
  %v369 = vpack.c.b16 %v334, %v333
  %v370 = vpack.c.b16 %v336, %v335
  %v371 = vpack.c.b16 %v338, %v337
  %v372 = vpack.c.b16 %v340, %v339
  %v373 = vpack.c.b16 %v342, %v341
  %v374 = vpack.c.b16 %v344, %v343
  %v375 = vpack.c.b16 %v346, %v345
  %v376 = vpack.c.b16 %v348, %v347
  %v377 = vpack.c.b16 %v350, %v349
  %v378 = vpack.c.b16 %v352, %v351
  %v379 = vpack.c.b16 %v354, %v353
  %v380 = vpack.c.b16 %v356, %v355
  %405 = vmatpush.bf16.msra.mxu0 %v364
  %406 = vmatpush.bf16.msra.mxu0 %v363
  %407 = vmatpush.bf16.msra.mxu0 %v362
  %408 = vmatpush.bf16.msra.mxu0 %v361
  %409 = vmatpush.bf16.msra.mxu0 %v360
  %410 = vmatpush.bf16.msra.mxu0 %v359
  %411 = vmatpush.bf16.msra.mxu0 %v358
  %412 = vmatpush.bf16.msra.mxu0 %v357
  %413 = vmatmul.bf16.gmra.mxu0 %v213
  %v414 = vpop.f32.mrf.mxu0
  %v415 = vadd.f32 0.0, %v414
  %v416 = vpop.f32.mrf.mxu0
  %v417 = vadd.f32 0.0, %v416
  %418 = vmatmul.bf16.gmra.mxu0 %v216
  %v419 = vpop.f32.mrf.mxu0
  %v420 = vadd.f32 0.0, %v419
  %v421 = vpop.f32.mrf.mxu0
  %v422 = vadd.f32 0.0, %v421
  %423 = vmatmul.bf16.gmra.mxu0 %v219
  %v424 = vpop.f32.mrf.mxu0
  %v425 = vadd.f32 0.0, %v424
  %v426 = vpop.f32.mrf.mxu0
  %v427 = vadd.f32 0.0, %v426
  %428 = vmatmul.bf16.gmra.mxu0 %v222
  %v429 = vpop.f32.mrf.mxu0
  %v430 = vadd.f32 0.0, %v429
  %v431 = vpop.f32.mrf.mxu0
  %v432 = vadd.f32 0.0, %v431
  %433 = vmatmul.bf16.gmra.mxu0 %v225
  %v434 = vpop.f32.mrf.mxu0
  %v435 = vadd.f32 0.0, %v434
  %v436 = vpop.f32.mrf.mxu0
  %v437 = vadd.f32 0.0, %v436
  %438 = vmatmul.bf16.gmra.mxu0 %v228
  %v439 = vpop.f32.mrf.mxu0
  %v440 = vadd.f32 0.0, %v439
  %v441 = vpop.f32.mrf.mxu0
  %v442 = vadd.f32 0.0, %v441
  %443 = vmatmul.bf16.gmra.mxu0 %v231
  %v444 = vpop.f32.mrf.mxu0
  %v445 = vadd.f32 0.0, %v444
  %v446 = vpop.f32.mrf.mxu0
  %v447 = vadd.f32 0.0, %v446
  %448 = vmatmul.bf16.gmra.mxu0 %v234
  %v449 = vpop.f32.mrf.mxu0
  %v450 = vadd.f32 0.0, %v449
  %v451 = vpop.f32.mrf.mxu0
  %v452 = vadd.f32 0.0, %v451
  %453 = vdwg.mxu0
  %454 = vmatpush.bf16.msra.mxu0 %v372
  %455 = vmatpush.bf16.msra.mxu0 %v371
  %456 = vmatpush.bf16.msra.mxu0 %v370
  %457 = vmatpush.bf16.msra.mxu0 %v369
  %458 = vmatpush.bf16.msra.mxu0 %v368
  %459 = vmatpush.bf16.msra.mxu0 %v367
  %460 = vmatpush.bf16.msra.mxu0 %v366
  %461 = vmatpush.bf16.msra.mxu0 %v365
  %462 = vmatmul.bf16.gmra.mxu0 %v214
  %v463 = vpop.f32.mrf.mxu0
  %v464 = vadd.f32 %v415, %v463
  %v465 = vpop.f32.mrf.mxu0
  %v466 = vadd.f32 %v417, %v465
  %467 = vmatmul.bf16.gmra.mxu0 %v217
  %v468 = vpop.f32.mrf.mxu0
  %v469 = vadd.f32 %v420, %v468
  %v470 = vpop.f32.mrf.mxu0
  %v471 = vadd.f32 %v422, %v470
  %472 = vmatmul.bf16.gmra.mxu0 %v220
  %v473 = vpop.f32.mrf.mxu0
  %v474 = vadd.f32 %v425, %v473
  %v475 = vpop.f32.mrf.mxu0
  %v476 = vadd.f32 %v427, %v475
  %477 = vmatmul.bf16.gmra.mxu0 %v223
  %v478 = vpop.f32.mrf.mxu0
  %v479 = vadd.f32 %v430, %v478
  %v480 = vpop.f32.mrf.mxu0
  %v481 = vadd.f32 %v432, %v480
  %482 = vmatmul.bf16.gmra.mxu0 %v226
  %v483 = vpop.f32.mrf.mxu0
  %v484 = vadd.f32 %v435, %v483
  %v485 = vpop.f32.mrf.mxu0
  %v486 = vadd.f32 %v437, %v485
  %487 = vmatmul.bf16.gmra.mxu0 %v229
  %v488 = vpop.f32.mrf.mxu0
  %v489 = vadd.f32 %v440, %v488
  %v490 = vpop.f32.mrf.mxu0
  %v491 = vadd.f32 %v442, %v490
  %492 = vmatmul.bf16.gmra.mxu0 %v232
  %v493 = vpop.f32.mrf.mxu0
  %v494 = vadd.f32 %v445, %v493
  %v495 = vpop.f32.mrf.mxu0
  %v496 = vadd.f32 %v447, %v495
  %497 = vmatmul.bf16.gmra.mxu0 %v235
  %v498 = vpop.f32.mrf.mxu0
  %v499 = vadd.f32 %v450, %v498
  %v500 = vpop.f32.mrf.mxu0
  %v501 = vadd.f32 %v452, %v500
  %502 = vdwg.mxu0
  %503 = vmatpush.bf16.msra.mxu0 %v380
  %504 = vmatpush.bf16.msra.mxu0 %v379
  %505 = vmatpush.bf16.msra.mxu0 %v378
  %506 = vmatpush.bf16.msra.mxu0 %v377
  %507 = vmatpush.bf16.msra.mxu0 %v376
  %508 = vmatpush.bf16.msra.mxu0 %v375
  %509 = vmatpush.bf16.msra.mxu0 %v374
  %510 = vmatpush.bf16.msra.mxu0 %v373
  %511 = vmatmul.bf16.gmra.mxu0 %v215
  %v512 = vpop.f32.mrf.mxu0
  %v513 = vadd.f32 %v464, %v512
  %v514 = vpop.f32.mrf.mxu0
  %v515 = vadd.f32 %v466, %v514
  %516 = vmatmul.bf16.gmra.mxu0 %v218
  %v517 = vpop.f32.mrf.mxu0
  %v518 = vadd.f32 %v469, %v517
  %v519 = vpop.f32.mrf.mxu0
  %v520 = vadd.f32 %v471, %v519
  %521 = vmatmul.bf16.gmra.mxu0 %v221
  %v522 = vpop.f32.mrf.mxu0
  %v523 = vadd.f32 %v474, %v522
  %v524 = vpop.f32.mrf.mxu0
  %v525 = vadd.f32 %v476, %v524
  %526 = vmatmul.bf16.gmra.mxu0 %v224
  %v527 = vpop.f32.mrf.mxu0
  %v528 = vadd.f32 %v479, %v527
  %v529 = vpop.f32.mrf.mxu0
  %v530 = vadd.f32 %v481, %v529
  %531 = vmatmul.bf16.gmra.mxu0 %v227
  %v532 = vpop.f32.mrf.mxu0
  %v533 = vadd.f32 %v484, %v532
  %v534 = vpop.f32.mrf.mxu0
  %v535 = vadd.f32 %v486, %v534
  %536 = vmatmul.bf16.gmra.mxu0 %v230
  %v537 = vpop.f32.mrf.mxu0
  %v538 = vadd.f32 %v489, %v537
  %v539 = vpop.f32.mrf.mxu0
  %v540 = vadd.f32 %v491, %v539
  %541 = vmatmul.bf16.gmra.mxu0 %v233
  %v542 = vpop.f32.mrf.mxu0
  %v543 = vadd.f32 %v494, %v542
  %v544 = vpop.f32.mrf.mxu0
  %v545 = vadd.f32 %v496, %v544
  %546 = vmatmul.bf16.gmra.mxu0 %v236
  %v547 = vpop.f32.mrf.mxu0
  %v548 = vadd.f32 %v499, %v547
  %v549 = vpop.f32.mrf.mxu0
  %v550 = vadd.f32 %v501, %v549
  %551 = vdwg.mxu0
  %v552 = vadd.f32 %v37, %v513
  %v553 = vadd.f32 %v38, %v515
  %v554 = vadd.f32 %v39, %v518
  %v555 = vadd.f32 %v40, %v520
  %v556 = vadd.f32 %v41, %v523
  %v557 = vadd.f32 %v42, %v525
  %v558 = vadd.f32 %v43, %v528
  %v559 = vadd.f32 %v44, %v530
  %v560 = vadd.f32 %v45, %v533
  %v561 = vadd.f32 %v46, %v535
  %v562 = vadd.f32 %v47, %v538
  %v563 = vadd.f32 %v48, %v540
  %v564 = vadd.f32 %v49, %v543
  %v565 = vadd.f32 %v50, %v545
  %v566 = vadd.f32 %v51, %v548
  %v567 = vadd.f32 %v52, %v550
  %568 = vst [vmem:[#allocation2] sm:$0xff] %v552
  %569 = vst [vmem:[#allocation2 + $0x8] sm:$0xff] %v553
  %570 = vst [vmem:[#allocation2 + $0x10] sm:$0xff] %v554
  %571 = vst [vmem:[#allocation2 + $0x18] sm:$0xff] %v555
  %572 = vst [vmem:[#allocation2 + $0x20] sm:$0xff] %v556
  %573 = vst [vmem:[#allocation2 + $0x28] sm:$0xff] %v557
  %574 = vst [vmem:[#allocation2 + $0x30] sm:$0xff] %v558
  %575 = vst [vmem:[#allocation2 + $0x38] sm:$0xff] %v559
  %576 = vst [vmem:[#allocation2 + $0x40] sm:$0xff] %v560
  %577 = vst [vmem:[#allocation2 + $0x48] sm:$0xff] %v561
  %578 = vst [vmem:[#allocation2 + $0x50] sm:$0xff] %v562
  %579 = vst [vmem:[#allocation2 + $0x58] sm:$0xff] %v563
  %580 = vst [vmem:[#allocation2 + $0x60] sm:$0xff] %v564
  %581 = vst [vmem:[#allocation2 + $0x68] sm:$0xff] %v565
  %582 = vst [vmem:[#allocation2 + $0x70] sm:$0xff] %v566
  %583 = vst [vmem:[#allocation2 + $0x78] sm:$0xff] %v567
  // Predicated region
  $region22: #{vgg_cifar100_forward.9} parent=0 // pred_check
    %p584 = pneg %p17
  $region23: #{vgg_cifar100_forward.9} parent=0 // pred_check_branch
    %586 = sbr.rel (%p584) target = $region25
  $region24: #{vgg_cifar100_forward.9} parent=0 // pred_region
    %v587 = vld [vmem:[#allocation2] sm:$0xff]
    %v588 = vld [vmem:[#allocation2 + $0x8] sm:$0xff]
    %v589 = vld [vmem:[#allocation2 + $0x10] sm:$0xff]
    %v590 = vld [vmem:[#allocation2 + $0x18] sm:$0xff]
    %v591 = vld [vmem:[#allocation2 + $0x20] sm:$0xff]
    %v592 = vld [vmem:[#allocation2 + $0x28] sm:$0xff]
    %v593 = vld [vmem:[#allocation2 + $0x30] sm:$0xff]
    %v594 = vld [vmem:[#allocation2 + $0x38] sm:$0xff]
    %v595 = vld [vmem:[#allocation2 + $0x40] sm:$0xff]
    %v596 = vld [vmem:[#allocation2 + $0x48] sm:$0xff]
    %v597 = vld [vmem:[#allocation2 + $0x50] sm:$0xff]
    %v598 = vld [vmem:[#allocation2 + $0x58] sm:$0xff]
    %v599 = vld [vmem:[#allocation2 + $0x60] sm:$0xff]
    %v600 = vld [vmem:[#allocation2 + $0x68] sm:$0xff]
    %v601 = vld [vmem:[#allocation2 + $0x70] sm:$0xff]
    %v602 = vld [vmem:[#allocation2 + $0x78] sm:$0xff]
    %v603 = vld [vmem:[%s2] sm:$0x1]
    %v605 = vperm.slane %v603, 0
    %v607 = vmul.f32 %v587, %v605
    %v608 = vmul.f32 %v588, %v605
    %v609 = vmul.f32 %v589, %v605
    %v610 = vmul.f32 %v590, %v605
    %v611 = vmul.f32 %v591, %v605
    %v612 = vmul.f32 %v592, %v605
    %v613 = vmul.f32 %v593, %v605
    %v614 = vmul.f32 %v594, %v605
    %v615 = vmul.f32 %v595, %v605
    %v616 = vmul.f32 %v596, %v605
    %v617 = vmul.f32 %v597, %v605
    %v618 = vmul.f32 %v598, %v605
    %v619 = vmul.f32 %v599, %v605
    %v620 = vmul.f32 %v600, %v605
    %v621 = vmul.f32 %v601, %v605
    %v622 = vmul.f32 %v602, %v605
    %v623 = vld [vmem:[%s3] sm:$0x1]
    %v625 = vperm.slane %v623, 0
    %v627 = vadd.f32 %v607, %v625
    %v628 = vadd.f32 %v608, %v625
    %v629 = vadd.f32 %v609, %v625
    %v630 = vadd.f32 %v610, %v625
    %v631 = vadd.f32 %v611, %v625
    %v632 = vadd.f32 %v612, %v625
    %v633 = vadd.f32 %v613, %v625
    %v634 = vadd.f32 %v614, %v625
    %v635 = vadd.f32 %v615, %v625
    %v636 = vadd.f32 %v616, %v625
    %v637 = vadd.f32 %v617, %v625
    %v638 = vadd.f32 %v618, %v625
    %v639 = vadd.f32 %v619, %v625
    %v640 = vadd.f32 %v620, %v625
    %v641 = vadd.f32 %v621, %v625
    %v642 = vadd.f32 %v622, %v625
    %v643 = vmax.f32 %v627, 0.0
    %v644 = vmax.f32 %v628, 0.0
    %v645 = vmax.f32 %v629, 0.0
    %v646 = vmax.f32 %v630, 0.0
    %v647 = vmax.f32 %v631, 0.0
    %v648 = vmax.f32 %v632, 0.0
    %v649 = vmax.f32 %v633, 0.0
    %v650 = vmax.f32 %v634, 0.0
    %v651 = vmax.f32 %v635, 0.0
    %v652 = vmax.f32 %v636, 0.0
    %v653 = vmax.f32 %v637, 0.0
    %v654 = vmax.f32 %v638, 0.0
    %v655 = vmax.f32 %v639, 0.0
    %v656 = vmax.f32 %v640, 0.0
    %v657 = vmax.f32 %v641, 0.0
    %v658 = vmax.f32 %v642, 0.0
    %v659 = vpack.c.bf16 %v643, %v643
    %v660 = vpack.c.bf16 %v644, %v644
    %v661 = vpack.c.bf16 %v645, %v645
    %v662 = vpack.c.bf16 %v646, %v646
    %v663 = vpack.c.bf16 %v647, %v647
    %v664 = vpack.c.bf16 %v648, %v648
    %v665 = vpack.c.bf16 %v649, %v649
    %v666 = vpack.c.bf16 %v650, %v650
    %v667 = vpack.c.bf16 %v651, %v651
    %v668 = vpack.c.bf16 %v652, %v652
    %v669 = vpack.c.bf16 %v653, %v653
    %v670 = vpack.c.bf16 %v654, %v654
    %v671 = vpack.c.bf16 %v655, %v655
    %v672 = vpack.c.bf16 %v656, %v656
    %v673 = vpack.c.bf16 %v657, %v657
    %v674 = vpack.c.bf16 %v658, %v658
    %675 = vst [vmem:[%s4] sm:$0xf] %v659
    %676 = vst [vmem:[%s4 + $0x4] sm:$0xf] %v660
    %677 = vst [vmem:[%s4 + $0x8] sm:$0xf] %v661
    %678 = vst [vmem:[%s4 + $0xc] sm:$0xf] %v662
    %679 = vst [vmem:[%s4 + $0x10] sm:$0xf] %v663
    %680 = vst [vmem:[%s4 + $0x14] sm:$0xf] %v664
    %681 = vst [vmem:[%s4 + $0x18] sm:$0xf] %v665
    %682 = vst [vmem:[%s4 + $0x1c] sm:$0xf] %v666
    %683 = vst [vmem:[%s4 + $0x20] sm:$0xf] %v667
    %684 = vst [vmem:[%s4 + $0x24] sm:$0xf] %v668
    %685 = vst [vmem:[%s4 + $0x28] sm:$0xf] %v669
    %686 = vst [vmem:[%s4 + $0x2c] sm:$0xf] %v670
    %687 = vst [vmem:[%s4 + $0x30] sm:$0xf] %v671
    %688 = vst [vmem:[%s4 + $0x34] sm:$0xf] %v672
    %689 = vst [vmem:[%s4 + $0x38] sm:$0xf] %v673
    %690 = vst [vmem:[%s4 + $0x3c] sm:$0xf] %v674
  $region25: #{vgg_cifar100_forward.9} parent=0 // pred_fallthru
    _
  // Predicated region
  $region26: #{vgg_cifar100_forward.9} parent=0 // pred_check
    _
  $region27: #{vgg_cifar100_forward.9} parent=0 // pred_check_branch
    %692 = sbr.rel (0) target = $region29
  $region28: #{vgg_cifar100_forward.9} parent=0 // pred_region
    _
  $region29: #{vgg_cifar100_forward.9} parent=0 // pred_fallthru
    _
  // Predicated region
  $region30: #{vgg_cifar100_forward.9} parent=0 // pred_check
    _
  $region31: #{vgg_cifar100_forward.9} parent=0 // pred_check_branch
    %694 = sbr.rel (0) target = $region33
  $region32: #{vgg_cifar100_forward.9} parent=0 // pred_region
    _
  $region33: #{vgg_cifar100_forward.9} parent=0 // pred_fallthru
    _

// kernel: vgg_cifar100_forward.12
$region0: #{vgg_cifar100_forward.12}
  #allocation0 [shape = 'u32[]', space=smem, size = 0x4, offset = 0x4, fixed_abs, tag = 'smem constant byte address 0x4 - core index']
  #allocation1 [shape = 'u32[72,128]{1,0:T(1,128)}', space=vmem, size = 0x9000, scoped, tag = 'internal scratch']
  %s0 = inlined_call_operand.vmem [shape: bf16[4,2,2,1024], index: 0, kind: input, shape index: {}]
  %s1 = inlined_call_operand.vmem [shape: bf16[4,2,512], index: 1, kind: output, shape index: {}]
  %s2 = sld [smem:[#allocation0]]
  $region14: #{vgg_cifar100_forward.12} parent=0
    _
  %s4 = ssub.s32 1, %s2
  %s5 = scalar_select 0, %s4, %s2
  // Predicated region
  $region2: #{vgg_cifar100_forward.12} parent=0 // pred_check
    _
  $region3: #{vgg_cifar100_forward.12} parent=0 // pred_check_branch
    %7 = sbr.rel (0) target = $region5
  $region4: #{vgg_cifar100_forward.12} parent=0 // pred_region
    _
  $region5: #{vgg_cifar100_forward.12} parent=0 // pred_fallthru
    _
  %v8 = vld [vmem:[%s0] sm:$0xff]
  %v9 = vld [vmem:[%s0 + $0x8] sm:$0xff]
  %v10 = vld [vmem:[%s0 + $0x10] sm:$0xff]
  %v11 = vld [vmem:[%s0 + $0x18] sm:$0xff]
  %v12 = vld [vmem:[%s0 + $0x20] sm:$0xff]
  %v13 = vld [vmem:[%s0 + $0x28] sm:$0xff]
  %v14 = vld [vmem:[%s0 + $0x30] sm:$0xff]
  %v15 = vld [vmem:[%s0 + $0x38] sm:$0xff]
  %v16 = vunpack.c.l.bf16 %v8
  %v17 = vunpack.c.h.bf16 %v8
  %v18 = vunpack.c.l.bf16 %v10
  %v19 = vunpack.c.h.bf16 %v10
  %v20 = vunpack.c.l.bf16 %v12
  %v21 = vunpack.c.h.bf16 %v12
  %v22 = vunpack.c.l.bf16 %v14
  %v23 = vunpack.c.h.bf16 %v14
  %v24 = vunpack.c.l.bf16 %v9
  %v25 = vunpack.c.h.bf16 %v9
  %v26 = vunpack.c.l.bf16 %v11
  %v27 = vunpack.c.h.bf16 %v11
  %v28 = vunpack.c.l.bf16 %v13
  %v29 = vunpack.c.h.bf16 %v13
  %v30 = vunpack.c.l.bf16 %v15
  %v31 = vunpack.c.h.bf16 %v15
  %v32 = vmax.f32 %v16, %v24
  %v33 = vmax.f32 %v17, %v25
  %v34 = vmax.f32 %v18, %v26
  %v35 = vmax.f32 %v19, %v27
  %v36 = vmax.f32 %v20, %v28
  %v37 = vmax.f32 %v21, %v29
  %v38 = vmax.f32 %v22, %v30
  %v39 = vmax.f32 %v23, %v31
  %48 = vst [vmem:[#allocation1] ss:$4 sm:$0xff] %v32
  %s49 = scalar_lea.vmem [#allocation1], 32
  %50 = vst [vmem:[%s49] ss:$4 sm:$0xff] %v33
  %v51 = vld.sshfl [vmem:[#allocation1] sm:$0xff pattern:$0x73625140]
  %v52 = vld.sshfl [vmem:[#allocation1 + $0x8] sm:$0xff pattern:$0x73625140]
  %v53 = vld.sshfl [vmem:[#allocation1 + $0x10] sm:$0xff pattern:$0x73625140]
  %v54 = vld.sshfl [vmem:[#allocation1 + $0x18] sm:$0xff pattern:$0x73625140]
  %v55 = vld.sshfl [vmem:[#allocation1 + $0x20] sm:$0xff pattern:$0x73625140]
  %v56 = vld.sshfl [vmem:[#allocation1 + $0x28] sm:$0xff pattern:$0x73625140]
  %v57 = vld.sshfl [vmem:[#allocation1 + $0x30] sm:$0xff pattern:$0x73625140]
  %v58 = vld.sshfl [vmem:[#allocation1 + $0x38] sm:$0xff pattern:$0x73625140]
  %59 = vst [vmem:[#allocation1] ss:$4 sm:$0xff] %v34
  %60 = vst [vmem:[%s49] ss:$4 sm:$0xff] %v35
  %v61 = vld.sshfl [vmem:[#allocation1] sm:$0xff pattern:$0x73625140]
  %v62 = vld.sshfl [vmem:[#allocation1 + $0x8] sm:$0xff pattern:$0x73625140]
  %v63 = vld.sshfl [vmem:[#allocation1 + $0x10] sm:$0xff pattern:$0x73625140]
  %v64 = vld.sshfl [vmem:[#allocation1 + $0x18] sm:$0xff pattern:$0x73625140]
  %v65 = vld.sshfl [vmem:[#allocation1 + $0x20] sm:$0xff pattern:$0x73625140]
  %v66 = vld.sshfl [vmem:[#allocation1 + $0x28] sm:$0xff pattern:$0x73625140]
  %v67 = vld.sshfl [vmem:[#allocation1 + $0x30] sm:$0xff pattern:$0x73625140]
  %v68 = vld.sshfl [vmem:[#allocation1 + $0x38] sm:$0xff pattern:$0x73625140]
  %69 = vst [vmem:[#allocation1] ss:$4 sm:$0xff] %v36
  %70 = vst [vmem:[%s49] ss:$4 sm:$0xff] %v37
  %v71 = vld.sshfl [vmem:[#allocation1] sm:$0xff pattern:$0x73625140]
  %v72 = vld.sshfl [vmem:[#allocation1 + $0x8] sm:$0xff pattern:$0x73625140]
  %v73 = vld.sshfl [vmem:[#allocation1 + $0x10] sm:$0xff pattern:$0x73625140]
  %v74 = vld.sshfl [vmem:[#allocation1 + $0x18] sm:$0xff pattern:$0x73625140]
  %v75 = vld.sshfl [vmem:[#allocation1 + $0x20] sm:$0xff pattern:$0x73625140]
  %v76 = vld.sshfl [vmem:[#allocation1 + $0x28] sm:$0xff pattern:$0x73625140]
  %v77 = vld.sshfl [vmem:[#allocation1 + $0x30] sm:$0xff pattern:$0x73625140]
  %v78 = vld.sshfl [vmem:[#allocation1 + $0x38] sm:$0xff pattern:$0x73625140]
  %79 = vst [vmem:[#allocation1] ss:$4 sm:$0xff] %v38
  %80 = vst [vmem:[%s49] ss:$4 sm:$0xff] %v39
  %v81 = vld.sshfl [vmem:[#allocation1] sm:$0xff pattern:$0x73625140]
  %v82 = vld.sshfl [vmem:[#allocation1 + $0x8] sm:$0xff pattern:$0x73625140]
  %v83 = vld.sshfl [vmem:[#allocation1 + $0x10] sm:$0xff pattern:$0x73625140]
  %v84 = vld.sshfl [vmem:[#allocation1 + $0x18] sm:$0xff pattern:$0x73625140]
  %v85 = vld.sshfl [vmem:[#allocation1 + $0x20] sm:$0xff pattern:$0x73625140]
  %v86 = vld.sshfl [vmem:[#allocation1 + $0x28] sm:$0xff pattern:$0x73625140]
  %v87 = vld.sshfl [vmem:[#allocation1 + $0x30] sm:$0xff pattern:$0x73625140]
  %v88 = vld.sshfl [vmem:[#allocation1 + $0x38] sm:$0xff pattern:$0x73625140]
  %v121 = vpack.c.bf16 %v52, %v51
  %v122 = vpack.c.bf16 %v54, %v53
  %v123 = vpack.c.bf16 %v56, %v55
  %v124 = vpack.c.bf16 %v58, %v57
  %v125 = vpack.c.bf16 %v62, %v61
  %v126 = vpack.c.bf16 %v64, %v63
  %v127 = vpack.c.bf16 %v66, %v65
  %v128 = vpack.c.bf16 %v68, %v67
  %v129 = vpack.c.bf16 %v72, %v71
  %v130 = vpack.c.bf16 %v74, %v73
  %v131 = vpack.c.bf16 %v76, %v75
  %v132 = vpack.c.bf16 %v78, %v77
  %v133 = vpack.c.bf16 %v82, %v81
  %v134 = vpack.c.bf16 %v84, %v83
  %v135 = vpack.c.bf16 %v86, %v85
  %v136 = vpack.c.bf16 %v88, %v87
  %v137 = vunpack.c.l.bf16 %v121
  %v138 = vunpack.c.h.bf16 %v121
  %v139 = vunpack.c.l.bf16 %v122
  %v140 = vunpack.c.h.bf16 %v122
  %v141 = vunpack.c.l.bf16 %v125
  %v142 = vunpack.c.h.bf16 %v125
  %v143 = vunpack.c.l.bf16 %v126
  %v144 = vunpack.c.h.bf16 %v126
  %v145 = vunpack.c.l.bf16 %v129
  %v146 = vunpack.c.h.bf16 %v129
  %v147 = vunpack.c.l.bf16 %v130
  %v148 = vunpack.c.h.bf16 %v130
  %v149 = vunpack.c.l.bf16 %v133
  %v150 = vunpack.c.h.bf16 %v133
  %v151 = vunpack.c.l.bf16 %v134
  %v152 = vunpack.c.h.bf16 %v134
  %v153 = vunpack.c.l.bf16 %v123
  %v154 = vunpack.c.h.bf16 %v123
  %v155 = vunpack.c.l.bf16 %v124
  %v156 = vunpack.c.h.bf16 %v124
  %v157 = vunpack.c.l.bf16 %v127
  %v158 = vunpack.c.h.bf16 %v127
  %v159 = vunpack.c.l.bf16 %v128
  %v160 = vunpack.c.h.bf16 %v128
  %v161 = vunpack.c.l.bf16 %v131
  %v162 = vunpack.c.h.bf16 %v131
  %v163 = vunpack.c.l.bf16 %v132
  %v164 = vunpack.c.h.bf16 %v132
  %v165 = vunpack.c.l.bf16 %v135
  %v166 = vunpack.c.h.bf16 %v135
  %v167 = vunpack.c.l.bf16 %v136
  %v168 = vunpack.c.h.bf16 %v136
  %v169 = vmax.f32 %v137, %v153
  %v170 = vmax.f32 %v138, %v154
  %v171 = vmax.f32 %v139, %v155
  %v172 = vmax.f32 %v140, %v156
  %v173 = vmax.f32 %v141, %v157
  %v174 = vmax.f32 %v142, %v158
  %v175 = vmax.f32 %v143, %v159
  %v176 = vmax.f32 %v144, %v160
  %v177 = vmax.f32 %v145, %v161
  %v178 = vmax.f32 %v146, %v162
  %v179 = vmax.f32 %v147, %v163
  %v180 = vmax.f32 %v148, %v164
  %v181 = vmax.f32 %v149, %v165
  %v182 = vmax.f32 %v150, %v166
  %v183 = vmax.f32 %v151, %v167
  %v184 = vmax.f32 %v152, %v168
  %v185 = vpack.c.bf16 %v170, %v169
  %v186 = vpack.c.bf16 %v172, %v171
  %v187 = vpack.c.bf16 %v174, %v173
  %v188 = vpack.c.bf16 %v176, %v175
  %v189 = vpack.c.bf16 %v178, %v177
  %v190 = vpack.c.bf16 %v180, %v179
  %v191 = vpack.c.bf16 %v182, %v181
  %v192 = vpack.c.bf16 %v184, %v183
  %v201 = vrot.slane %v185, 3
  %v202 = vrot.slane %v186, 6
  %v203 = vrot.slane %v186, 1
  %v204 = vrot.slane %v187, 3
  %v205 = vrot.slane %v188, 6
  %v206 = vrot.slane %v188, 1
  %v207 = vrot.slane %v189, 3
  %v208 = vrot.slane %v190, 6
  %v209 = vrot.slane %v190, 1
  %v210 = vrot.slane %v191, 3
  %v211 = vrot.slane %v192, 6
  %v212 = vrot.slane %v192, 1
  %vm213 = vcmask 1040384
  %v216 = vsel %vm213, %v185, %v201
  %vm217 = vcmask 1042434
  %v220 = vsel %vm217, %v202, %v203
  %vm221 = vcmask 1041408
  %v222 = vsel %vm221, %v216, %v220
  %v225 = vsel %vm213, %v187, %v204
  %v228 = vsel %vm217, %v205, %v206
  %v229 = vsel %vm221, %v225, %v228
  %v232 = vsel %vm213, %v189, %v207
  %v235 = vsel %vm217, %v208, %v209
  %v236 = vsel %vm221, %v232, %v235
  %v239 = vsel %vm213, %v191, %v210
  %v242 = vsel %vm217, %v211, %v212
  %v243 = vsel %vm221, %v239, %v242
  %248 = vst [vmem:[%s1] sm:$0xf] %v222
  %249 = vst [vmem:[%s1 + $0x4] sm:$0xf] %v229
  %250 = vst [vmem:[%s1 + $0x8] sm:$0xf] %v236
  %251 = vst [vmem:[%s1 + $0xc] sm:$0xf] %v243
  // Predicated region
  $region6: #{vgg_cifar100_forward.12} parent=0 // pred_check
    _
  $region7: #{vgg_cifar100_forward.12} parent=0 // pred_check_branch
    %253 = sbr.rel (0) target = $region9
  $region8: #{vgg_cifar100_forward.12} parent=0 // pred_region
    _
  $region9: #{vgg_cifar100_forward.12} parent=0 // pred_fallthru
    _
  // Predicated region
  $region10: #{vgg_cifar100_forward.12} parent=0 // pred_check
    _
  $region11: #{vgg_cifar100_forward.12} parent=0 // pred_check_branch
    %255 = sbr.rel (0) target = $region13
  $region12: #{vgg_cifar100_forward.12} parent=0 // pred_region
    _
  $region13: #{vgg_cifar100_forward.12} parent=0 // pred_fallthru
    _

// kernel: vgg_cifar100_forward.11
$region0: #{vgg_cifar100_forward.11}
  #allocation0 [shape = 'u32[]', space=smem, size = 0x4, offset = 0x4, fixed_abs, tag = 'smem constant byte address 0x4 - core index']
  #allocation1 [shape = 'u32[72,128]{1,0:T(1,128)}', space=vmem, size = 0x9000, scoped, tag = 'internal scratch']
  #allocation2 [shape = 'f32[32,256]{1,0:T(8,128)}', space=vmem, size = 0x8000, scoped, tag = 'scratch operand']
  %s0 = inlined_call_operand.vmem [shape: bf16[32,640], index: 0, kind: input, shape index: {}]
  %s1 = inlined_call_operand.vmem [shape: bf16[640,512], index: 1, kind: input, shape index: {}]
  %s2 = inlined_call_operand.vmem [shape: f32[1,512], index: 2, kind: input, shape index: {}]
  %s3 = inlined_call_operand.vmem [shape: f32[1,512], index: 3, kind: input, shape index: {}]
  %s4 = inlined_call_operand.vmem [shape: bf16[32,512], index: 4, kind: output, shape index: {}]
  %s5 = sld [smem:[#allocation0]]
  $region129: #{vgg_cifar100_forward.11} parent=0
    _
  %s7 = ssub.s32 1, %s5
  %s8 = scalar_select 0, %s7, %s5
  $region1: #{vgg_cifar100_forward.11} parent=0
    #allocation3 [shape = 'u8[655360]{0}', space=vmem, size = 0xa0000, scoped, tag = 'input window, operand 1']
    #allocation4 [shape = 'u8[32768]{0}', space=vmem, size = 0x8000, scoped, tag = 'output window, operand 0']
    loop: start=0, step=1, limit=4
    $region2: #{vgg_cifar100_forward.11} parent=1 // loop_pre_header
      _
    $region3: #{vgg_cifar100_forward.11} parent=1 // loop_header
      %s10 = sphi 0, %s14
      %p11 = scmp.ge.s32.totalorder %s10, 4
      %s17 = sphi 0, %s36
      %s18 = sphi 0, %s32
      %s19 = sphi 0, %s28
      %s20 = sphi 0, %s17
      %s21 = sphi 0, %s18
      %s22 = sphi 0, %s19
      %s23 = sphi 0, %s20
      %s24 = sphi 0, %s21
      %s25 = sphi 0, %s22
      %s41 = sphi 0, %s43
      %s44 = sphi 0, %s41
      %s45 = sphi 0, %s44
      %s61 = sphi 0, %s45
      %s69 = sphi 0, %s71
      %s72 = sphi 0, %s69
      %s73 = sphi 0, %s72
      %s89 = sphi 0, %s73
      %s95 = sphi 0, %s97
      %s98 = sphi 0, %s95
      %s99 = sphi 0, %s98
      %s115 = sphi 0, %s99
      %s121 = sphi 0, %s123
      %s124 = sphi 0, %s121
      %s125 = sphi 0, %s124
      %s141 = sphi 0, %s125
      %s149 = sphi 0, %s151
      %s152 = sphi 0, %s149
      %s153 = sphi 0, %s152
      %s169 = sphi 0, %s153
    $region4: #{vgg_cifar100_forward.11} parent=1 // loop_header_branch
      %13 = sbr.rel (%p11) target = $region8
    $region5: #{vgg_cifar100_forward.11} parent=1 // loop_body
      %s15 = ssub.s32 %s10, 1
      %s16 = ssub.s32 %s10, 2
      %s26 = sadd.s32 1, %s19
      %p27 = scmp.ge.s32.totalorder %s26, 1
      %s28 = scalar_select %p27, 0, %s26
      %s29 = sadd.s32 1, %s18
      %s30 = scalar_select %p27, %s29, %s18
      %p31 = scmp.ge.s32.totalorder %s30, 2
      %s32 = scalar_select %p31, 0, %s30
      %s33 = sadd.s32 1, %s17
      %s34 = scalar_select %p31, %s33, %s17
      %p35 = scmp.ge.s32.totalorder %s34, 1
      %s36 = scalar_select %p35, 0, %s34
      %s37 = ssub.s32 %s17, %s36
      %s38 = ssub.s32 %s19, %s28
      %s39 = sor.u32 %s37, %s38
      %p40 = scmp.eq.s32.totalorder %s39, 0
      %s42 = sadd.s32 %s41, 1
      %s43 = scalar_select %p40, %s41, %s42
      %p46 = pneg %p40
      %p47 = scmp.eq.s32.totalorder %s10, 1
      %p48 = por %p46, %p47
      %p49 = scmp.ne.s32.totalorder %s41, %s44
      %p50 = scmp.eq.s32.totalorder %s10, 0
      %p51 = por %p49, %p50
      %p52 = scmp.ne.s32.totalorder %s41, %s44
      %p53 = scmp.eq.s32.totalorder %s15, 1
      %p54 = por %p52, %p53
      %p55 = scmp.ne.s32.totalorder %s44, %s45
      %p56 = scmp.eq.s32.totalorder %s15, 0
      %p57 = por %p55, %p56
      %p58 = scmp.ne.s32.totalorder %s44, %s45
      %p59 = scmp.eq.s32.totalorder %s16, 1
      %p60 = por %p58, %p59
      %p62 = scmp.ne.s32.totalorder %s45, %s61
      %p63 = scmp.eq.s32.totalorder %s16, 0
      %p64 = por %p62, %p63
      %s65 = ssub.s32 %s19, %s28
      %s66 = ssub.s32 %s18, %s32
      %s67 = sor.u32 %s65, %s66
      %p68 = scmp.eq.s32.totalorder %s67, 0
      %s70 = sadd.s32 %s69, 1
      %s71 = scalar_select %p68, %s69, %s70
      %p74 = pneg %p68
      %p75 = scmp.eq.s32.totalorder %s10, 1
      %p76 = por %p74, %p75
      %p77 = scmp.ne.s32.totalorder %s69, %s72
      %p78 = scmp.eq.s32.totalorder %s10, 0
      %p79 = por %p77, %p78
      %p80 = scmp.ne.s32.totalorder %s69, %s72
      %p81 = scmp.eq.s32.totalorder %s15, 1
      %p82 = por %p80, %p81
      %p83 = scmp.ne.s32.totalorder %s72, %s73
      %p84 = scmp.eq.s32.totalorder %s15, 0
      %p85 = por %p83, %p84
      %p86 = scmp.ne.s32.totalorder %s72, %s73
      %p87 = scmp.eq.s32.totalorder %s16, 1
      %p88 = por %p86, %p87
      %p90 = scmp.ne.s32.totalorder %s73, %s89
      %p91 = scmp.eq.s32.totalorder %s16, 0
      %p92 = por %p90, %p91
      %s93 = ssub.s32 %s18, %s32
      %p94 = scmp.eq.s32.totalorder %s93, 0
      %s96 = sadd.s32 %s95, 1
      %s97 = scalar_select %p94, %s95, %s96
      %p100 = pneg %p94
      %p101 = scmp.eq.s32.totalorder %s10, 1
      %p102 = por %p100, %p101
      %p103 = scmp.ne.s32.totalorder %s95, %s98
      %p104 = scmp.eq.s32.totalorder %s10, 0
      %p105 = por %p103, %p104
      %p106 = scmp.ne.s32.totalorder %s95, %s98
      %p107 = scmp.eq.s32.totalorder %s15, 1
      %p108 = por %p106, %p107
      %p109 = scmp.ne.s32.totalorder %s98, %s99
      %p110 = scmp.eq.s32.totalorder %s15, 0
      %p111 = por %p109, %p110
      %p112 = scmp.ne.s32.totalorder %s98, %s99
      %p113 = scmp.eq.s32.totalorder %s16, 1
      %p114 = por %p112, %p113
      %p116 = scmp.ne.s32.totalorder %s99, %s115
      %p117 = scmp.eq.s32.totalorder %s16, 0
      %p118 = por %p116, %p117
      %s119 = ssub.s32 %s18, %s32
      %p120 = scmp.eq.s32.totalorder %s119, 0
      %s122 = sadd.s32 %s121, 1
      %s123 = scalar_select %p120, %s121, %s122
      %p126 = pneg %p120
      %p127 = scmp.eq.s32.totalorder %s10, 1
      %p128 = por %p126, %p127
      %p129 = scmp.ne.s32.totalorder %s121, %s124
      %p130 = scmp.eq.s32.totalorder %s10, 0
      %p131 = por %p129, %p130
      %p132 = scmp.ne.s32.totalorder %s121, %s124
      %p133 = scmp.eq.s32.totalorder %s15, 1
      %p134 = por %p132, %p133
      %p135 = scmp.ne.s32.totalorder %s124, %s125
      %p136 = scmp.eq.s32.totalorder %s15, 0
      %p137 = por %p135, %p136
      %p138 = scmp.ne.s32.totalorder %s124, %s125
      %p139 = scmp.eq.s32.totalorder %s16, 1
      %p140 = por %p138, %p139
      %p142 = scmp.ne.s32.totalorder %s125, %s141
      %p143 = scmp.eq.s32.totalorder %s16, 0
      %p144 = por %p142, %p143
      %s145 = ssub.s32 %s17, %s36
      %s146 = ssub.s32 %s18, %s32
      %s147 = sor.u32 %s145, %s146
      %p148 = scmp.eq.s32.totalorder %s147, 0
      %s150 = sadd.s32 %s149, 1
      %s151 = scalar_select %p148, %s149, %s150
      %p154 = pneg %p148
      %p155 = scmp.eq.s32.totalorder %s10, 1
      %p156 = por %p154, %p155
      %p157 = scmp.ne.s32.totalorder %s149, %s152
      %p158 = scmp.eq.s32.totalorder %s10, 0
      %p159 = por %p157, %p158
      %p160 = scmp.ne.s32.totalorder %s149, %s152
      %p161 = scmp.eq.s32.totalorder %s15, 1
      %p162 = por %p160, %p161
      %p163 = scmp.ne.s32.totalorder %s152, %s153
      %p164 = scmp.eq.s32.totalorder %s15, 0
      %p165 = por %p163, %p164
      %p166 = scmp.ne.s32.totalorder %s152, %s153
      %p167 = scmp.eq.s32.totalorder %s16, 1
      %p168 = por %p166, %p167
      %p170 = scmp.ne.s32.totalorder %s153, %s169
      %p171 = scmp.eq.s32.totalorder %s16, 0
      %p172 = por %p170, %p171
      %p173 = scmp.le.s32.totalorder 1, %s10
      %p174 = scmp.lt.s32.totalorder %s10, 3
      %p175 = pnand %p173, %p174
      %p176 = pneg %p175
      // Predicated region
      $region9: #{vgg_cifar100_forward.11} parent=5 // pred_check
        _
      $region10: #{vgg_cifar100_forward.11} parent=5 // pred_check_branch
        %178 = sbr.rel (%p175) target = $region12
      $region11: #{vgg_cifar100_forward.11} parent=5 // pred_region
        %s179 = ssub.s32 %s10, 1
        // Predicated region
        $region13: #{vgg_cifar100_forward.11} parent=11 // pred_check
          %p180 = pneg %p57
        $region14: #{vgg_cifar100_forward.11} parent=11 // pred_check_branch
          %182 = sbr.rel (%p180) target = $region16
        $region15: #{vgg_cifar100_forward.11} parent=11 // pred_region
          %s183 = smul.u32 4, %s20
          %s184 = smul.u32 5, %s22
          %p185 = scmp.lt.s32.totalorder %s183, 3
          %s186 = scalar_select %p185, %s183, 3
          %p187 = scmp.lt.s32.totalorder %s184, 4
          %s188 = scalar_select %p187, %s184, 4
          %s189 = smul.addr %s186, 5
          %s190 = sadd.s32 %s188, %s189
          %s191 = smul.addr %s190, 4
          %s192 = scalar_lea.vmem %s0, %s191
          %s193 = smul.u32 4, %s20
          %s194 = smul.u32 5, %s22
        $region16: #{vgg_cifar100_forward.11} parent=11 // pred_fallthru
          _
      $region12: #{vgg_cifar100_forward.11} parent=5 // pred_fallthru
        _
      %p195 = scmp.lt.s32.totalorder %s10, 2
      // Predicated region
      $region17: #{vgg_cifar100_forward.11} parent=5 // pred_check
        %p196 = pneg %p195
      $region18: #{vgg_cifar100_forward.11} parent=5 // pred_check_branch
        %198 = sbr.rel (%p196) target = $region20
      $region19: #{vgg_cifar100_forward.11} parent=5 // pred_region
        // Predicated region
        $region21: #{vgg_cifar100_forward.11} parent=19 // pred_check
          %p199 = pneg %p79
        $region22: #{vgg_cifar100_forward.11} parent=19 // pred_check_branch
          %201 = sbr.rel (%p199) target = $region24
        $region23: #{vgg_cifar100_forward.11} parent=19 // pred_region
          %s202 = sand.u32 %s69, 1
          %s203 = sand.u32 %s69, 1
          %s204 = smul.addr %s203, 640
          %s205 = scalar_lea.vmem [#allocation3], %s204
          %s206 = smul.u32 80, %s19
          %s207 = smul.u32 2, %s18
          %s208 = smul.addr %s206, 4
          %s209 = sadd.s32 %s207, %s208
          %s210 = smul.addr %s209, 4
          %s211 = scalar_lea.vmem %s1, %s210
          // Predicated region
          $region25: #{vgg_cifar100_forward.11} parent=23 // pred_check
            _
          $region26: #{vgg_cifar100_forward.11} parent=23 // pred_check_branch
            %213 = sbr.rel (0) target = $region28
          $region27: #{vgg_cifar100_forward.11} parent=23 // pred_region
            // Predicated region
            $region29: #{vgg_cifar100_forward.11} parent=27 // pred_check
              _
            $region30: #{vgg_cifar100_forward.11} parent=27 // pred_check_branch
              %215 = sbr.rel (0) target = $region32
            $region31: #{vgg_cifar100_forward.11} parent=27 // pred_region
              // Predicated region
              $region44: #{vgg_cifar100_forward.11} parent=31 // pred_check
                _
              $region45: #{vgg_cifar100_forward.11} parent=31 // pred_check_branch
                %389 = sbr.rel (0) target = $region47
              $region46: #{vgg_cifar100_forward.11} parent=31 // pred_region
                loop: start=0, step=1, limit=1
                $region48: #{vgg_cifar100_forward.11} parent=46 // loop_pre_header
                  _
                $region49: #{vgg_cifar100_forward.11} parent=46 // loop_header
                  %s391 = sphi 0, %s395
                  %p392 = scmp.ge.s32.totalorder %s391, 1
                  %s396 = sphi %s211, %s211
                  %s397 = sphi %s205, %s205
                $region50: #{vgg_cifar100_forward.11} parent=46 // loop_header_branch
                  %394 = sbr.rel (%p392) target = $region54
                $region51: #{vgg_cifar100_forward.11} parent=46 // loop_body
                  %v398 = vld [vmem:[%s396] sm:$0xff]
                  %399 = vst [vmem:[%s397] sm:$0xff] %v398
                  %v400 = vld [vmem:[%s396 + $0x10] sm:$0xff]
                  %401 = vst [vmem:[%s397 + $0x8] sm:$0xff] %v400
                  %v402 = vld [vmem:[%s396 + $0x20] sm:$0xff]
                  %403 = vst [vmem:[%s397 + $0x10] sm:$0xff] %v402
                  %v404 = vld [vmem:[%s396 + $0x30] sm:$0xff]
                  %405 = vst [vmem:[%s397 + $0x18] sm:$0xff] %v404
                  %v406 = vld [vmem:[%s396 + $0x40] sm:$0xff]
                  %407 = vst [vmem:[%s397 + $0x20] sm:$0xff] %v406
                  %v408 = vld [vmem:[%s396 + $0x50] sm:$0xff]
                  %409 = vst [vmem:[%s397 + $0x28] sm:$0xff] %v408
                  %v410 = vld [vmem:[%s396 + $0x60] sm:$0xff]
                  %411 = vst [vmem:[%s397 + $0x30] sm:$0xff] %v410
                  %v412 = vld [vmem:[%s396 + $0x70] sm:$0xff]
                  %413 = vst [vmem:[%s397 + $0x38] sm:$0xff] %v412
                  %v414 = vld [vmem:[%s396 + $0x80] sm:$0xff]
                  %415 = vst [vmem:[%s397 + $0x40] sm:$0xff] %v414
                  %v416 = vld [vmem:[%s396 + $0x90] sm:$0xff]
                  %417 = vst [vmem:[%s397 + $0x48] sm:$0xff] %v416
                  %v418 = vld [vmem:[%s396 + $0xa0] sm:$0xff]
                  %419 = vst [vmem:[%s397 + $0x50] sm:$0xff] %v418
                  %v420 = vld [vmem:[%s396 + $0xb0] sm:$0xff]
                  %421 = vst [vmem:[%s397 + $0x58] sm:$0xff] %v420
                  %v422 = vld [vmem:[%s396 + $0xc0] sm:$0xff]
                  %423 = vst [vmem:[%s397 + $0x60] sm:$0xff] %v422
                  %v424 = vld [vmem:[%s396 + $0xd0] sm:$0xff]
                  %425 = vst [vmem:[%s397 + $0x68] sm:$0xff] %v424
                  %v426 = vld [vmem:[%s396 + $0xe0] sm:$0xff]
                  %427 = vst [vmem:[%s397 + $0x70] sm:$0xff] %v426
                  %v428 = vld [vmem:[%s396 + $0xf0] sm:$0xff]
                  %429 = vst [vmem:[%s397 + $0x78] sm:$0xff] %v428
                  %v430 = vld [vmem:[%s396 + $0x100] sm:$0xff]
                  %431 = vst [vmem:[%s397 + $0x80] sm:$0xff] %v430
                  %v432 = vld [vmem:[%s396 + $0x110] sm:$0xff]
                  %433 = vst [vmem:[%s397 + $0x88] sm:$0xff] %v432
                  %v434 = vld [vmem:[%s396 + $0x120] sm:$0xff]
                  %435 = vst [vmem:[%s397 + $0x90] sm:$0xff] %v434
                  %v436 = vld [vmem:[%s396 + $0x130] sm:$0xff]
                  %437 = vst [vmem:[%s397 + $0x98] sm:$0xff] %v436
                  %v438 = vld [vmem:[%s396 + $0x140] sm:$0xff]
                  %439 = vst [vmem:[%s397 + $0xa0] sm:$0xff] %v438
                  %v440 = vld [vmem:[%s396 + $0x150] sm:$0xff]
                  %441 = vst [vmem:[%s397 + $0xa8] sm:$0xff] %v440
                  %v442 = vld [vmem:[%s396 + $0x160] sm:$0xff]
                  %443 = vst [vmem:[%s397 + $0xb0] sm:$0xff] %v442
                  %v444 = vld [vmem:[%s396 + $0x170] sm:$0xff]
                  %445 = vst [vmem:[%s397 + $0xb8] sm:$0xff] %v444
                  %v446 = vld [vmem:[%s396 + $0x180] sm:$0xff]
                  %447 = vst [vmem:[%s397 + $0xc0] sm:$0xff] %v446
                  %v448 = vld [vmem:[%s396 + $0x190] sm:$0xff]
                  %449 = vst [vmem:[%s397 + $0xc8] sm:$0xff] %v448
                  %v450 = vld [vmem:[%s396 + $0x1a0] sm:$0xff]
                  %451 = vst [vmem:[%s397 + $0xd0] sm:$0xff] %v450
                  %v452 = vld [vmem:[%s396 + $0x1b0] sm:$0xff]
                  %453 = vst [vmem:[%s397 + $0xd8] sm:$0xff] %v452
                  %v454 = vld [vmem:[%s396 + $0x1c0] sm:$0xff]
                  %455 = vst [vmem:[%s397 + $0xe0] sm:$0xff] %v454
                  %v456 = vld [vmem:[%s396 + $0x1d0] sm:$0xff]
                  %457 = vst [vmem:[%s397 + $0xe8] sm:$0xff] %v456
                  %v458 = vld [vmem:[%s396 + $0x1e0] sm:$0xff]
                  %459 = vst [vmem:[%s397 + $0xf0] sm:$0xff] %v458
                  %v460 = vld [vmem:[%s396 + $0x1f0] sm:$0xff]
                  %461 = vst [vmem:[%s397 + $0xf8] sm:$0xff] %v460
                  %v462 = vld [vmem:[%s396 + $0x200] sm:$0xff]
                  %463 = vst [vmem:[%s397 + $0x100] sm:$0xff] %v462
                  %v464 = vld [vmem:[%s396 + $0x210] sm:$0xff]
                  %465 = vst [vmem:[%s397 + $0x108] sm:$0xff] %v464
                  %v466 = vld [vmem:[%s396 + $0x220] sm:$0xff]
                  %467 = vst [vmem:[%s397 + $0x110] sm:$0xff] %v466
                  %v468 = vld [vmem:[%s396 + $0x230] sm:$0xff]
                  %469 = vst [vmem:[%s397 + $0x118] sm:$0xff] %v468
                  %v470 = vld [vmem:[%s396 + $0x240] sm:$0xff]
                  %471 = vst [vmem:[%s397 + $0x120] sm:$0xff] %v470
                  %v472 = vld [vmem:[%s396 + $0x250] sm:$0xff]
                  %473 = vst [vmem:[%s397 + $0x128] sm:$0xff] %v472
                  %v474 = vld [vmem:[%s396 + $0x260] sm:$0xff]
                  %475 = vst [vmem:[%s397 + $0x130] sm:$0xff] %v474
                  %v476 = vld [vmem:[%s396 + $0x270] sm:$0xff]
                  %477 = vst [vmem:[%s397 + $0x138] sm:$0xff] %v476
                  %v478 = vld [vmem:[%s396 + $0x280] sm:$0xff]
                  %479 = vst [vmem:[%s397 + $0x140] sm:$0xff] %v478
                  %v480 = vld [vmem:[%s396 + $0x290] sm:$0xff]
                  %481 = vst [vmem:[%s397 + $0x148] sm:$0xff] %v480
                  %v482 = vld [vmem:[%s396 + $0x2a0] sm:$0xff]
                  %483 = vst [vmem:[%s397 + $0x150] sm:$0xff] %v482
                  %v484 = vld [vmem:[%s396 + $0x2b0] sm:$0xff]
                  %485 = vst [vmem:[%s397 + $0x158] sm:$0xff] %v484
                  %v486 = vld [vmem:[%s396 + $0x2c0] sm:$0xff]
                  %487 = vst [vmem:[%s397 + $0x160] sm:$0xff] %v486
                  %v488 = vld [vmem:[%s396 + $0x2d0] sm:$0xff]
                  %489 = vst [vmem:[%s397 + $0x168] sm:$0xff] %v488
                  %v490 = vld [vmem:[%s396 + $0x2e0] sm:$0xff]
                  %491 = vst [vmem:[%s397 + $0x170] sm:$0xff] %v490
                  %v492 = vld [vmem:[%s396 + $0x2f0] sm:$0xff]
                  %493 = vst [vmem:[%s397 + $0x178] sm:$0xff] %v492
                  %v494 = vld [vmem:[%s396 + $0x300] sm:$0xff]
                  %495 = vst [vmem:[%s397 + $0x180] sm:$0xff] %v494
                  %v496 = vld [vmem:[%s396 + $0x310] sm:$0xff]
                  %497 = vst [vmem:[%s397 + $0x188] sm:$0xff] %v496
                  %v498 = vld [vmem:[%s396 + $0x320] sm:$0xff]
                  %499 = vst [vmem:[%s397 + $0x190] sm:$0xff] %v498
                  %v500 = vld [vmem:[%s396 + $0x330] sm:$0xff]
                  %501 = vst [vmem:[%s397 + $0x198] sm:$0xff] %v500
                  %v502 = vld [vmem:[%s396 + $0x340] sm:$0xff]
                  %503 = vst [vmem:[%s397 + $0x1a0] sm:$0xff] %v502
                  %v504 = vld [vmem:[%s396 + $0x350] sm:$0xff]
                  %505 = vst [vmem:[%s397 + $0x1a8] sm:$0xff] %v504
                  %v506 = vld [vmem:[%s396 + $0x360] sm:$0xff]
                  %507 = vst [vmem:[%s397 + $0x1b0] sm:$0xff] %v506
                  %v508 = vld [vmem:[%s396 + $0x370] sm:$0xff]
                  %509 = vst [vmem:[%s397 + $0x1b8] sm:$0xff] %v508
                  %v510 = vld [vmem:[%s396 + $0x380] sm:$0xff]
                  %511 = vst [vmem:[%s397 + $0x1c0] sm:$0xff] %v510
                  %v512 = vld [vmem:[%s396 + $0x390] sm:$0xff]
                  %513 = vst [vmem:[%s397 + $0x1c8] sm:$0xff] %v512
                  %v514 = vld [vmem:[%s396 + $0x3a0] sm:$0xff]
                  %515 = vst [vmem:[%s397 + $0x1d0] sm:$0xff] %v514
                  %v516 = vld [vmem:[%s396 + $0x3b0] sm:$0xff]
                  %517 = vst [vmem:[%s397 + $0x1d8] sm:$0xff] %v516
                  %v518 = vld [vmem:[%s396 + $0x3c0] sm:$0xff]
                  %519 = vst [vmem:[%s397 + $0x1e0] sm:$0xff] %v518
                  %v520 = vld [vmem:[%s396 + $0x3d0] sm:$0xff]
                  %521 = vst [vmem:[%s397 + $0x1e8] sm:$0xff] %v520
                  %v522 = vld [vmem:[%s396 + $0x3e0] sm:$0xff]
                  %523 = vst [vmem:[%s397 + $0x1f0] sm:$0xff] %v522
                  %v524 = vld [vmem:[%s396 + $0x3f0] sm:$0xff]
                  %525 = vst [vmem:[%s397 + $0x1f8] sm:$0xff] %v524
                  %v526 = vld [vmem:[%s396 + $0x400] sm:$0xff]
                  %527 = vst [vmem:[%s397 + $0x200] sm:$0xff] %v526
                  %v528 = vld [vmem:[%s396 + $0x410] sm:$0xff]
                  %529 = vst [vmem:[%s397 + $0x208] sm:$0xff] %v528
                  %v530 = vld [vmem:[%s396 + $0x420] sm:$0xff]
                  %531 = vst [vmem:[%s397 + $0x210] sm:$0xff] %v530
                  %v532 = vld [vmem:[%s396 + $0x430] sm:$0xff]
                  %533 = vst [vmem:[%s397 + $0x218] sm:$0xff] %v532
                  %v534 = vld [vmem:[%s396 + $0x440] sm:$0xff]
                  %535 = vst [vmem:[%s397 + $0x220] sm:$0xff] %v534
                  %v536 = vld [vmem:[%s396 + $0x450] sm:$0xff]
                  %537 = vst [vmem:[%s397 + $0x228] sm:$0xff] %v536
                  %v538 = vld [vmem:[%s396 + $0x460] sm:$0xff]
                  %539 = vst [vmem:[%s397 + $0x230] sm:$0xff] %v538
                  %v540 = vld [vmem:[%s396 + $0x470] sm:$0xff]
                  %541 = vst [vmem:[%s397 + $0x238] sm:$0xff] %v540
                  %v542 = vld [vmem:[%s396 + $0x480] sm:$0xff]
                  %543 = vst [vmem:[%s397 + $0x240] sm:$0xff] %v542
                  %v544 = vld [vmem:[%s396 + $0x490] sm:$0xff]
                  %545 = vst [vmem:[%s397 + $0x248] sm:$0xff] %v544
                  %v546 = vld [vmem:[%s396 + $0x4a0] sm:$0xff]
                  %547 = vst [vmem:[%s397 + $0x250] sm:$0xff] %v546
                  %v548 = vld [vmem:[%s396 + $0x4b0] sm:$0xff]
                  %549 = vst [vmem:[%s397 + $0x258] sm:$0xff] %v548
                  %v550 = vld [vmem:[%s396 + $0x4c0] sm:$0xff]
                  %551 = vst [vmem:[%s397 + $0x260] sm:$0xff] %v550
                  %v552 = vld [vmem:[%s396 + $0x4d0] sm:$0xff]
                  %553 = vst [vmem:[%s397 + $0x268] sm:$0xff] %v552
                  %v554 = vld [vmem:[%s396 + $0x4e0] sm:$0xff]
                  %555 = vst [vmem:[%s397 + $0x270] sm:$0xff] %v554
                  %v556 = vld [vmem:[%s396 + $0x4f0] sm:$0xff]
                  %557 = vst [vmem:[%s397 + $0x278] sm:$0xff] %v556
                $region52: #{vgg_cifar100_forward.11} parent=46 // loop_footer
                  %s395 = sadd.s32 1, %s391
                $region53: #{vgg_cifar100_forward.11} parent=46 // loop_footer_branch
                  %390 = sbr.rel target = $region49
                $region54: #{vgg_cifar100_forward.11} parent=46 // loop_exit
                  _
              $region47: #{vgg_cifar100_forward.11} parent=31 // pred_fallthru
                _
              // Predicated region
              $region55: #{vgg_cifar100_forward.11} parent=31 // pred_check
                _
              $region56: #{vgg_cifar100_forward.11} parent=31 // pred_check_branch
                %559 = sbr.rel target = $region58
              $region57: #{vgg_cifar100_forward.11} parent=31 // pred_region
                _
              $region58: #{vgg_cifar100_forward.11} parent=31 // pred_fallthru
                _
            $region32: #{vgg_cifar100_forward.11} parent=27 // pred_fallthru
              _
            // Predicated region
            $region33: #{vgg_cifar100_forward.11} parent=27 // pred_check
              _
            $region34: #{vgg_cifar100_forward.11} parent=27 // pred_check_branch
              %217 = sbr.rel target = $region36
            $region35: #{vgg_cifar100_forward.11} parent=27 // pred_region
              %s219 = ssub.s32 256, 1
              loop: start=0, step=1, limit=1
              $region37: #{vgg_cifar100_forward.11} parent=35 // loop_pre_header
                _
              $region38: #{vgg_cifar100_forward.11} parent=35 // loop_header
                %s221 = sphi 0, %s225
                %p222 = scmp.ge.s32.totalorder %s221, 1
                %s226 = sphi %s211, %s211
                %s227 = sphi %s205, %s205
              $region39: #{vgg_cifar100_forward.11} parent=35 // loop_header_branch
                %224 = sbr.rel (%p222) target = $region43
              $region40: #{vgg_cifar100_forward.11} parent=35 // loop_body
                %v228 = vld [vmem:[%s226] sm:%s219]
                %229 = vst [vmem:[%s227] sm:%s219] %v228
                %v230 = vld [vmem:[%s226 + $0x10] sm:%s219]
                %231 = vst [vmem:[%s227 + $0x8] sm:%s219] %v230
                %v232 = vld [vmem:[%s226 + $0x20] sm:%s219]
                %233 = vst [vmem:[%s227 + $0x10] sm:%s219] %v232
                %v234 = vld [vmem:[%s226 + $0x30] sm:%s219]
                %235 = vst [vmem:[%s227 + $0x18] sm:%s219] %v234
                %v236 = vld [vmem:[%s226 + $0x40] sm:%s219]
                %237 = vst [vmem:[%s227 + $0x20] sm:%s219] %v236
                %v238 = vld [vmem:[%s226 + $0x50] sm:%s219]
                %239 = vst [vmem:[%s227 + $0x28] sm:%s219] %v238
                %v240 = vld [vmem:[%s226 + $0x60] sm:%s219]
                %241 = vst [vmem:[%s227 + $0x30] sm:%s219] %v240
                %v242 = vld [vmem:[%s226 + $0x70] sm:%s219]
                %243 = vst [vmem:[%s227 + $0x38] sm:%s219] %v242
                %v244 = vld [vmem:[%s226 + $0x80] sm:%s219]
                %245 = vst [vmem:[%s227 + $0x40] sm:%s219] %v244
                %v246 = vld [vmem:[%s226 + $0x90] sm:%s219]
                %247 = vst [vmem:[%s227 + $0x48] sm:%s219] %v246
                %v248 = vld [vmem:[%s226 + $0xa0] sm:%s219]
                %249 = vst [vmem:[%s227 + $0x50] sm:%s219] %v248
                %v250 = vld [vmem:[%s226 + $0xb0] sm:%s219]
                %251 = vst [vmem:[%s227 + $0x58] sm:%s219] %v250
                %v252 = vld [vmem:[%s226 + $0xc0] sm:%s219]
                %253 = vst [vmem:[%s227 + $0x60] sm:%s219] %v252
                %v254 = vld [vmem:[%s226 + $0xd0] sm:%s219]
                %255 = vst [vmem:[%s227 + $0x68] sm:%s219] %v254
                %v256 = vld [vmem:[%s226 + $0xe0] sm:%s219]
                %257 = vst [vmem:[%s227 + $0x70] sm:%s219] %v256
                %v258 = vld [vmem:[%s226 + $0xf0] sm:%s219]
                %259 = vst [vmem:[%s227 + $0x78] sm:%s219] %v258
                %v260 = vld [vmem:[%s226 + $0x100] sm:%s219]
                %261 = vst [vmem:[%s227 + $0x80] sm:%s219] %v260
                %v262 = vld [vmem:[%s226 + $0x110] sm:%s219]
                %263 = vst [vmem:[%s227 + $0x88] sm:%s219] %v262
                %v264 = vld [vmem:[%s226 + $0x120] sm:%s219]
                %265 = vst [vmem:[%s227 + $0x90] sm:%s219] %v264
                %v266 = vld [vmem:[%s226 + $0x130] sm:%s219]
                %267 = vst [vmem:[%s227 + $0x98] sm:%s219] %v266
                %v268 = vld [vmem:[%s226 + $0x140] sm:%s219]
                %269 = vst [vmem:[%s227 + $0xa0] sm:%s219] %v268
                %v270 = vld [vmem:[%s226 + $0x150] sm:%s219]
                %271 = vst [vmem:[%s227 + $0xa8] sm:%s219] %v270
                %v272 = vld [vmem:[%s226 + $0x160] sm:%s219]
                %273 = vst [vmem:[%s227 + $0xb0] sm:%s219] %v272
                %v274 = vld [vmem:[%s226 + $0x170] sm:%s219]
                %275 = vst [vmem:[%s227 + $0xb8] sm:%s219] %v274
                %v276 = vld [vmem:[%s226 + $0x180] sm:%s219]
                %277 = vst [vmem:[%s227 + $0xc0] sm:%s219] %v276
                %v278 = vld [vmem:[%s226 + $0x190] sm:%s219]
                %279 = vst [vmem:[%s227 + $0xc8] sm:%s219] %v278
                %v280 = vld [vmem:[%s226 + $0x1a0] sm:%s219]
                %281 = vst [vmem:[%s227 + $0xd0] sm:%s219] %v280
                %v282 = vld [vmem:[%s226 + $0x1b0] sm:%s219]
                %283 = vst [vmem:[%s227 + $0xd8] sm:%s219] %v282
                %v284 = vld [vmem:[%s226 + $0x1c0] sm:%s219]
                %285 = vst [vmem:[%s227 + $0xe0] sm:%s219] %v284
                %v286 = vld [vmem:[%s226 + $0x1d0] sm:%s219]
                %287 = vst [vmem:[%s227 + $0xe8] sm:%s219] %v286
                %v288 = vld [vmem:[%s226 + $0x1e0] sm:%s219]
                %289 = vst [vmem:[%s227 + $0xf0] sm:%s219] %v288
                %v290 = vld [vmem:[%s226 + $0x1f0] sm:%s219]
                %291 = vst [vmem:[%s227 + $0xf8] sm:%s219] %v290
                %v292 = vld [vmem:[%s226 + $0x200] sm:%s219]
                %293 = vst [vmem:[%s227 + $0x100] sm:%s219] %v292
                %v294 = vld [vmem:[%s226 + $0x210] sm:%s219]
                %295 = vst [vmem:[%s227 + $0x108] sm:%s219] %v294
                %v296 = vld [vmem:[%s226 + $0x220] sm:%s219]
                %297 = vst [vmem:[%s227 + $0x110] sm:%s219] %v296
                %v298 = vld [vmem:[%s226 + $0x230] sm:%s219]
                %299 = vst [vmem:[%s227 + $0x118] sm:%s219] %v298
                %v300 = vld [vmem:[%s226 + $0x240] sm:%s219]
                %301 = vst [vmem:[%s227 + $0x120] sm:%s219] %v300
                %v302 = vld [vmem:[%s226 + $0x250] sm:%s219]
                %303 = vst [vmem:[%s227 + $0x128] sm:%s219] %v302
                %v304 = vld [vmem:[%s226 + $0x260] sm:%s219]
                %305 = vst [vmem:[%s227 + $0x130] sm:%s219] %v304
                %v306 = vld [vmem:[%s226 + $0x270] sm:%s219]
                %307 = vst [vmem:[%s227 + $0x138] sm:%s219] %v306
                %v308 = vld [vmem:[%s226 + $0x280] sm:%s219]
                %309 = vst [vmem:[%s227 + $0x140] sm:%s219] %v308
                %v310 = vld [vmem:[%s226 + $0x290] sm:%s219]
                %311 = vst [vmem:[%s227 + $0x148] sm:%s219] %v310
                %v312 = vld [vmem:[%s226 + $0x2a0] sm:%s219]
                %313 = vst [vmem:[%s227 + $0x150] sm:%s219] %v312
                %v314 = vld [vmem:[%s226 + $0x2b0] sm:%s219]
                %315 = vst [vmem:[%s227 + $0x158] sm:%s219] %v314
                %v316 = vld [vmem:[%s226 + $0x2c0] sm:%s219]
                %317 = vst [vmem:[%s227 + $0x160] sm:%s219] %v316
                %v318 = vld [vmem:[%s226 + $0x2d0] sm:%s219]
                %319 = vst [vmem:[%s227 + $0x168] sm:%s219] %v318
                %v320 = vld [vmem:[%s226 + $0x2e0] sm:%s219]
                %321 = vst [vmem:[%s227 + $0x170] sm:%s219] %v320
                %v322 = vld [vmem:[%s226 + $0x2f0] sm:%s219]
                %323 = vst [vmem:[%s227 + $0x178] sm:%s219] %v322
                %v324 = vld [vmem:[%s226 + $0x300] sm:%s219]
                %325 = vst [vmem:[%s227 + $0x180] sm:%s219] %v324
                %v326 = vld [vmem:[%s226 + $0x310] sm:%s219]
                %327 = vst [vmem:[%s227 + $0x188] sm:%s219] %v326
                %v328 = vld [vmem:[%s226 + $0x320] sm:%s219]
                %329 = vst [vmem:[%s227 + $0x190] sm:%s219] %v328
                %v330 = vld [vmem:[%s226 + $0x330] sm:%s219]
                %331 = vst [vmem:[%s227 + $0x198] sm:%s219] %v330
                %v332 = vld [vmem:[%s226 + $0x340] sm:%s219]
                %333 = vst [vmem:[%s227 + $0x1a0] sm:%s219] %v332
                %v334 = vld [vmem:[%s226 + $0x350] sm:%s219]
                %335 = vst [vmem:[%s227 + $0x1a8] sm:%s219] %v334
                %v336 = vld [vmem:[%s226 + $0x360] sm:%s219]
                %337 = vst [vmem:[%s227 + $0x1b0] sm:%s219] %v336
                %v338 = vld [vmem:[%s226 + $0x370] sm:%s219]
                %339 = vst [vmem:[%s227 + $0x1b8] sm:%s219] %v338
                %v340 = vld [vmem:[%s226 + $0x380] sm:%s219]
                %341 = vst [vmem:[%s227 + $0x1c0] sm:%s219] %v340
                %v342 = vld [vmem:[%s226 + $0x390] sm:%s219]
                %343 = vst [vmem:[%s227 + $0x1c8] sm:%s219] %v342
                %v344 = vld [vmem:[%s226 + $0x3a0] sm:%s219]
                %345 = vst [vmem:[%s227 + $0x1d0] sm:%s219] %v344
                %v346 = vld [vmem:[%s226 + $0x3b0] sm:%s219]
                %347 = vst [vmem:[%s227 + $0x1d8] sm:%s219] %v346
                %v348 = vld [vmem:[%s226 + $0x3c0] sm:%s219]
                %349 = vst [vmem:[%s227 + $0x1e0] sm:%s219] %v348
                %v350 = vld [vmem:[%s226 + $0x3d0] sm:%s219]
                %351 = vst [vmem:[%s227 + $0x1e8] sm:%s219] %v350
                %v352 = vld [vmem:[%s226 + $0x3e0] sm:%s219]
                %353 = vst [vmem:[%s227 + $0x1f0] sm:%s219] %v352
                %v354 = vld [vmem:[%s226 + $0x3f0] sm:%s219]
                %355 = vst [vmem:[%s227 + $0x1f8] sm:%s219] %v354
                %v356 = vld [vmem:[%s226 + $0x400] sm:%s219]
                %357 = vst [vmem:[%s227 + $0x200] sm:%s219] %v356
                %v358 = vld [vmem:[%s226 + $0x410] sm:%s219]
                %359 = vst [vmem:[%s227 + $0x208] sm:%s219] %v358
                %v360 = vld [vmem:[%s226 + $0x420] sm:%s219]
                %361 = vst [vmem:[%s227 + $0x210] sm:%s219] %v360
                %v362 = vld [vmem:[%s226 + $0x430] sm:%s219]
                %363 = vst [vmem:[%s227 + $0x218] sm:%s219] %v362
                %v364 = vld [vmem:[%s226 + $0x440] sm:%s219]
                %365 = vst [vmem:[%s227 + $0x220] sm:%s219] %v364
                %v366 = vld [vmem:[%s226 + $0x450] sm:%s219]
                %367 = vst [vmem:[%s227 + $0x228] sm:%s219] %v366
                %v368 = vld [vmem:[%s226 + $0x460] sm:%s219]
                %369 = vst [vmem:[%s227 + $0x230] sm:%s219] %v368
                %v370 = vld [vmem:[%s226 + $0x470] sm:%s219]
                %371 = vst [vmem:[%s227 + $0x238] sm:%s219] %v370
                %v372 = vld [vmem:[%s226 + $0x480] sm:%s219]
                %373 = vst [vmem:[%s227 + $0x240] sm:%s219] %v372
                %v374 = vld [vmem:[%s226 + $0x490] sm:%s219]
                %375 = vst [vmem:[%s227 + $0x248] sm:%s219] %v374
                %v376 = vld [vmem:[%s226 + $0x4a0] sm:%s219]
                %377 = vst [vmem:[%s227 + $0x250] sm:%s219] %v376
                %v378 = vld [vmem:[%s226 + $0x4b0] sm:%s219]
                %379 = vst [vmem:[%s227 + $0x258] sm:%s219] %v378
                %v380 = vld [vmem:[%s226 + $0x4c0] sm:%s219]
                %381 = vst [vmem:[%s227 + $0x260] sm:%s219] %v380
                %v382 = vld [vmem:[%s226 + $0x4d0] sm:%s219]
                %383 = vst [vmem:[%s227 + $0x268] sm:%s219] %v382
                %v384 = vld [vmem:[%s226 + $0x4e0] sm:%s219]
                %385 = vst [vmem:[%s227 + $0x270] sm:%s219] %v384
                %v386 = vld [vmem:[%s226 + $0x4f0] sm:%s219]
                %387 = vst [vmem:[%s227 + $0x278] sm:%s219] %v386
              $region41: #{vgg_cifar100_forward.11} parent=35 // loop_footer
                %s225 = sadd.s32 1, %s221
              $region42: #{vgg_cifar100_forward.11} parent=35 // loop_footer_branch
                %220 = sbr.rel target = $region38
              $region43: #{vgg_cifar100_forward.11} parent=35 // loop_exit
                _
            $region36: #{vgg_cifar100_forward.11} parent=27 // pred_fallthru
              _
          $region28: #{vgg_cifar100_forward.11} parent=23 // pred_fallthru
            _
          %560 = vnop
        $region24: #{vgg_cifar100_forward.11} parent=19 // pred_fallthru
          _
        // Predicated region
        $region59: #{vgg_cifar100_forward.11} parent=19 // pred_check
          %p561 = pneg %p105
        $region60: #{vgg_cifar100_forward.11} parent=19 // pred_check_branch
          %563 = sbr.rel (%p561) target = $region62
        $region61: #{vgg_cifar100_forward.11} parent=19 // pred_region
          %s564 = smul.u32 2, %s18
          %p565 = scmp.lt.s32.totalorder %s564, 3
          %s566 = scalar_select %p565, %s564, 3
          %s567 = scalar_lea.vmem %s2, %s566
          %s568 = smul.u32 2, %s18
        $region62: #{vgg_cifar100_forward.11} parent=19 // pred_fallthru
          _
        // Predicated region
        $region63: #{vgg_cifar100_forward.11} parent=19 // pred_check
          %p569 = pneg %p131
        $region64: #{vgg_cifar100_forward.11} parent=19 // pred_check_branch
          %571 = sbr.rel (%p569) target = $region66
        $region65: #{vgg_cifar100_forward.11} parent=19 // pred_region
          %s572 = smul.u32 2, %s18
          %p573 = scmp.lt.s32.totalorder %s572, 3
          %s574 = scalar_select %p573, %s572, 3
          %s575 = scalar_lea.vmem %s3, %s574
          %s576 = smul.u32 2, %s18
        $region66: #{vgg_cifar100_forward.11} parent=19 // pred_fallthru
          _
      $region20: #{vgg_cifar100_forward.11} parent=5 // pred_fallthru
        _
      %p577 = scmp.le.s32.totalorder 1, %s10
      %p578 = scmp.lt.s32.totalorder %s10, 3
      %p579 = pnand %p577, %p578
      %p580 = pneg %p579
      // Predicated region
      $region67: #{vgg_cifar100_forward.11} parent=5 // pred_check
        _
      $region68: #{vgg_cifar100_forward.11} parent=5 // pred_check_branch
        %582 = sbr.rel (%p579) target = $region70
      $region69: #{vgg_cifar100_forward.11} parent=5 // pred_region
        %s583 = ssub.s32 %s10, 1
        %s584 = sand.u32 %s72, 1
        %s585 = sand.u32 %s72, 1
        %s586 = smul.addr %s585, 640
        %s587 = scalar_lea.vmem [#allocation3], %s586
        // Predicated region
        $region71: #{vgg_cifar100_forward.11} parent=69 // pred_check
          %p588 = pneg %p85
        $region72: #{vgg_cifar100_forward.11} parent=69 // pred_check_branch
          %590 = sbr.rel (%p588) target = $region74
        $region73: #{vgg_cifar100_forward.11} parent=69 // pred_region
          _
        $region74: #{vgg_cifar100_forward.11} parent=69 // pred_fallthru
          _
        %s591 = smul.u32 4, %s20
        %s592 = smul.u32 5, %s22
        %p593 = scmp.lt.s32.totalorder %s591, 3
        %s594 = scalar_select %p593, %s591, 3
        %p595 = scmp.lt.s32.totalorder %s592, 4
        %s596 = scalar_select %p595, %s592, 4
        %s597 = smul.addr %s594, 5
        %s598 = sadd.s32 %s596, %s597
        %s599 = smul.addr %s598, 4
        %s600 = scalar_lea.vmem %s0, %s599
        %p601 = pneg %p57
        %p602 = pneg %p54
        %s603 = sand.u32 %s72, 1
        %s604 = sand.u32 %s72, 1
        %s605 = smul.addr %s604, 640
        %s606 = scalar_lea.vmem [#allocation3], %s605
        %p607 = pneg %p85
        %p608 = pneg %p82
        %s609 = smul.u32 2, %s21
        %p610 = scmp.lt.s32.totalorder %s609, 3
        %s611 = scalar_select %p610, %s609, 3
        %s612 = scalar_lea.vmem %s2, %s611
        %p613 = pneg %p111
        %p614 = pneg %p108
        %s615 = smul.u32 2, %s21
        %p616 = scmp.lt.s32.totalorder %s615, 3
        %s617 = scalar_select %p616, %s615, 3
        %s618 = scalar_lea.vmem %s3, %s617
        %p619 = pneg %p137
        %p620 = pneg %p134
        %p621 = pneg %p165
        %p622 = pneg %p162
        %s623 = sand.u32 %s152, 1
        %s624 = sand.u32 %s152, 1
        %s625 = smul.addr %s624, 32
        %s626 = scalar_lea.vmem [#allocation4], %s625
        %s627 = smul.u32 4, %s20
        %s628 = smul.u32 5, %s22
        %p629 = scmp.lt.s32.totalorder %s627, 3
        %s630 = scalar_select %p629, %s627, 3
        %p631 = scmp.lt.s32.totalorder %s628, 4
        %s632 = scalar_select %p631, %s628, 4
        %s633 = smul.addr %s630, 5
        %s634 = sadd.s32 %s632, %s633
        %s635 = smul.addr %s634, 4
        %s636 = scalar_lea.vmem %s0, %s635
        %s637 = smul.u32 4, %s20
        %s638 = smul.u32 5, %s22
        %s639 = smul.u32 80, %s22
        %s640 = smul.u32 2, %s21
        %s641 = smul.u32 2, %s21
        %p642 = scmp.lt.s32.totalorder %s641, 3
        %s643 = scalar_select %p642, %s641, 3
        %s644 = scalar_lea.vmem %s2, %s643
        %s645 = smul.u32 2, %s21
        %s646 = smul.u32 2, %s21
        %p647 = scmp.lt.s32.totalorder %s646, 3
        %s648 = scalar_select %p647, %s646, 3
        %s649 = scalar_lea.vmem %s3, %s648
        %s650 = smul.u32 2, %s21
        %s651 = smul.u32 4, %s20
        %s652 = smul.u32 2, %s21
        %p653 = scmp.eq.s32.totalorder %s22, 0
        // Predicated region
        $region75: #{vgg_cifar100_forward.11} parent=69 // pred_check
          %p654 = pneg %p653
        $region76: #{vgg_cifar100_forward.11} parent=69 // pred_check_branch
          %656 = sbr.rel (%p654) target = $region78
        $region77: #{vgg_cifar100_forward.11} parent=69 // pred_region
          %657 = vst [vmem:[#allocation2] sm:$0xff] 0.0
          %658 = vst [vmem:[#allocation2 + $0x8] sm:$0xff] 0.0
          %659 = vst [vmem:[#allocation2 + $0x10] sm:$0xff] 0.0
          %660 = vst [vmem:[#allocation2 + $0x18] sm:$0xff] 0.0
          %661 = vst [vmem:[#allocation2 + $0x20] sm:$0xff] 0.0
          %662 = vst [vmem:[#allocation2 + $0x28] sm:$0xff] 0.0
          %663 = vst [vmem:[#allocation2 + $0x30] sm:$0xff] 0.0
          %664 = vst [vmem:[#allocation2 + $0x38] sm:$0xff] 0.0
        $region78: #{vgg_cifar100_forward.11} parent=69 // pred_fallthru
          _
        %v665 = vld [vmem:[#allocation2] sm:$0xff]
        %v666 = vld [vmem:[#allocation2 + $0x8] sm:$0xff]
        %v667 = vld [vmem:[#allocation2 + $0x10] sm:$0xff]
        %v668 = vld [vmem:[#allocation2 + $0x18] sm:$0xff]
        %v669 = vld [vmem:[#allocation2 + $0x20] sm:$0xff]
        %v670 = vld [vmem:[#allocation2 + $0x28] sm:$0xff]
        %v671 = vld [vmem:[#allocation2 + $0x30] sm:$0xff]
        %v672 = vld [vmem:[#allocation2 + $0x38] sm:$0xff]
        %v673 = vld [vmem:[%s636] sm:$0xff]
        %v674 = vld [vmem:[%s636 + $0x8] sm:$0xff]
        %v675 = vld [vmem:[%s636 + $0x10] sm:$0xf]
        %v676 = vld [vmem:[%s636 + $0x14] sm:$0xff]
        %v677 = vld [vmem:[%s636 + $0x1c] sm:$0xff]
        %v678 = vld [vmem:[%s636 + $0x24] sm:$0xf]
        %v679 = vld [vmem:[%s636 + $0x28] sm:$0xff]
        %v680 = vld [vmem:[%s636 + $0x30] sm:$0xff]
        %v681 = vld [vmem:[%s636 + $0x38] sm:$0xf]
        %v682 = vld [vmem:[%s636 + $0x3c] sm:$0xff]
        %v683 = vld [vmem:[%s636 + $0x44] sm:$0xff]
        %v684 = vld [vmem:[%s636 + $0x4c] sm:$0xf]
        %v685 = vld [vmem:[%s587] sm:$0xff]
        %v686 = vld [vmem:[%s587 + $0x8] sm:$0xff]
        %v687 = vld [vmem:[%s587 + $0x10] sm:$0xff]
        %v688 = vld [vmem:[%s587 + $0x18] sm:$0xff]
        %v689 = vld [vmem:[%s587 + $0x20] sm:$0xff]
        %v690 = vld [vmem:[%s587 + $0x28] sm:$0xff]
        %v691 = vld [vmem:[%s587 + $0x30] sm:$0xff]
        %v692 = vld [vmem:[%s587 + $0x38] sm:$0xff]
        %v693 = vld [vmem:[%s587 + $0x40] sm:$0xff]
        %v694 = vld [vmem:[%s587 + $0x48] sm:$0xff]
        %v695 = vld [vmem:[%s587 + $0x50] sm:$0xff]
        %v696 = vld [vmem:[%s587 + $0x58] sm:$0xff]
        %v697 = vld [vmem:[%s587 + $0x60] sm:$0xff]
        %v698 = vld [vmem:[%s587 + $0x68] sm:$0xff]
        %v699 = vld [vmem:[%s587 + $0x70] sm:$0xff]
        %v700 = vld [vmem:[%s587 + $0x78] sm:$0xff]
        %v701 = vld [vmem:[%s587 + $0x80] sm:$0xff]
        %v702 = vld [vmem:[%s587 + $0x88] sm:$0xff]
        %v703 = vld [vmem:[%s587 + $0x90] sm:$0xff]
        %v704 = vld [vmem:[%s587 + $0x98] sm:$0xff]
        %v705 = vld [vmem:[%s587 + $0xa0] sm:$0xff]
        %v706 = vld [vmem:[%s587 + $0xa8] sm:$0xff]
        %v707 = vld [vmem:[%s587 + $0xb0] sm:$0xff]
        %v708 = vld [vmem:[%s587 + $0xb8] sm:$0xff]
        %v709 = vld [vmem:[%s587 + $0xc0] sm:$0xff]
        %v710 = vld [vmem:[%s587 + $0xc8] sm:$0xff]
        %v711 = vld [vmem:[%s587 + $0xd0] sm:$0xff]
        %v712 = vld [vmem:[%s587 + $0xd8] sm:$0xff]
        %v713 = vld [vmem:[%s587 + $0xe0] sm:$0xff]
        %v714 = vld [vmem:[%s587 + $0xe8] sm:$0xff]
        %v715 = vld [vmem:[%s587 + $0xf0] sm:$0xff]
        %v716 = vld [vmem:[%s587 + $0xf8] sm:$0xff]
        %v717 = vld [vmem:[%s587 + $0x100] sm:$0xff]
        %v718 = vld [vmem:[%s587 + $0x108] sm:$0xff]
        %v719 = vld [vmem:[%s587 + $0x110] sm:$0xff]
        %v720 = vld [vmem:[%s587 + $0x118] sm:$0xff]
        %v721 = vld [vmem:[%s587 + $0x120] sm:$0xff]
        %v722 = vld [vmem:[%s587 + $0x128] sm:$0xff]
        %v723 = vld [vmem:[%s587 + $0x130] sm:$0xff]
        %v724 = vld [vmem:[%s587 + $0x138] sm:$0xff]
        %v725 = vld [vmem:[%s587 + $0x140] sm:$0xff]
        %v726 = vld [vmem:[%s587 + $0x148] sm:$0xff]
        %v727 = vld [vmem:[%s587 + $0x150] sm:$0xff]
        %v728 = vld [vmem:[%s587 + $0x158] sm:$0xff]
        %v729 = vld [vmem:[%s587 + $0x160] sm:$0xff]
        %v730 = vld [vmem:[%s587 + $0x168] sm:$0xff]
        %v731 = vld [vmem:[%s587 + $0x170] sm:$0xff]
        %v732 = vld [vmem:[%s587 + $0x178] sm:$0xff]
        %v733 = vld [vmem:[%s587 + $0x180] sm:$0xff]
        %v734 = vld [vmem:[%s587 + $0x188] sm:$0xff]
        %v735 = vld [vmem:[%s587 + $0x190] sm:$0xff]
        %v736 = vld [vmem:[%s587 + $0x198] sm:$0xff]
        %v737 = vld [vmem:[%s587 + $0x1a0] sm:$0xff]
        %v738 = vld [vmem:[%s587 + $0x1a8] sm:$0xff]
        %v739 = vld [vmem:[%s587 + $0x1b0] sm:$0xff]
        %v740 = vld [vmem:[%s587 + $0x1b8] sm:$0xff]
        %v741 = vld [vmem:[%s587 + $0x1c0] sm:$0xff]
        %v742 = vld [vmem:[%s587 + $0x1c8] sm:$0xff]
        %v743 = vld [vmem:[%s587 + $0x1d0] sm:$0xff]
        %v744 = vld [vmem:[%s587 + $0x1d8] sm:$0xff]
        %v745 = vld [vmem:[%s587 + $0x1e0] sm:$0xff]
        %v746 = vld [vmem:[%s587 + $0x1e8] sm:$0xff]
        %v747 = vld [vmem:[%s587 + $0x1f0] sm:$0xff]
        %v748 = vld [vmem:[%s587 + $0x1f8] sm:$0xff]
        %v749 = vld [vmem:[%s587 + $0x200] sm:$0xff]
        %v750 = vld [vmem:[%s587 + $0x208] sm:$0xff]
        %v751 = vld [vmem:[%s587 + $0x210] sm:$0xff]
        %v752 = vld [vmem:[%s587 + $0x218] sm:$0xff]
        %v753 = vld [vmem:[%s587 + $0x220] sm:$0xff]
        %v754 = vld [vmem:[%s587 + $0x228] sm:$0xff]
        %v755 = vld [vmem:[%s587 + $0x230] sm:$0xff]
        %v756 = vld [vmem:[%s587 + $0x238] sm:$0xff]
        %v757 = vld [vmem:[%s587 + $0x240] sm:$0xff]
        %v758 = vld [vmem:[%s587 + $0x248] sm:$0xff]
        %v759 = vld [vmem:[%s587 + $0x250] sm:$0xff]
        %v760 = vld [vmem:[%s587 + $0x258] sm:$0xff]
        %v761 = vld [vmem:[%s587 + $0x260] sm:$0xff]
        %v762 = vld [vmem:[%s587 + $0x268] sm:$0xff]
        %v763 = vld [vmem:[%s587 + $0x270] sm:$0xff]
        %v764 = vld [vmem:[%s587 + $0x278] sm:$0xff]
        %v777 = vunpack.c.l.b16 %v673
        %v778 = vunpack.c.h.b16 %v673
        %v779 = vunpack.c.l.b16 %v674
        %v780 = vunpack.c.h.b16 %v674
        %v781 = vunpack.c.l.b16 %v675
        %v782 = vunpack.c.l.b16 %v676
        %v783 = vunpack.c.h.b16 %v676
        %v784 = vunpack.c.l.b16 %v677
        %v785 = vunpack.c.h.b16 %v677
        %v786 = vunpack.c.l.b16 %v678
        %v787 = vunpack.c.l.b16 %v679
        %v788 = vunpack.c.h.b16 %v679
        %v789 = vunpack.c.l.b16 %v680
        %v790 = vunpack.c.h.b16 %v680
        %v791 = vunpack.c.l.b16 %v681
        %v792 = vunpack.c.l.b16 %v682
        %v793 = vunpack.c.h.b16 %v682
        %v794 = vunpack.c.l.b16 %v683
        %v795 = vunpack.c.h.b16 %v683
        %v796 = vunpack.c.l.b16 %v684
        %v797 = vpack.c.b16 %v782, %v777
        %v798 = vpack.c.b16 %v783, %v778
        %v799 = vpack.c.b16 %v784, %v779
        %v800 = vpack.c.b16 %v785, %v780
        %v801 = vpack.c.b16 %v786, %v781
        %v802 = vpack.c.b16 %v792, %v787
        %v803 = vpack.c.b16 %v793, %v788
        %v804 = vpack.c.b16 %v794, %v789
        %v805 = vpack.c.b16 %v795, %v790
        %v806 = vpack.c.b16 %v796, %v791
        %v897 = vunpack.c.l.b16 %v685
        %v898 = vunpack.c.h.b16 %v685
        %v899 = vunpack.c.l.b16 %v686
        %v900 = vunpack.c.h.b16 %v686
        %v901 = vunpack.c.l.b16 %v687
        %v902 = vunpack.c.h.b16 %v687
        %v903 = vunpack.c.l.b16 %v688
        %v904 = vunpack.c.h.b16 %v688
        %v905 = vunpack.c.l.b16 %v689
        %v906 = vunpack.c.h.b16 %v689
        %v907 = vunpack.c.l.b16 %v690
        %v908 = vunpack.c.h.b16 %v690
        %v909 = vunpack.c.l.b16 %v691
        %v910 = vunpack.c.h.b16 %v691
        %v911 = vunpack.c.l.b16 %v692
        %v912 = vunpack.c.h.b16 %v692
        %v913 = vunpack.c.l.b16 %v693
        %v914 = vunpack.c.h.b16 %v693
        %v915 = vunpack.c.l.b16 %v694
        %v916 = vunpack.c.h.b16 %v694
        %v917 = vunpack.c.l.b16 %v695
        %v918 = vunpack.c.h.b16 %v695
        %v919 = vunpack.c.l.b16 %v696
        %v920 = vunpack.c.h.b16 %v696
        %v921 = vunpack.c.l.b16 %v697
        %v922 = vunpack.c.h.b16 %v697
        %v923 = vunpack.c.l.b16 %v698
        %v924 = vunpack.c.h.b16 %v698
        %v925 = vunpack.c.l.b16 %v699
        %v926 = vunpack.c.h.b16 %v699
        %v927 = vunpack.c.l.b16 %v700
        %v928 = vunpack.c.h.b16 %v700
        %v929 = vunpack.c.l.b16 %v701
        %v930 = vunpack.c.h.b16 %v701
        %v931 = vunpack.c.l.b16 %v702
        %v932 = vunpack.c.h.b16 %v702
        %v933 = vunpack.c.l.b16 %v703
        %v934 = vunpack.c.h.b16 %v703
        %v935 = vunpack.c.l.b16 %v704
        %v936 = vunpack.c.h.b16 %v704
        %v937 = vunpack.c.l.b16 %v705
        %v938 = vunpack.c.h.b16 %v705
        %v939 = vunpack.c.l.b16 %v706
        %v940 = vunpack.c.h.b16 %v706
        %v941 = vunpack.c.l.b16 %v707
        %v942 = vunpack.c.h.b16 %v707
        %v943 = vunpack.c.l.b16 %v708
        %v944 = vunpack.c.h.b16 %v708
        %v945 = vunpack.c.l.b16 %v709
        %v946 = vunpack.c.h.b16 %v709
        %v947 = vunpack.c.l.b16 %v710
        %v948 = vunpack.c.h.b16 %v710
        %v949 = vunpack.c.l.b16 %v711
        %v950 = vunpack.c.h.b16 %v711
        %v951 = vunpack.c.l.b16 %v712
        %v952 = vunpack.c.h.b16 %v712
        %v953 = vunpack.c.l.b16 %v713
        %v954 = vunpack.c.h.b16 %v713
        %v955 = vunpack.c.l.b16 %v714
        %v956 = vunpack.c.h.b16 %v714
        %v957 = vunpack.c.l.b16 %v715
        %v958 = vunpack.c.h.b16 %v715
        %v959 = vunpack.c.l.b16 %v716
        %v960 = vunpack.c.h.b16 %v716
        %v961 = vunpack.c.l.b16 %v717
        %v962 = vunpack.c.h.b16 %v717
        %v963 = vunpack.c.l.b16 %v718
        %v964 = vunpack.c.h.b16 %v718
        %v965 = vunpack.c.l.b16 %v719
        %v966 = vunpack.c.h.b16 %v719
        %v967 = vunpack.c.l.b16 %v720
        %v968 = vunpack.c.h.b16 %v720
        %v969 = vunpack.c.l.b16 %v721
        %v970 = vunpack.c.h.b16 %v721
        %v971 = vunpack.c.l.b16 %v722
        %v972 = vunpack.c.h.b16 %v722
        %v973 = vunpack.c.l.b16 %v723
        %v974 = vunpack.c.h.b16 %v723
        %v975 = vunpack.c.l.b16 %v724
        %v976 = vunpack.c.h.b16 %v724
        %v977 = vunpack.c.l.b16 %v725
        %v978 = vunpack.c.h.b16 %v725
        %v979 = vunpack.c.l.b16 %v726
        %v980 = vunpack.c.h.b16 %v726
        %v981 = vunpack.c.l.b16 %v727
        %v982 = vunpack.c.h.b16 %v727
        %v983 = vunpack.c.l.b16 %v728
        %v984 = vunpack.c.h.b16 %v728
        %v985 = vunpack.c.l.b16 %v729
        %v986 = vunpack.c.h.b16 %v729
        %v987 = vunpack.c.l.b16 %v730
        %v988 = vunpack.c.h.b16 %v730
        %v989 = vunpack.c.l.b16 %v731
        %v990 = vunpack.c.h.b16 %v731
        %v991 = vunpack.c.l.b16 %v732
        %v992 = vunpack.c.h.b16 %v732
        %v993 = vunpack.c.l.b16 %v733
        %v994 = vunpack.c.h.b16 %v733
        %v995 = vunpack.c.l.b16 %v734
        %v996 = vunpack.c.h.b16 %v734
        %v997 = vunpack.c.l.b16 %v735
        %v998 = vunpack.c.h.b16 %v735
        %v999 = vunpack.c.l.b16 %v736
        %v1000 = vunpack.c.h.b16 %v736
        %v1001 = vunpack.c.l.b16 %v737
        %v1002 = vunpack.c.h.b16 %v737
        %v1003 = vunpack.c.l.b16 %v738
        %v1004 = vunpack.c.h.b16 %v738
        %v1005 = vunpack.c.l.b16 %v739
        %v1006 = vunpack.c.h.b16 %v739
        %v1007 = vunpack.c.l.b16 %v740
        %v1008 = vunpack.c.h.b16 %v740
        %v1009 = vunpack.c.l.b16 %v741
        %v1010 = vunpack.c.h.b16 %v741
        %v1011 = vunpack.c.l.b16 %v742
        %v1012 = vunpack.c.h.b16 %v742
        %v1013 = vunpack.c.l.b16 %v743
        %v1014 = vunpack.c.h.b16 %v743
        %v1015 = vunpack.c.l.b16 %v744
        %v1016 = vunpack.c.h.b16 %v744
        %v1017 = vunpack.c.l.b16 %v745
        %v1018 = vunpack.c.h.b16 %v745
        %v1019 = vunpack.c.l.b16 %v746
        %v1020 = vunpack.c.h.b16 %v746
        %v1021 = vunpack.c.l.b16 %v747
        %v1022 = vunpack.c.h.b16 %v747
        %v1023 = vunpack.c.l.b16 %v748
        %v1024 = vunpack.c.h.b16 %v748
        %v1025 = vunpack.c.l.b16 %v749
        %v1026 = vunpack.c.h.b16 %v749
        %v1027 = vunpack.c.l.b16 %v750
        %v1028 = vunpack.c.h.b16 %v750
        %v1029 = vunpack.c.l.b16 %v751
        %v1030 = vunpack.c.h.b16 %v751
        %v1031 = vunpack.c.l.b16 %v752
        %v1032 = vunpack.c.h.b16 %v752
        %v1033 = vunpack.c.l.b16 %v753
        %v1034 = vunpack.c.h.b16 %v753
        %v1035 = vunpack.c.l.b16 %v754
        %v1036 = vunpack.c.h.b16 %v754
        %v1037 = vunpack.c.l.b16 %v755
        %v1038 = vunpack.c.h.b16 %v755
        %v1039 = vunpack.c.l.b16 %v756
        %v1040 = vunpack.c.h.b16 %v756
        %v1041 = vunpack.c.l.b16 %v757
        %v1042 = vunpack.c.h.b16 %v757
        %v1043 = vunpack.c.l.b16 %v758
        %v1044 = vunpack.c.h.b16 %v758
        %v1045 = vunpack.c.l.b16 %v759
        %v1046 = vunpack.c.h.b16 %v759
        %v1047 = vunpack.c.l.b16 %v760
        %v1048 = vunpack.c.h.b16 %v760
        %v1049 = vunpack.c.l.b16 %v761
        %v1050 = vunpack.c.h.b16 %v761
        %v1051 = vunpack.c.l.b16 %v762
        %v1052 = vunpack.c.h.b16 %v762
        %v1053 = vunpack.c.l.b16 %v763
        %v1054 = vunpack.c.h.b16 %v763
        %v1055 = vunpack.c.l.b16 %v764
        %v1056 = vunpack.c.h.b16 %v764
        %v1057 = vpack.c.b16 %v899, %v897
        %v1058 = vpack.c.b16 %v900, %v898
        %v1059 = vpack.c.b16 %v903, %v901
        %v1060 = vpack.c.b16 %v904, %v902
        %v1061 = vpack.c.b16 %v907, %v905
        %v1062 = vpack.c.b16 %v908, %v906
        %v1063 = vpack.c.b16 %v911, %v909
        %v1064 = vpack.c.b16 %v912, %v910
        %v1065 = vpack.c.b16 %v915, %v913
        %v1066 = vpack.c.b16 %v916, %v914
        %v1067 = vpack.c.b16 %v919, %v917
        %v1068 = vpack.c.b16 %v920, %v918
        %v1069 = vpack.c.b16 %v923, %v921
        %v1070 = vpack.c.b16 %v924, %v922
        %v1071 = vpack.c.b16 %v927, %v925
        %v1072 = vpack.c.b16 %v928, %v926
        %v1073 = vpack.c.b16 %v931, %v929
        %v1074 = vpack.c.b16 %v932, %v930
        %v1075 = vpack.c.b16 %v935, %v933
        %v1076 = vpack.c.b16 %v936, %v934
        %v1077 = vpack.c.b16 %v939, %v937
        %v1078 = vpack.c.b16 %v940, %v938
        %v1079 = vpack.c.b16 %v943, %v941
        %v1080 = vpack.c.b16 %v944, %v942
        %v1081 = vpack.c.b16 %v947, %v945
        %v1082 = vpack.c.b16 %v948, %v946
        %v1083 = vpack.c.b16 %v951, %v949
        %v1084 = vpack.c.b16 %v952, %v950
        %v1085 = vpack.c.b16 %v955, %v953
        %v1086 = vpack.c.b16 %v956, %v954
        %v1087 = vpack.c.b16 %v959, %v957
        %v1088 = vpack.c.b16 %v960, %v958
        %v1089 = vpack.c.b16 %v963, %v961
        %v1090 = vpack.c.b16 %v964, %v962
        %v1091 = vpack.c.b16 %v967, %v965
        %v1092 = vpack.c.b16 %v968, %v966
        %v1093 = vpack.c.b16 %v971, %v969
        %v1094 = vpack.c.b16 %v972, %v970
        %v1095 = vpack.c.b16 %v975, %v973
        %v1096 = vpack.c.b16 %v976, %v974
        %v1097 = vpack.c.b16 %v979, %v977
        %v1098 = vpack.c.b16 %v980, %v978
        %v1099 = vpack.c.b16 %v983, %v981
        %v1100 = vpack.c.b16 %v984, %v982
        %v1101 = vpack.c.b16 %v987, %v985
        %v1102 = vpack.c.b16 %v988, %v986
        %v1103 = vpack.c.b16 %v991, %v989
        %v1104 = vpack.c.b16 %v992, %v990
        %v1105 = vpack.c.b16 %v995, %v993
        %v1106 = vpack.c.b16 %v996, %v994
        %v1107 = vpack.c.b16 %v999, %v997
        %v1108 = vpack.c.b16 %v1000, %v998
        %v1109 = vpack.c.b16 %v1003, %v1001
        %v1110 = vpack.c.b16 %v1004, %v1002
        %v1111 = vpack.c.b16 %v1007, %v1005
        %v1112 = vpack.c.b16 %v1008, %v1006
        %v1113 = vpack.c.b16 %v1011, %v1009
        %v1114 = vpack.c.b16 %v1012, %v1010
        %v1115 = vpack.c.b16 %v1015, %v1013
        %v1116 = vpack.c.b16 %v1016, %v1014
        %v1117 = vpack.c.b16 %v1019, %v1017
        %v1118 = vpack.c.b16 %v1020, %v1018
        %v1119 = vpack.c.b16 %v1023, %v1021
        %v1120 = vpack.c.b16 %v1024, %v1022
        %v1121 = vpack.c.b16 %v1027, %v1025
        %v1122 = vpack.c.b16 %v1028, %v1026
        %v1123 = vpack.c.b16 %v1031, %v1029
        %v1124 = vpack.c.b16 %v1032, %v1030
        %v1125 = vpack.c.b16 %v1035, %v1033
        %v1126 = vpack.c.b16 %v1036, %v1034
        %v1127 = vpack.c.b16 %v1039, %v1037
        %v1128 = vpack.c.b16 %v1040, %v1038
        %v1129 = vpack.c.b16 %v1043, %v1041
        %v1130 = vpack.c.b16 %v1044, %v1042
        %v1131 = vpack.c.b16 %v1047, %v1045
        %v1132 = vpack.c.b16 %v1048, %v1046
        %v1133 = vpack.c.b16 %v1051, %v1049
        %v1134 = vpack.c.b16 %v1052, %v1050
        %v1135 = vpack.c.b16 %v1055, %v1053
        %v1136 = vpack.c.b16 %v1056, %v1054
        %1217 = vmatpush.bf16.msra.mxu0 %v1071
        %1218 = vmatpush.bf16.msra.mxu0 %v1069
        %1219 = vmatpush.bf16.msra.mxu0 %v1067
        %1220 = vmatpush.bf16.msra.mxu0 %v1065
        %1221 = vmatpush.bf16.msra.mxu0 %v1063
        %1222 = vmatpush.bf16.msra.mxu0 %v1061
        %1223 = vmatpush.bf16.msra.mxu0 %v1059
        %1224 = vmatpush.bf16.msra.mxu0 %v1057
        %1225 = vmatmul.bf16.gmra.mxu0 %v797
        %v1226 = vpop.f32.mrf.mxu0
        %v1227 = vadd.f32 0.0, %v1226
        %v1228 = vpop.f32.mrf.mxu0
        %v1229 = vadd.f32 0.0, %v1228
        %1230 = vmatmul.bf16.gmra.mxu0 %v802
        %v1231 = vpop.f32.mrf.mxu0
        %v1232 = vadd.f32 0.0, %v1231
        %v1233 = vpop.f32.mrf.mxu0
        %v1234 = vadd.f32 0.0, %v1233
        %1235 = vdwg.mxu0
        %1236 = vmatpush.bf16.msra.mxu0 %v1087
        %1237 = vmatpush.bf16.msra.mxu0 %v1085
        %1238 = vmatpush.bf16.msra.mxu0 %v1083
        %1239 = vmatpush.bf16.msra.mxu0 %v1081
        %1240 = vmatpush.bf16.msra.mxu0 %v1079
        %1241 = vmatpush.bf16.msra.mxu0 %v1077
        %1242 = vmatpush.bf16.msra.mxu0 %v1075
        %1243 = vmatpush.bf16.msra.mxu0 %v1073
        %1244 = vmatmul.bf16.gmra.mxu0 %v798
        %v1245 = vpop.f32.mrf.mxu0
        %v1246 = vadd.f32 %v1227, %v1245
        %v1247 = vpop.f32.mrf.mxu0
        %v1248 = vadd.f32 %v1229, %v1247
        %1249 = vmatmul.bf16.gmra.mxu0 %v803
        %v1250 = vpop.f32.mrf.mxu0
        %v1251 = vadd.f32 %v1232, %v1250
        %v1252 = vpop.f32.mrf.mxu0
        %v1253 = vadd.f32 %v1234, %v1252
        %1254 = vdwg.mxu0
        %1255 = vmatpush.bf16.msra.mxu0 %v1103
        %1256 = vmatpush.bf16.msra.mxu0 %v1101
        %1257 = vmatpush.bf16.msra.mxu0 %v1099
        %1258 = vmatpush.bf16.msra.mxu0 %v1097
        %1259 = vmatpush.bf16.msra.mxu0 %v1095
        %1260 = vmatpush.bf16.msra.mxu0 %v1093
        %1261 = vmatpush.bf16.msra.mxu0 %v1091
        %1262 = vmatpush.bf16.msra.mxu0 %v1089
        %1263 = vmatmul.bf16.gmra.mxu0 %v799
        %v1264 = vpop.f32.mrf.mxu0
        %v1265 = vadd.f32 %v1246, %v1264
        %v1266 = vpop.f32.mrf.mxu0
        %v1267 = vadd.f32 %v1248, %v1266
        %1268 = vmatmul.bf16.gmra.mxu0 %v804
        %v1269 = vpop.f32.mrf.mxu0
        %v1270 = vadd.f32 %v1251, %v1269
        %v1271 = vpop.f32.mrf.mxu0
        %v1272 = vadd.f32 %v1253, %v1271
        %1273 = vdwg.mxu0
        %1274 = vmatpush.bf16.msra.mxu0 %v1119
        %1275 = vmatpush.bf16.msra.mxu0 %v1117
        %1276 = vmatpush.bf16.msra.mxu0 %v1115
        %1277 = vmatpush.bf16.msra.mxu0 %v1113
        %1278 = vmatpush.bf16.msra.mxu0 %v1111
        %1279 = vmatpush.bf16.msra.mxu0 %v1109
        %1280 = vmatpush.bf16.msra.mxu0 %v1107
        %1281 = vmatpush.bf16.msra.mxu0 %v1105
        %1282 = vmatmul.bf16.gmra.mxu0 %v800
        %v1283 = vpop.f32.mrf.mxu0
        %v1284 = vadd.f32 %v1265, %v1283
        %v1285 = vpop.f32.mrf.mxu0
        %v1286 = vadd.f32 %v1267, %v1285
        %1287 = vmatmul.bf16.gmra.mxu0 %v805
        %v1288 = vpop.f32.mrf.mxu0
        %v1289 = vadd.f32 %v1270, %v1288
        %v1290 = vpop.f32.mrf.mxu0
        %v1291 = vadd.f32 %v1272, %v1290
        %1292 = vdwg.mxu0
        %1293 = vmatpush.bf16.msra.mxu0 %v1135
        %1294 = vmatpush.bf16.msra.mxu0 %v1133
        %1295 = vmatpush.bf16.msra.mxu0 %v1131
        %1296 = vmatpush.bf16.msra.mxu0 %v1129
        %1297 = vmatpush.bf16.msra.mxu0 %v1127
        %1298 = vmatpush.bf16.msra.mxu0 %v1125
        %1299 = vmatpush.bf16.msra.mxu0 %v1123
        %1300 = vmatpush.bf16.msra.mxu0 %v1121
        %1301 = vmatmul.bf16.gmra.mxu0 %v801
        %v1302 = vpop.f32.mrf.mxu0
        %v1303 = vadd.f32 %v1284, %v1302
        %v1304 = vpop.f32.mrf.mxu0
        %v1305 = vadd.f32 %v1286, %v1304
        %1306 = vmatmul.bf16.gmra.mxu0 %v806
        %v1307 = vpop.f32.mrf.mxu0
        %v1308 = vadd.f32 %v1289, %v1307
        %v1309 = vpop.f32.mrf.mxu0
        %v1310 = vadd.f32 %v1291, %v1309
        %1311 = vdwg.mxu0
        %1312 = vmatpush.bf16.msra.mxu0 %v1072
        %1313 = vmatpush.bf16.msra.mxu0 %v1070
        %1314 = vmatpush.bf16.msra.mxu0 %v1068
        %1315 = vmatpush.bf16.msra.mxu0 %v1066
        %1316 = vmatpush.bf16.msra.mxu0 %v1064
        %1317 = vmatpush.bf16.msra.mxu0 %v1062
        %1318 = vmatpush.bf16.msra.mxu0 %v1060
        %1319 = vmatpush.bf16.msra.mxu0 %v1058
        %1320 = vmatmul.bf16.gmra.mxu0 %v797
        %v1321 = vpop.f32.mrf.mxu0
        %v1322 = vadd.f32 0.0, %v1321
        %v1323 = vpop.f32.mrf.mxu0
        %v1324 = vadd.f32 0.0, %v1323
        %1325 = vmatmul.bf16.gmra.mxu0 %v802
        %v1326 = vpop.f32.mrf.mxu0
        %v1327 = vadd.f32 0.0, %v1326
        %v1328 = vpop.f32.mrf.mxu0
        %v1329 = vadd.f32 0.0, %v1328
        %1330 = vdwg.mxu0
        %1331 = vmatpush.bf16.msra.mxu0 %v1088
        %1332 = vmatpush.bf16.msra.mxu0 %v1086
        %1333 = vmatpush.bf16.msra.mxu0 %v1084
        %1334 = vmatpush.bf16.msra.mxu0 %v1082
        %1335 = vmatpush.bf16.msra.mxu0 %v1080
        %1336 = vmatpush.bf16.msra.mxu0 %v1078
        %1337 = vmatpush.bf16.msra.mxu0 %v1076
        %1338 = vmatpush.bf16.msra.mxu0 %v1074
        %1339 = vmatmul.bf16.gmra.mxu0 %v798
        %v1340 = vpop.f32.mrf.mxu0
        %v1341 = vadd.f32 %v1322, %v1340
        %v1342 = vpop.f32.mrf.mxu0
        %v1343 = vadd.f32 %v1324, %v1342
        %1344 = vmatmul.bf16.gmra.mxu0 %v803
        %v1345 = vpop.f32.mrf.mxu0
        %v1346 = vadd.f32 %v1327, %v1345
        %v1347 = vpop.f32.mrf.mxu0
        %v1348 = vadd.f32 %v1329, %v1347
        %1349 = vdwg.mxu0
        %1350 = vmatpush.bf16.msra.mxu0 %v1104
        %1351 = vmatpush.bf16.msra.mxu0 %v1102
        %1352 = vmatpush.bf16.msra.mxu0 %v1100
        %1353 = vmatpush.bf16.msra.mxu0 %v1098
        %1354 = vmatpush.bf16.msra.mxu0 %v1096
        %1355 = vmatpush.bf16.msra.mxu0 %v1094
        %1356 = vmatpush.bf16.msra.mxu0 %v1092
        %1357 = vmatpush.bf16.msra.mxu0 %v1090
        %1358 = vmatmul.bf16.gmra.mxu0 %v799
        %v1359 = vpop.f32.mrf.mxu0
        %v1360 = vadd.f32 %v1341, %v1359
        %v1361 = vpop.f32.mrf.mxu0
        %v1362 = vadd.f32 %v1343, %v1361
        %1363 = vmatmul.bf16.gmra.mxu0 %v804
        %v1364 = vpop.f32.mrf.mxu0
        %v1365 = vadd.f32 %v1346, %v1364
        %v1366 = vpop.f32.mrf.mxu0
        %v1367 = vadd.f32 %v1348, %v1366
        %1368 = vdwg.mxu0
        %1369 = vmatpush.bf16.msra.mxu0 %v1120
        %1370 = vmatpush.bf16.msra.mxu0 %v1118
        %1371 = vmatpush.bf16.msra.mxu0 %v1116
        %1372 = vmatpush.bf16.msra.mxu0 %v1114
        %1373 = vmatpush.bf16.msra.mxu0 %v1112
        %1374 = vmatpush.bf16.msra.mxu0 %v1110
        %1375 = vmatpush.bf16.msra.mxu0 %v1108
        %1376 = vmatpush.bf16.msra.mxu0 %v1106
        %1377 = vmatmul.bf16.gmra.mxu0 %v800
        %v1378 = vpop.f32.mrf.mxu0
        %v1379 = vadd.f32 %v1360, %v1378
        %v1380 = vpop.f32.mrf.mxu0
        %v1381 = vadd.f32 %v1362, %v1380
        %1382 = vmatmul.bf16.gmra.mxu0 %v805
        %v1383 = vpop.f32.mrf.mxu0
        %v1384 = vadd.f32 %v1365, %v1383
        %v1385 = vpop.f32.mrf.mxu0
        %v1386 = vadd.f32 %v1367, %v1385
        %1387 = vdwg.mxu0
        %1388 = vmatpush.bf16.msra.mxu0 %v1136
        %1389 = vmatpush.bf16.msra.mxu0 %v1134
        %1390 = vmatpush.bf16.msra.mxu0 %v1132
        %1391 = vmatpush.bf16.msra.mxu0 %v1130
        %1392 = vmatpush.bf16.msra.mxu0 %v1128
        %1393 = vmatpush.bf16.msra.mxu0 %v1126
        %1394 = vmatpush.bf16.msra.mxu0 %v1124
        %1395 = vmatpush.bf16.msra.mxu0 %v1122
        %1396 = vmatmul.bf16.gmra.mxu0 %v801
        %v1397 = vpop.f32.mrf.mxu0
        %v1398 = vadd.f32 %v1379, %v1397
        %v1399 = vpop.f32.mrf.mxu0
        %v1400 = vadd.f32 %v1381, %v1399
        %1401 = vmatmul.bf16.gmra.mxu0 %v806
        %v1402 = vpop.f32.mrf.mxu0
        %v1403 = vadd.f32 %v1384, %v1402
        %v1404 = vpop.f32.mrf.mxu0
        %v1405 = vadd.f32 %v1386, %v1404
        %1406 = vdwg.mxu0
        %v1407 = vadd.f32 %v665, %v1303
        %v1408 = vadd.f32 %v666, %v1398
        %v1409 = vadd.f32 %v667, %v1305
        %v1410 = vadd.f32 %v668, %v1400
        %v1411 = vadd.f32 %v669, %v1308
        %v1412 = vadd.f32 %v670, %v1403
        %v1413 = vadd.f32 %v671, %v1310
        %v1414 = vadd.f32 %v672, %v1405
        %1415 = vst [vmem:[#allocation2] sm:$0xff] %v1407
        %1416 = vst [vmem:[#allocation2 + $0x8] sm:$0xff] %v1408
        %1417 = vst [vmem:[#allocation2 + $0x10] sm:$0xff] %v1409
        %1418 = vst [vmem:[#allocation2 + $0x18] sm:$0xff] %v1410
        %1419 = vst [vmem:[#allocation2 + $0x20] sm:$0xff] %v1411
        %1420 = vst [vmem:[#allocation2 + $0x28] sm:$0xff] %v1412
        %1421 = vst [vmem:[#allocation2 + $0x30] sm:$0xff] %v1413
        %1422 = vst [vmem:[#allocation2 + $0x38] sm:$0xff] %v1414
        // Predicated region
        $region79: #{vgg_cifar100_forward.11} parent=69 // pred_check
          %p1423 = pneg %p653
        $region80: #{vgg_cifar100_forward.11} parent=69 // pred_check_branch
          %1425 = sbr.rel (%p1423) target = $region82
        $region81: #{vgg_cifar100_forward.11} parent=69 // pred_region
          %v1426 = vld [vmem:[#allocation2] sm:$0xff]
          %v1427 = vld [vmem:[#allocation2 + $0x8] sm:$0xff]
          %v1428 = vld [vmem:[#allocation2 + $0x10] sm:$0xff]
          %v1429 = vld [vmem:[#allocation2 + $0x18] sm:$0xff]
          %v1430 = vld [vmem:[#allocation2 + $0x20] sm:$0xff]
          %v1431 = vld [vmem:[#allocation2 + $0x28] sm:$0xff]
          %v1432 = vld [vmem:[#allocation2 + $0x30] sm:$0xff]
          %v1433 = vld [vmem:[#allocation2 + $0x38] sm:$0xff]
          %v1434 = vld [vmem:[%s644] sm:$0x3]
          %v1436 = vperm.slane %v1434, 0
          %v1437 = vperm.slane %v1434, 1
          %v1440 = vmul.f32 %v1426, %v1436
          %v1441 = vmul.f32 %v1427, %v1437
          %v1442 = vmul.f32 %v1428, %v1436
          %v1443 = vmul.f32 %v1429, %v1437
          %v1444 = vmul.f32 %v1430, %v1436
          %v1445 = vmul.f32 %v1431, %v1437
          %v1446 = vmul.f32 %v1432, %v1436
          %v1447 = vmul.f32 %v1433, %v1437
          %v1448 = vld [vmem:[%s649] sm:$0x3]
          %v1450 = vperm.slane %v1448, 0
          %v1451 = vperm.slane %v1448, 1
          %v1454 = vadd.f32 %v1440, %v1450
          %v1455 = vadd.f32 %v1441, %v1451
          %v1456 = vadd.f32 %v1442, %v1450
          %v1457 = vadd.f32 %v1443, %v1451
          %v1458 = vadd.f32 %v1444, %v1450
          %v1459 = vadd.f32 %v1445, %v1451
          %v1460 = vadd.f32 %v1446, %v1450
          %v1461 = vadd.f32 %v1447, %v1451
          %v1462 = vmax.f32 %v1454, 0.0
          %v1463 = vmax.f32 %v1455, 0.0
          %v1464 = vmax.f32 %v1456, 0.0
          %v1465 = vmax.f32 %v1457, 0.0
          %v1466 = vmax.f32 %v1458, 0.0
          %v1467 = vmax.f32 %v1459, 0.0
          %v1468 = vmax.f32 %v1460, 0.0
          %v1469 = vmax.f32 %v1461, 0.0
          %v1470 = vpack.c.bf16 %v1463, %v1462
          %v1471 = vpack.c.bf16 %v1465, %v1464
          %v1472 = vpack.c.bf16 %v1467, %v1466
          %v1473 = vpack.c.bf16 %v1469, %v1468
          %1474 = vst [vmem:[%s626] sm:$0xff] %v1470
          %1475 = vst [vmem:[%s626 + $0x8] sm:$0xff] %v1471
          %1476 = vst [vmem:[%s626 + $0x10] sm:$0xff] %v1472
          %1477 = vst [vmem:[%s626 + $0x18] sm:$0xff] %v1473
        $region82: #{vgg_cifar100_forward.11} parent=69 // pred_fallthru
          _
        %s1478 = sand.u32 %s152, 1
        %s1479 = sand.u32 %s152, 1
        %s1480 = smul.addr %s1479, 32
        %s1481 = scalar_lea.vmem [#allocation4], %s1480
        // Predicated region
        $region83: #{vgg_cifar100_forward.11} parent=69 // pred_check
          %p1482 = pneg %p162
        $region84: #{vgg_cifar100_forward.11} parent=69 // pred_check_branch
          %1484 = sbr.rel (%p1482) target = $region86
        $region85: #{vgg_cifar100_forward.11} parent=69 // pred_region
          %s1485 = smul.u32 4, %s20
          %s1486 = smul.u32 2, %s21
          %s1487 = smul.addr %s1485, 4
          %s1488 = sadd.s32 %s1486, %s1487
          %s1489 = smul.addr %s1488, 4
          %s1490 = scalar_lea.vmem %s4, %s1489
          // Predicated region
          $region87: #{vgg_cifar100_forward.11} parent=85 // pred_check
            _
          $region88: #{vgg_cifar100_forward.11} parent=85 // pred_check_branch
            %1492 = sbr.rel (0) target = $region90
          $region89: #{vgg_cifar100_forward.11} parent=85 // pred_region
            // Predicated region
            $region91: #{vgg_cifar100_forward.11} parent=89 // pred_check
              _
            $region92: #{vgg_cifar100_forward.11} parent=89 // pred_check_branch
              %1494 = sbr.rel (0) target = $region94
            $region93: #{vgg_cifar100_forward.11} parent=89 // pred_region
              // Predicated region
              $region106: #{vgg_cifar100_forward.11} parent=93 // pred_check
                _
              $region107: #{vgg_cifar100_forward.11} parent=93 // pred_check_branch
                %1516 = sbr.rel (0) target = $region109
              $region108: #{vgg_cifar100_forward.11} parent=93 // pred_region
                loop: start=0, step=1, limit=1
                $region110: #{vgg_cifar100_forward.11} parent=108 // loop_pre_header
                  _
                $region111: #{vgg_cifar100_forward.11} parent=108 // loop_header
                  %s1518 = sphi 0, %s1522
                  %p1519 = scmp.ge.s32.totalorder %s1518, 1
                  %s1523 = sphi %s1481, %s1481
                  %s1524 = sphi %s1490, %s1490
                $region112: #{vgg_cifar100_forward.11} parent=108 // loop_header_branch
                  %1521 = sbr.rel (%p1519) target = $region116
                $region113: #{vgg_cifar100_forward.11} parent=108 // loop_body
                  %v1525 = vld [vmem:[%s1523] sm:$0xff]
                  %1526 = vst [vmem:[%s1524] sm:$0xff] %v1525
                  %v1527 = vld [vmem:[%s1523 + $0x8] sm:$0xff]
                  %1528 = vst [vmem:[%s1524 + $0x10] sm:$0xff] %v1527
                  %v1529 = vld [vmem:[%s1523 + $0x10] sm:$0xff]
                  %1530 = vst [vmem:[%s1524 + $0x20] sm:$0xff] %v1529
                  %v1531 = vld [vmem:[%s1523 + $0x18] sm:$0xff]
                  %1532 = vst [vmem:[%s1524 + $0x30] sm:$0xff] %v1531
                $region114: #{vgg_cifar100_forward.11} parent=108 // loop_footer
                  %s1522 = sadd.s32 1, %s1518
                $region115: #{vgg_cifar100_forward.11} parent=108 // loop_footer_branch
                  %1517 = sbr.rel target = $region111
                $region116: #{vgg_cifar100_forward.11} parent=108 // loop_exit
                  _
              $region109: #{vgg_cifar100_forward.11} parent=93 // pred_fallthru
                _
              // Predicated region
              $region117: #{vgg_cifar100_forward.11} parent=93 // pred_check
                _
              $region118: #{vgg_cifar100_forward.11} parent=93 // pred_check_branch
                %1534 = sbr.rel target = $region120
              $region119: #{vgg_cifar100_forward.11} parent=93 // pred_region
                _
              $region120: #{vgg_cifar100_forward.11} parent=93 // pred_fallthru
                _
            $region94: #{vgg_cifar100_forward.11} parent=89 // pred_fallthru
              _
            // Predicated region
            $region95: #{vgg_cifar100_forward.11} parent=89 // pred_check
              _
            $region96: #{vgg_cifar100_forward.11} parent=89 // pred_check_branch
              %1496 = sbr.rel target = $region98
            $region97: #{vgg_cifar100_forward.11} parent=89 // pred_region
              %s1498 = ssub.s32 256, 1
              loop: start=0, step=1, limit=1
              $region99: #{vgg_cifar100_forward.11} parent=97 // loop_pre_header
                _
              $region100: #{vgg_cifar100_forward.11} parent=97 // loop_header
                %s1500 = sphi 0, %s1504
                %p1501 = scmp.ge.s32.totalorder %s1500, 1
                %s1505 = sphi %s1481, %s1481
                %s1506 = sphi %s1490, %s1490
              $region101: #{vgg_cifar100_forward.11} parent=97 // loop_header_branch
                %1503 = sbr.rel (%p1501) target = $region105
              $region102: #{vgg_cifar100_forward.11} parent=97 // loop_body
                %v1507 = vld [vmem:[%s1505] sm:%s1498]
                %1508 = vst [vmem:[%s1506] sm:%s1498] %v1507
                %v1509 = vld [vmem:[%s1505 + $0x8] sm:%s1498]
                %1510 = vst [vmem:[%s1506 + $0x10] sm:%s1498] %v1509
                %v1511 = vld [vmem:[%s1505 + $0x10] sm:%s1498]
                %1512 = vst [vmem:[%s1506 + $0x20] sm:%s1498] %v1511
                %v1513 = vld [vmem:[%s1505 + $0x18] sm:%s1498]
                %1514 = vst [vmem:[%s1506 + $0x30] sm:%s1498] %v1513
              $region103: #{vgg_cifar100_forward.11} parent=97 // loop_footer
                %s1504 = sadd.s32 1, %s1500
              $region104: #{vgg_cifar100_forward.11} parent=97 // loop_footer_branch
                %1499 = sbr.rel target = $region100
              $region105: #{vgg_cifar100_forward.11} parent=97 // loop_exit
                _
            $region98: #{vgg_cifar100_forward.11} parent=89 // pred_fallthru
              _
          $region90: #{vgg_cifar100_forward.11} parent=85 // pred_fallthru
            _
          %1535 = vnop
        $region86: #{vgg_cifar100_forward.11} parent=69 // pred_fallthru
          _
      $region70: #{vgg_cifar100_forward.11} parent=5 // pred_fallthru
        _
      %p1536 = scmp.le.s32.totalorder 2, %s10
      // Predicated region
      $region121: #{vgg_cifar100_forward.11} parent=5 // pred_check
        %p1537 = pneg %p1536
      $region122: #{vgg_cifar100_forward.11} parent=5 // pred_check_branch
        %1539 = sbr.rel (%p1537) target = $region124
      $region123: #{vgg_cifar100_forward.11} parent=5 // pred_region
        %s1540 = ssub.s32 %s10, 2
        // Predicated region
        $region125: #{vgg_cifar100_forward.11} parent=123 // pred_check
          %p1541 = pneg %p168
        $region126: #{vgg_cifar100_forward.11} parent=123 // pred_check_branch
          %1543 = sbr.rel (%p1541) target = $region128
        $region127: #{vgg_cifar100_forward.11} parent=123 // pred_region
          %s1544 = sand.u32 %s153, 1
          %s1545 = sand.u32 %s153, 1
          %s1546 = smul.addr %s1545, 32
          %s1547 = scalar_lea.vmem [#allocation4], %s1546
        $region128: #{vgg_cifar100_forward.11} parent=123 // pred_fallthru
          _
      $region124: #{vgg_cifar100_forward.11} parent=5 // pred_fallthru
        _
    $region6: #{vgg_cifar100_forward.11} parent=1 // loop_footer
      %s14 = sadd.s32 1, %s10
    $region7: #{vgg_cifar100_forward.11} parent=1 // loop_footer_branch
      %9 = sbr.rel target = $region3
    $region8: #{vgg_cifar100_forward.11} parent=1 // loop_exit
      _

// kernel: vgg_cifar100_forward.13
$region0: #{vgg_cifar100_forward.13}
  #allocation0 [shape = 'u32[]', space=smem, size = 0x4, offset = 0x4, fixed_abs, tag = 'smem constant byte address 0x4 - core index']
  #allocation1 [shape = 'u32[72,128]{1,0:T(1,128)}', space=vmem, size = 0x9000, scoped, tag = 'internal scratch']
  %s0 = inlined_call_operand.vmem [shape: bf16[2,4,512], index: 0, kind: input, shape index: {}]
  %s1 = inlined_call_operand.vmem [shape: f32[512,128], index: 1, kind: input, shape index: {}]
  %s2 = inlined_call_operand.vmem [shape: f32[1,128], index: 2, kind: input, shape index: {}]
  %s3 = inlined_call_operand.hbm [shape: f32[2,128], index: 3, kind: output, shape index: {}]
  %s4 = sld [smem:[#allocation0]]
  $region22: #{vgg_cifar100_forward.13} parent=0
    _
  %s6 = ssub.s32 1, %s4
  %s7 = scalar_select 0, %s6, %s4
  $region1: #{vgg_cifar100_forward.13} parent=0
    #allocation2 [shape = 'u8[1024]{0}', space=vmem, size = 0x400, scoped, tag = 'output window, operand 0, single buffered']
    #allocation3 [shape = 's32[1]{0}', space=sflag, size = 0x4, scoped, tag = 'scoped memory for vgg_cifar100_forward.13']
    %8 = vsyncpa [#allocation3], 0
    // Predicated region
    $region2: #{vgg_cifar100_forward.13} parent=1 // pred_check
      _
    $region3: #{vgg_cifar100_forward.13} parent=1 // pred_check_branch
      %10 = sbr.rel (0) target = $region5
    $region4: #{vgg_cifar100_forward.13} parent=1 // pred_region
      _
    $region5: #{vgg_cifar100_forward.13} parent=1 // pred_fallthru
      _
    // Predicated region
    $region6: #{vgg_cifar100_forward.13} parent=1 // pred_check
      _
    $region7: #{vgg_cifar100_forward.13} parent=1 // pred_check_branch
      %12 = sbr.rel (0) target = $region9
    $region8: #{vgg_cifar100_forward.13} parent=1 // pred_region
      _
    $region9: #{vgg_cifar100_forward.13} parent=1 // pred_fallthru
      _
    // Predicated region
    $region10: #{vgg_cifar100_forward.13} parent=1 // pred_check
      _
    $region11: #{vgg_cifar100_forward.13} parent=1 // pred_check_branch
      %14 = sbr.rel (0) target = $region13
    $region12: #{vgg_cifar100_forward.13} parent=1 // pred_region
      _
    $region13: #{vgg_cifar100_forward.13} parent=1 // pred_fallthru
      _
    %v15 = vld [vmem:[%s0] sm:$0xff]
    %v16 = vld [vmem:[%s0 + $0x8] sm:$0xff]
    %v17 = vunpack.c.l.bf16 %v15
    %v18 = vunpack.c.h.bf16 %v15
    %v19 = vunpack.c.l.bf16 %v16
    %v20 = vunpack.c.h.bf16 %v16
    %25 = vst [vmem:[#allocation1] ss:$2 sm:$0xff] %v17
    %s26 = scalar_lea.vmem [#allocation1], 16
    %27 = vst [vmem:[%s26] ss:$2 sm:$0xff] %v18
    %v28 = vld.sshfl [vmem:[#allocation1] sm:$0xff pattern:$0x75316420]
    %v29 = vld.sshfl [vmem:[#allocation1 + $0x8] sm:$0xff pattern:$0x75316420]
    %v30 = vld.sshfl [vmem:[#allocation1 + $0x10] sm:$0xff pattern:$0x75316420]
    %v31 = vld.sshfl [vmem:[#allocation1 + $0x18] sm:$0xff pattern:$0x75316420]
    %s32 = scalar_lea.vmem [#allocation1], 32
    %33 = vst [vmem:[%s32] ss:$2 sm:$0xff] %v19
    %s34 = scalar_lea.vmem [#allocation1], 48
    %35 = vst [vmem:[%s34] ss:$2 sm:$0xff] %v20
    %v36 = vld.sshfl [vmem:[#allocation1 + $0x20] sm:$0xff pattern:$0x75316420]
    %v37 = vld.sshfl [vmem:[#allocation1 + $0x28] sm:$0xff pattern:$0x75316420]
    %v38 = vld.sshfl [vmem:[#allocation1 + $0x30] sm:$0xff pattern:$0x75316420]
    %v39 = vld.sshfl [vmem:[#allocation1 + $0x38] sm:$0xff pattern:$0x75316420]
    %vm48 = vcmask 1043456
    %v49 = vsel %vm48, %v28, 0.0
    %v50 = vrot.slane %v49, 4
    %v51 = vadd.f32 %v49, %v50
    %v52 = vrot.slane %v51, 2
    %v53 = vadd.f32 %v51, %v52
    %v54 = vrot.slane %v53, 1
    %v55 = vadd.f32 %v53, %v54
    %v56 = vsel %vm48, %v29, 0.0
    %v57 = vrot.slane %v56, 4
    %v58 = vadd.f32 %v56, %v57
    %v59 = vrot.slane %v58, 2
    %v60 = vadd.f32 %v58, %v59
    %v61 = vrot.slane %v60, 1
    %v62 = vadd.f32 %v60, %v61
    %v63 = vsel %vm48, %v30, 0.0
    %v64 = vrot.slane %v63, 4
    %v65 = vadd.f32 %v63, %v64
    %v66 = vrot.slane %v65, 2
    %v67 = vadd.f32 %v65, %v66
    %v68 = vrot.slane %v67, 1
    %v69 = vadd.f32 %v67, %v68
    %v70 = vsel %vm48, %v31, 0.0
    %v71 = vrot.slane %v70, 4
    %v72 = vadd.f32 %v70, %v71
    %v73 = vrot.slane %v72, 2
    %v74 = vadd.f32 %v72, %v73
    %v75 = vrot.slane %v74, 1
    %v76 = vadd.f32 %v74, %v75
    %v77 = vsel %vm48, %v36, 0.0
    %v78 = vrot.slane %v77, 4
    %v79 = vadd.f32 %v77, %v78
    %v80 = vrot.slane %v79, 2
    %v81 = vadd.f32 %v79, %v80
    %v82 = vrot.slane %v81, 1
    %v83 = vadd.f32 %v81, %v82
    %v84 = vsel %vm48, %v37, 0.0
    %v85 = vrot.slane %v84, 4
    %v86 = vadd.f32 %v84, %v85
    %v87 = vrot.slane %v86, 2
    %v88 = vadd.f32 %v86, %v87
    %v89 = vrot.slane %v88, 1
    %v90 = vadd.f32 %v88, %v89
    %v91 = vsel %vm48, %v38, 0.0
    %v92 = vrot.slane %v91, 4
    %v93 = vadd.f32 %v91, %v92
    %v94 = vrot.slane %v93, 2
    %v95 = vadd.f32 %v93, %v94
    %v96 = vrot.slane %v95, 1
    %v97 = vadd.f32 %v95, %v96
    %v98 = vsel %vm48, %v39, 0.0
    %v99 = vrot.slane %v98, 4
    %v100 = vadd.f32 %v98, %v99
    %v101 = vrot.slane %v100, 2
    %v102 = vadd.f32 %v100, %v101
    %v103 = vrot.slane %v102, 1
    %v104 = vadd.f32 %v102, %v103
    %v105 = vmul.f32 %v55, 0.25
    %v106 = vmul.f32 %v62, 0.25
    %v107 = vmul.f32 %v69, 0.25
    %v108 = vmul.f32 %v76, 0.25
    %v109 = vmul.f32 %v83, 0.25
    %v110 = vmul.f32 %v90, 0.25
    %v111 = vmul.f32 %v97, 0.25
    %v112 = vmul.f32 %v104, 0.25
    %v113 = vld [vmem:[%s1] sm:$0xff]
    %v114 = vld [vmem:[%s1 + $0x8] sm:$0xff]
    %v115 = vld [vmem:[%s1 + $0x10] sm:$0xff]
    %v116 = vld [vmem:[%s1 + $0x18] sm:$0xff]
    %v117 = vld [vmem:[%s1 + $0x20] sm:$0xff]
    %v118 = vld [vmem:[%s1 + $0x28] sm:$0xff]
    %v119 = vld [vmem:[%s1 + $0x30] sm:$0xff]
    %v120 = vld [vmem:[%s1 + $0x38] sm:$0xff]
    %v121 = vld [vmem:[%s1 + $0x40] sm:$0xff]
    %v122 = vld [vmem:[%s1 + $0x48] sm:$0xff]
    %v123 = vld [vmem:[%s1 + $0x50] sm:$0xff]
    %v124 = vld [vmem:[%s1 + $0x58] sm:$0xff]
    %v125 = vld [vmem:[%s1 + $0x60] sm:$0xff]
    %v126 = vld [vmem:[%s1 + $0x68] sm:$0xff]
    %v127 = vld [vmem:[%s1 + $0x70] sm:$0xff]
    %v128 = vld [vmem:[%s1 + $0x78] sm:$0xff]
    %v129 = vld [vmem:[%s1 + $0x80] sm:$0xff]
    %v130 = vld [vmem:[%s1 + $0x88] sm:$0xff]
    %v131 = vld [vmem:[%s1 + $0x90] sm:$0xff]
    %v132 = vld [vmem:[%s1 + $0x98] sm:$0xff]
    %v133 = vld [vmem:[%s1 + $0xa0] sm:$0xff]
    %v134 = vld [vmem:[%s1 + $0xa8] sm:$0xff]
    %v135 = vld [vmem:[%s1 + $0xb0] sm:$0xff]
    %v136 = vld [vmem:[%s1 + $0xb8] sm:$0xff]
    %v137 = vld [vmem:[%s1 + $0xc0] sm:$0xff]
    %v138 = vld [vmem:[%s1 + $0xc8] sm:$0xff]
    %v139 = vld [vmem:[%s1 + $0xd0] sm:$0xff]
    %v140 = vld [vmem:[%s1 + $0xd8] sm:$0xff]
    %v141 = vld [vmem:[%s1 + $0xe0] sm:$0xff]
    %v142 = vld [vmem:[%s1 + $0xe8] sm:$0xff]
    %v143 = vld [vmem:[%s1 + $0xf0] sm:$0xff]
    %v144 = vld [vmem:[%s1 + $0xf8] sm:$0xff]
    %v145 = vld [vmem:[%s1 + $0x100] sm:$0xff]
    %v146 = vld [vmem:[%s1 + $0x108] sm:$0xff]
    %v147 = vld [vmem:[%s1 + $0x110] sm:$0xff]
    %v148 = vld [vmem:[%s1 + $0x118] sm:$0xff]
    %v149 = vld [vmem:[%s1 + $0x120] sm:$0xff]
    %v150 = vld [vmem:[%s1 + $0x128] sm:$0xff]
    %v151 = vld [vmem:[%s1 + $0x130] sm:$0xff]
    %v152 = vld [vmem:[%s1 + $0x138] sm:$0xff]
    %v153 = vld [vmem:[%s1 + $0x140] sm:$0xff]
    %v154 = vld [vmem:[%s1 + $0x148] sm:$0xff]
    %v155 = vld [vmem:[%s1 + $0x150] sm:$0xff]
    %v156 = vld [vmem:[%s1 + $0x158] sm:$0xff]
    %v157 = vld [vmem:[%s1 + $0x160] sm:$0xff]
    %v158 = vld [vmem:[%s1 + $0x168] sm:$0xff]
    %v159 = vld [vmem:[%s1 + $0x170] sm:$0xff]
    %v160 = vld [vmem:[%s1 + $0x178] sm:$0xff]
    %v161 = vld [vmem:[%s1 + $0x180] sm:$0xff]
    %v162 = vld [vmem:[%s1 + $0x188] sm:$0xff]
    %v163 = vld [vmem:[%s1 + $0x190] sm:$0xff]
    %v164 = vld [vmem:[%s1 + $0x198] sm:$0xff]
    %v165 = vld [vmem:[%s1 + $0x1a0] sm:$0xff]
    %v166 = vld [vmem:[%s1 + $0x1a8] sm:$0xff]
    %v167 = vld [vmem:[%s1 + $0x1b0] sm:$0xff]
    %v168 = vld [vmem:[%s1 + $0x1b8] sm:$0xff]
    %v169 = vld [vmem:[%s1 + $0x1c0] sm:$0xff]
    %v170 = vld [vmem:[%s1 + $0x1c8] sm:$0xff]
    %v171 = vld [vmem:[%s1 + $0x1d0] sm:$0xff]
    %v172 = vld [vmem:[%s1 + $0x1d8] sm:$0xff]
    %v173 = vld [vmem:[%s1 + $0x1e0] sm:$0xff]
    %v174 = vld [vmem:[%s1 + $0x1e8] sm:$0xff]
    %v175 = vld [vmem:[%s1 + $0x1f0] sm:$0xff]
    %v176 = vld [vmem:[%s1 + $0x1f8] sm:$0xff]
    %v177 = vld [vmem:[%s2] sm:$0x1]
    %v179 = vperm.slane %v177, 0
    %vm189 = vcmask 1041409
    %v190 = vsel %vm189, %v109, %v105
    %v191 = vsel %vm189, %v110, %v106
    %v192 = vsel %vm189, %v111, %v107
    %v193 = vsel %vm189, %v112, %v108
    %198 = vmatpush.msra.mxu0 %v128
    %199 = vmatpush.msra.mxu0 %v127
    %200 = vmatpush.msra.mxu0 %v126
    %201 = vmatpush.msra.mxu0 %v125
    %202 = vmatpush.msra.mxu0 %v124
    %203 = vmatpush.msra.mxu0 %v123
    %204 = vmatpush.msra.mxu0 %v122
    %205 = vmatpush.msra.mxu0 %v121
    %206 = vmatpush.msra.mxu0 %v120
    %207 = vmatpush.msra.mxu0 %v119
    %208 = vmatpush.msra.mxu0 %v118
    %209 = vmatpush.msra.mxu0 %v117
    %210 = vmatpush.msra.mxu0 %v116
    %211 = vmatpush.msra.mxu0 %v115
    %212 = vmatpush.msra.mxu0 %v114
    %213 = vmatpush.msra.mxu0 %v113
    %214 = vmatmul.f32.gmra.mxu0 %v190
    %v215 = vpop.f32.mrf.mxu0
    %v216 = vadd.f32 %v179, %v215
    %217 = vdwg.mxu0
    %218 = vmatpush.msra.mxu0 %v144
    %219 = vmatpush.msra.mxu0 %v143
    %220 = vmatpush.msra.mxu0 %v142
    %221 = vmatpush.msra.mxu0 %v141
    %222 = vmatpush.msra.mxu0 %v140
    %223 = vmatpush.msra.mxu0 %v139
    %224 = vmatpush.msra.mxu0 %v138
    %225 = vmatpush.msra.mxu0 %v137
    %226 = vmatpush.msra.mxu0 %v136
    %227 = vmatpush.msra.mxu0 %v135
    %228 = vmatpush.msra.mxu0 %v134
    %229 = vmatpush.msra.mxu0 %v133
    %230 = vmatpush.msra.mxu0 %v132
    %231 = vmatpush.msra.mxu0 %v131
    %232 = vmatpush.msra.mxu0 %v130
    %233 = vmatpush.msra.mxu0 %v129
    %234 = vmatmul.f32.gmra.mxu0 %v191
    %v235 = vpop.f32.mrf.mxu0
    %v236 = vadd.f32 %v216, %v235
    %237 = vdwg.mxu0
    %238 = vmatpush.msra.mxu0 %v160
    %239 = vmatpush.msra.mxu0 %v159
    %240 = vmatpush.msra.mxu0 %v158
    %241 = vmatpush.msra.mxu0 %v157
    %242 = vmatpush.msra.mxu0 %v156
    %243 = vmatpush.msra.mxu0 %v155
    %244 = vmatpush.msra.mxu0 %v154
    %245 = vmatpush.msra.mxu0 %v153
    %246 = vmatpush.msra.mxu0 %v152
    %247 = vmatpush.msra.mxu0 %v151
    %248 = vmatpush.msra.mxu0 %v150
    %249 = vmatpush.msra.mxu0 %v149
    %250 = vmatpush.msra.mxu0 %v148
    %251 = vmatpush.msra.mxu0 %v147
    %252 = vmatpush.msra.mxu0 %v146
    %253 = vmatpush.msra.mxu0 %v145
    %254 = vmatmul.f32.gmra.mxu0 %v192
    %v255 = vpop.f32.mrf.mxu0
    %v256 = vadd.f32 %v236, %v255
    %257 = vdwg.mxu0
    %258 = vmatpush.msra.mxu0 %v176
    %259 = vmatpush.msra.mxu0 %v175
    %260 = vmatpush.msra.mxu0 %v174
    %261 = vmatpush.msra.mxu0 %v173
    %262 = vmatpush.msra.mxu0 %v172
    %263 = vmatpush.msra.mxu0 %v171
    %264 = vmatpush.msra.mxu0 %v170
    %265 = vmatpush.msra.mxu0 %v169
    %266 = vmatpush.msra.mxu0 %v168
    %267 = vmatpush.msra.mxu0 %v167
    %268 = vmatpush.msra.mxu0 %v166
    %269 = vmatpush.msra.mxu0 %v165
    %270 = vmatpush.msra.mxu0 %v164
    %271 = vmatpush.msra.mxu0 %v163
    %272 = vmatpush.msra.mxu0 %v162
    %273 = vmatpush.msra.mxu0 %v161
    %274 = vmatmul.f32.gmra.mxu0 %v193
    %v275 = vpop.f32.mrf.mxu0
    %v276 = vadd.f32 %v256, %v275
    %277 = vdwg.mxu0
    %278 = vst [vmem:[#allocation2] sm:$0x3] %v276
    // Predicated region
    $region14: #{vgg_cifar100_forward.13} parent=1 // pred_check
      _
    $region15: #{vgg_cifar100_forward.13} parent=1 // pred_check_branch
      %280 = sbr.rel (0) target = $region17
    $region16: #{vgg_cifar100_forward.13} parent=1 // pred_region
      %282 = vsyncadd [#allocation3], 0
      %s284 = sshll.u32 [#allocation2], 4
      %s285 = int_to_ptr.vmem [resolvable:$true] %s284
      %s286 = sshll.u32 %s3, 4
      %s287 = int_to_ptr.hbm [resolvable:$true] %s286
      %289 = dma.vmem_to_hbm [thread:$0]  %s285, 32, %s287, [#allocation3]
    $region17: #{vgg_cifar100_forward.13} parent=1 // pred_fallthru
      _
    // Predicated region
    $region18: #{vgg_cifar100_forward.13} parent=1 // pred_check
      _
    $region19: #{vgg_cifar100_forward.13} parent=1 // pred_check_branch
      %291 = sbr.rel (0) target = $region21
    $region20: #{vgg_cifar100_forward.13} parent=1 // pred_region
      %293 = dma.done [#allocation3], 32
    $region21: #{vgg_cifar100_forward.13} parent=1 // pred_fallthru
      _
    %294 = vsyncpa [#allocation3], 1

</llo_original>
